<compile_context>
chip_gen: v7x
topology: tpu7x:2x2x1
jax: 0.10.0
libtpu: 0.0.40
codegen_flags: <defaults>
</compile_context>

<pallas_src>
import functools
import math

import jax
import jax.numpy as jnp
from jax import lax
from jax.experimental import pallas as pl
from jax.experimental.pallas import tpu as pltpu

EPS = 1e-5              # nn.LayerNorm default
_MAX_UNROLL_HEADS = 8   # static unroll threshold; larger head counts use lax.fori_loop


def _layernorm(x, gamma, beta):
    mean = jnp.mean(x, axis=-1, keepdims=True)
    var = jnp.mean((x - mean) ** 2, axis=-1, keepdims=True)
    return (x - mean) * lax.rsqrt(var + EPS) * gamma + beta


def _slice_head(arr, off, dh):
    """Slice dh lanes of the last dim at `off` (python-int -> static slice, else dynamic)."""
    if isinstance(off, int):
        return arr[..., off:off + dh]
    return lax.dynamic_slice_in_dim(arr, off, dh, axis=arr.ndim - 1)


# ----------------------------- fused kernel -----------------------------------


def fused_encoder_kernel(x_ref,
                         ln1_g_ref, ln1_b_ref,
                         wq_ref, bq_ref, wk_ref, bk_ref, wv_ref, bv_ref,
                         wo_ref, bo_ref,
                         ln2_g_ref, ln2_b_ref,
                         w1_ref, b1_ref, w2_ref, b2_ref,
                         fng_ref, fnb_ref,
                         o_ref, *scratch,
                         num_heads, exp_dtype, use_ctx_scratch):
    l = pl.program_id(1)
    n_layers = pl.num_programs(1)
    ctx_ref = scratch[0] if use_ctx_scratch else None

    # Seed the resident activation block with the input on the first layer step.
    @pl.when(l == 0)
    def _():
        o_ref[...] = x_ref[...]

    x3 = o_ref[...]                              # (Bt, S, D) f32 running activation
    Bt, S, D = x3.shape
    dh = D // num_heads
    T = Bt * S
    x = x3.reshape(T, D)                         # flatten tokens for the big matmuls

    # ---- self-attention sublayer (pre-LN, residual) ----
    xn = _layernorm(x, ln1_g_ref[0], ln1_b_ref[0])
    xn_bf = xn.astype(jnp.bfloat16)
    # 1/sqrt(dh) was folded into Wq/bq in the wrapper.
    q = jnp.dot(xn_bf, wq_ref[0], preferred_element_type=jnp.float32) + bq_ref[0]
    k = jnp.dot(xn_bf, wk_ref[0], preferred_element_type=jnp.float32) + bk_ref[0]
    v = jnp.dot(xn_bf, wv_ref[0], preferred_element_type=jnp.float32) + bv_ref[0]
    q_bf = q.astype(jnp.bfloat16).reshape(Bt, S, D)
    k_bf = k.astype(jnp.bfloat16).reshape(Bt, S, D)
    v_bf = v.astype(jnp.bfloat16).reshape(Bt, S, D)

    def head_body(off, attn):
        qh = _slice_head(q_bf, off, dh)          # (Bt, S, dh) bf16
        kh = _slice_head(k_bf, off, dh)
        vh = _slice_head(v_bf, off, dh)
        s = jnp.einsum("bqd,bkd->bqk", qh, kh,
                       preferred_element_type=jnp.float32)        # (Bt, S, S)
        s = s - jnp.max(s, axis=-1, keepdims=True)
        p = jnp.exp(s.astype(exp_dtype))                          # bf16 exp on v6e/v7x
        inv = pl.reciprocal(
            jnp.sum(p, axis=-1, keepdims=True, dtype=jnp.float32), approx=True)
        ctx = jnp.einsum("bqk,bkd->bqd", p.astype(jnp.bfloat16), vh,
                         preferred_element_type=jnp.float32) * inv  # (Bt, S, dh)
        ctx_bf = ctx.astype(jnp.bfloat16)
        if use_ctx_scratch:
            # dh % 128 == 0: stage into lane-dense scratch, single Wo matmul after the loop.
            ctx_ref[:, :, off:off + dh] = ctx_bf
            return attn
        # Accumulate through the output projection -> no head concatenate.
        if isinstance(off, int):
            wo_h = wo_ref[0, off:off + dh, :]
        else:
            wo_h = wo_ref[0, pl.ds(off, dh), :]
        return attn + jnp.dot(ctx_bf.reshape(T, dh), wo_h,
                              preferred_element_type=jnp.float32)

    attn = jnp.zeros((T, D), jnp.float32)
    if num_heads <= _MAX_UNROLL_HEADS:
        for h in range(num_heads):               # static unroll; one head live at a time
            attn = head_body(h * dh, attn)
    else:
        attn = lax.fori_loop(
            0, num_heads,
            lambda h, a: head_body(pl.multiple_of(h * dh, dh), a),
            attn)

    if use_ctx_scratch:
        attn = jnp.dot(ctx_ref[...].reshape(T, D), wo_ref[0],
                       preferred_element_type=jnp.float32)

    x = x + attn + bo_ref[0]

    # ---- feed-forward sublayer (pre-LN, residual) ----
    xn2 = _layernorm(x, ln2_g_ref[0], ln2_b_ref[0])
    hdn = jnp.maximum(
        jnp.dot(xn2.astype(jnp.bfloat16), w1_ref[0],
                preferred_element_type=jnp.float32) + b1_ref[0], 0.0)
    y = x + jnp.dot(hdn.astype(jnp.bfloat16), w2_ref[0],
                    preferred_element_type=jnp.float32) + b2_ref[0]

    @pl.when(l < n_layers - 1)
    def _():
        o_ref[...] = y.reshape(Bt, S, D)

    @pl.when(l == n_layers - 1)
    def _():
        o_ref[...] = _layernorm(y, fng_ref[...], fnb_ref[...]).reshape(Bt, S, D)


# ----------------------------- wrapper ---------------------------------------


def encoder_forward(x, layer_params, norm_g, norm_b, num_heads):
    B, S, D = x.shape
    L = len(layer_params)
    d_ff = layer_params[0]["w1"].shape[1]
    assert D % num_heads == 0
    dh = D // num_heads
    scale = 1.0 / math.sqrt(dh)
    bf16 = jnp.bfloat16

    use_ctx_scratch = (dh % 128 == 0) and (num_heads <= _MAX_UNROLL_HEADS)

    # --- chip detection: VMEM capacity + bf16-EUP + multi-TensorCore ---
    try:
        vmem_cap = int(pltpu.get_tpu_info().vmem_capacity_bytes)
    except Exception:
        vmem_cap = 64 * 1024 * 1024              # conservative fallback (v7x-sized)
    budget = int(vmem_cap * 0.85)
    try:
        kind = jax.devices()[0].device_kind.lower()
    except Exception:
        kind = ""
    bf16_exp = any(t in kind for t in ("v6", "6e", "v7", "7x"))   # v6e/v7x have bf16 EUP
    multi_tc = any(t in kind for t in ("v7", "7x"))               # 2 TensorCores per chip
    exp_dtype = jnp.bfloat16 if bf16_exp else jnp.float32

    # --- VMEM footprint for a (Bt, S, D) activation tile (review: include bf16 copies,
    #     ~20% headroom instead of a flat 2x) ---
    def tile_bytes(bt):
        w_bytes = (4 * D * D + 2 * D * d_ff) * 2          # bf16 weights / layer
        small_bytes = (10 * D + d_ff) * 4                  # biases + LN params / layer
        act_blocks = 2 * 2 * bt * S * D * 4                # x + out blocks, double-buffered
        inter = bt * S * ((8 * D + d_ff) * 4 + (6 * D + d_ff) * 2)   # f32 + bf16 temporaries
        scores = bt * S * S * (4 + 4 + 2)                  # s, p (f32) + p bf16, one head live
        ctx_scr = bt * S * D * 2 if use_ctx_scratch else 0
        return 2 * (w_bytes + small_bytes) + act_blocks + inter + scores + ctx_scr

    def fits(bt):
        return int(tile_bytes(bt) * 1.2) <= budget

    # Largest batch tile that fits -> weights amortized over Bt*S tokens per fetch.
    divisors = [d for d in range(B, 0, -1) if B % d == 0]
    Bt = next((d for d in divisors if fits(d)), 1)
    if multi_tc and B // Bt == 1 and B > 1:
        # v7x megacore: keep >= 2 parallel batch tiles so the second TensorCore has work.
        Bt = next((d for d in divisors if d <= B // 2 and fits(d)), Bt)

    vmem_limit = int(min(budget, max(tile_bytes(Bt) * 1.2, 64 * 1024 * 1024)))

    # Stack per-layer params with a leading L dim; weights as bf16 (halves DMA bytes),
    # biases / LN params stay f32.  Fold the attention scale into Wq/bq.
    wq = jnp.stack([(p["wq"] * scale).astype(bf16) for p in layer_params])
    bq = jnp.stack([(p["bq"] * scale).reshape(1, D) for p in layer_params])
    wk = jnp.stack([p["wk"].astype(bf16) for p in layer_params])
    bk = jnp.stack([p["bk"].reshape(1, D) for p in layer_params])
    wv = jnp.stack([p["wv"].astype(bf16) for p in layer_params])
    bv = jnp.stack([p["bv"].reshape(1, D) for p in layer_params])
    wo = jnp.stack([p["wo"].astype(bf16) for p in layer_params])
    bo = jnp.stack([p["bo"].reshape(1, D) for p in layer_params])
    w1 = jnp.stack([p["w1"].astype(bf16) for p in layer_params])
    b1 = jnp.stack([p["b1"].reshape(1, d_ff) for p in layer_params])
    w2 = jnp.stack([p["w2"].astype(bf16) for p in layer_params])
    b2 = jnp.stack([p["b2"].reshape(1, D) for p in layer_params])
    ln1_g = jnp.stack([p["ln1_g"].reshape(1, D) for p in layer_params])
    ln1_b = jnp.stack([p["ln1_b"].reshape(1, D) for p in layer_params])
    ln2_g = jnp.stack([p["ln2_g"].reshape(1, D) for p in layer_params])
    ln2_b = jnp.stack([p["ln2_b"].reshape(1, D) for p in layer_params])
    fng = norm_g.reshape(1, D)
    fnb = norm_b.reshape(1, D)

    act_map = lambda b, l: (b, 0, 0)     # activation block: constant across the layer axis
    lay_map = lambda b, l: (l, 0, 0)     # per-layer weights: indexed by layer grid coord
    cst_map = lambda b, l: (0, 0)

    spec_act = pl.BlockSpec((Bt, S, D), act_map)
    spec_DD = pl.BlockSpec((1, D, D), lay_map)
    spec_1D = pl.BlockSpec((1, 1, D), lay_map)
    spec_Df = pl.BlockSpec((1, D, d_ff), lay_map)
    spec_1f = pl.BlockSpec((1, 1, d_ff), lay_map)
    spec_fD = pl.BlockSpec((1, d_ff, D), lay_map)
    spec_fn = pl.BlockSpec((1, D), cst_map)

    in_specs = [spec_act,
                spec_1D, spec_1D,                      # ln1 gamma/beta
                spec_DD, spec_1D,                      # Wq, bq
                spec_DD, spec_1D,                      # Wk, bk
                spec_DD, spec_1D,                      # Wv, bv
                spec_DD, spec_1D,                      # Wo, bo
                spec_1D, spec_1D,                      # ln2 gamma/beta
                spec_Df, spec_1f,                      # W1, b1
                spec_fD, spec_1D,                      # W2, b2
                spec_fn, spec_fn]                      # final LN gamma/beta

    scratch_shapes = []
    if use_ctx_scratch:
        scratch_shapes.append(pltpu.VMEM((Bt, S, D), bf16))

    # NOTE: the layer axis MUST stay last and "arbitrary" — the output block (the resident
    # activation accumulator) is read+rewritten every layer step.
    return pl.pallas_call(
        functools.partial(fused_encoder_kernel, num_heads=num_heads,
                          exp_dtype=exp_dtype, use_ctx_scratch=use_ctx_scratch),
        out_shape=jax.ShapeDtypeStruct((B, S, D), jnp.float32),
        grid_spec=pltpu.PrefetchScalarGridSpec(
            num_scalar_prefetch=0,
            grid=(B // Bt, L),
            in_specs=in_specs,
            out_specs=pl.BlockSpec((Bt, S, D), act_map),
            scratch_shapes=scratch_shapes),
        compiler_params=pltpu.CompilerParams(
            dimension_semantics=("parallel", "arbitrary"),
            vmem_limit_bytes=vmem_limit),
    )(x, ln1_g, ln1_b, wq, bq, wk, bk, wv, bv, wo, bo,
      ln2_g, ln2_b, w1, b1, w2, b2, fng, fnb)


# ----------------------------- pure-JAX reference (f32) -----------------------


def _ref_layer(x, p, num_heads):
    B, S, D = x.shape
    dh = D // num_heads
    xn = _layernorm(x, p["ln1_g"], p["ln1_b"])
    q = xn @ p["wq"] + p["bq"]
    k = xn @ p["wk"] + p["bk"]
    v = xn @ p["wv"] + p["bv"]
    q = q.reshape(B, S, num_heads, dh)
    k = k.reshape(B, S, num_heads, dh)
    v = v.reshape(B, S, num_heads, dh)
    s = jnp.einsum("bqhd,bkhd->bhqk", q, k) / math.sqrt(dh)
    p_attn = jax.nn.softmax(s, axis=-1)
    ctx = jnp.einsum("bhqk,bkhd->bqhd", p_attn, v).reshape(B, S, D)
    x = x + ctx @ p["wo"] + p["bo"]
    xn2 = _layernorm(x, p["ln2_g"], p["ln2_b"])
    h = jnp.maximum(xn2 @ p["w1"] + p["b1"], 0.0)
    return x + h @ p["w2"] + p["b2"]


def _ref_encoder(x, layer_params, norm_g, norm_b, num_heads):
    for p in layer_params:
        x = _ref_layer(x, p, num_heads)
    return _layernorm(x, norm_g, norm_b)


# ----------------------------- parameter init ---------------------------------


def init_layer_params(key, D, d_ff):
    ks = jax.random.split(key, 6)
    f32 = jnp.float32
    return {
        "ln1_g": jnp.ones((1, D), f32), "ln1_b": jnp.zeros((1, D), f32),
        "wq": 0.05 * jax.random.normal(ks[0], (D, D), f32), "bq": jnp.zeros((1, D), f32),
        "wk": 0.05 * jax.random.normal(ks[1], (D, D), f32), "bk": jnp.zeros((1, D), f32),
        "wv": 0.05 * jax.random.normal(ks[2], (D, D), f32), "bv": jnp.zeros((1, D), f32),
        "wo": 0.05 * jax.random.normal(ks[3], (D, D), f32), "bo": jnp.zeros((1, D), f32),
        "ln2_g": jnp.ones((1, D), f32), "ln2_b": jnp.zeros((1, D), f32),
        "w1": 0.05 * jax.random.normal(ks[4], (D, d_ff), f32), "b1": jnp.zeros((1, d_ff), f32),
        "w2": 0.05 * jax.random.normal(ks[5], (d_ff, D), f32), "b2": jnp.zeros((1, D), f32),
    }


if __name__ == "__main__":
    B, S, D, H, D_FF, N = 2, 8, 32, 4, 64, 2

    key = jax.random.PRNGKey(0)
    kx, *layer_keys = jax.random.split(key, N + 1)
    x = jax.random.normal(kx, (B, S, D), jnp.float32)

    layer_params = [init_layer_params(k, D, D_FF) for k in layer_keys]
    norm_g = jnp.ones((1, D), jnp.float32)
    norm_b = jnp.zeros((1, D), jnp.float32)

    out = encoder_forward(x, layer_params, norm_g, norm_b, H)
    out = jax.block_until_ready(out)

    ref = _ref_encoder(x, layer_params, norm_g, norm_b, H)
    assert out.shape == (B, S, D)
    # bf16 MXU inputs (+ optional bf16 exp) + approx reciprocal -> relaxed tolerance.
    err = jnp.max(jnp.abs(out - ref))
    assert err < 5e-2, f"mismatch vs pure-JAX reference: {err}"

    print("KERNEL_OK")
</pallas_src>

<mosaic_0001>
module attributes {stable_mosaic.version = 11 : i64} {
  func.func @fused_encoder_kernel(%arg0: i32, %arg1: i32, %arg2: memref<2x8x32xf32, #tpu.memory_space<vmem>>, %arg3: memref<1x1x32xf32, #tpu.memory_space<vmem>>, %arg4: memref<1x1x32xf32, #tpu.memory_space<vmem>>, %arg5: memref<1x32x32xbf16, #tpu.memory_space<vmem>>, %arg6: memref<1x1x32xf32, #tpu.memory_space<vmem>>, %arg7: memref<1x32x32xbf16, #tpu.memory_space<vmem>>, %arg8: memref<1x1x32xf32, #tpu.memory_space<vmem>>, %arg9: memref<1x32x32xbf16, #tpu.memory_space<vmem>>, %arg10: memref<1x1x32xf32, #tpu.memory_space<vmem>>, %arg11: memref<1x32x32xbf16, #tpu.memory_space<vmem>>, %arg12: memref<1x1x32xf32, #tpu.memory_space<vmem>>, %arg13: memref<1x1x32xf32, #tpu.memory_space<vmem>>, %arg14: memref<1x1x32xf32, #tpu.memory_space<vmem>>, %arg15: memref<1x32x64xbf16, #tpu.memory_space<vmem>>, %arg16: memref<1x1x64xf32, #tpu.memory_space<vmem>>, %arg17: memref<1x64x32xbf16, #tpu.memory_space<vmem>>, %arg18: memref<1x1x32xf32, #tpu.memory_space<vmem>>, %arg19: memref<1x32xf32, #tpu.memory_space<vmem>>, %arg20: memref<1x32xf32, #tpu.memory_space<vmem>>, %arg21: memref<2x8x32xf32, #tpu.memory_space<vmem>>) attributes {dimension_semantics = [#tpu.dimension_semantics<parallel>, #tpu.dimension_semantics<arbitrary>], iteration_bounds = array<i64: 1, 2>, scalar_prefetch = 0 : i64, scratch_operands = 0 : i64, tpu.core_type = #tpu.core_type<tc>, window_params = [{transform_indices = @transform_0, window_bounds = array<i64: 2, 8, 32>}, {transform_indices = @transform_1, window_bounds = array<i64: 1, 1, 32>}, {transform_indices = @transform_2, window_bounds = array<i64: 1, 1, 32>}, {transform_indices = @transform_3, window_bounds = array<i64: 1, 32, 32>}, {transform_indices = @transform_4, window_bounds = array<i64: 1, 1, 32>}, {transform_indices = @transform_5, window_bounds = array<i64: 1, 32, 32>}, {transform_indices = @transform_6, window_bounds = array<i64: 1, 1, 32>}, {transform_indices = @transform_7, window_bounds = array<i64: 1, 32, 32>}, {transform_indices = @transform_8, window_bounds = array<i64: 1, 1, 32>}, {transform_indices = @transform_9, window_bounds = array<i64: 1, 32, 32>}, {transform_indices = @transform_10, window_bounds = array<i64: 1, 1, 32>}, {transform_indices = @transform_11, window_bounds = array<i64: 1, 1, 32>}, {transform_indices = @transform_12, window_bounds = array<i64: 1, 1, 32>}, {transform_indices = @transform_13, window_bounds = array<i64: 1, 32, 64>}, {transform_indices = @transform_14, window_bounds = array<i64: 1, 1, 64>}, {transform_indices = @transform_15, window_bounds = array<i64: 1, 64, 32>}, {transform_indices = @transform_16, window_bounds = array<i64: 1, 1, 32>}, {pipeline_mode = #tpu.pipeline_mode<synchronous>, transform_indices = @transform_17, window_bounds = array<i64: 1, 32>}, {pipeline_mode = #tpu.pipeline_mode<synchronous>, transform_indices = @transform_18, window_bounds = array<i64: 1, 32>}, {transform_indices = @transform_19, window_bounds = array<i64: 2, 8, 32>}]} {
    %c0_i32 = arith.constant 0 : i32
    %0 = arith.cmpi eq, %arg1, %c0_i32 : i32
    %1 = arith.extui %0 : i1 to i32
    %c0_i32_0 = arith.constant 0 : i32
    %2 = arith.cmpi ne, %1, %c0_i32_0 : i32
    scf.if %2 {
      %c0_96 = arith.constant 0 : index
      %c0_97 = arith.constant 0 : index
      %c0_98 = arith.constant 0 : index
      %204 = vector.load %arg2[%c0_96, %c0_97, %c0_98] : memref<2x8x32xf32, #tpu.memory_space<vmem>>, vector<2x8x32xf32>
      %c0_99 = arith.constant 0 : index
      %c0_100 = arith.constant 0 : index
      %c0_101 = arith.constant 0 : index
      %205 = vector.load %arg21[%c0_99, %c0_100, %c0_101] : memref<2x8x32xf32, #tpu.memory_space<vmem>>, vector<2x8x32xf32>
      tpu.vector_store %arg21[%c0_99, %c0_100, %c0_101], %204 {strides = array<i32>} : memref<2x8x32xf32, #tpu.memory_space<vmem>>, vector<2x8x32xf32>,
    } else {
    }
    %c0 = arith.constant 0 : index
    %c0_1 = arith.constant 0 : index
    %c0_2 = arith.constant 0 : index
    %3 = vector.load %arg21[%c0, %c0_1, %c0_2] : memref<2x8x32xf32, #tpu.memory_space<vmem>>, vector<2x8x32xf32>
    %4 = vector.shape_cast %3 : vector<2x8x32xf32> to vector<16x32xf32>
    %c0_3 = arith.constant 0 : index
    %c0_4 = arith.constant 0 : index
    %c0_5 = arith.constant 0 : index
    %5 = vector.load %arg3[%c0_3, %c0_4, %c0_5] : memref<1x1x32xf32, #tpu.memory_space<vmem>>, vector<1x1x32xf32>
    %6 = vector.shape_cast %5 : vector<1x1x32xf32> to vector<1x32xf32>
    %c0_6 = arith.constant 0 : index
    %c0_7 = arith.constant 0 : index
    %c0_8 = arith.constant 0 : index
    %7 = vector.load %arg4[%c0_6, %c0_7, %c0_8] : memref<1x1x32xf32, #tpu.memory_space<vmem>>, vector<1x1x32xf32>
    %8 = vector.shape_cast %7 : vector<1x1x32xf32> to vector<1x32xf32>
    %cst = arith.constant dense<0.000000e+00> : vector<16xf32>
    %9 = vector.multi_reduction <add>, %4, %cst [1] : vector<16x32xf32> to vector<16xf32>
    %10 = vector.shape_cast %9 : vector<16xf32> to vector<16x1xf32>
    %cst_9 = arith.constant 3.200000e+01 : f32
    %11 = vector.broadcast %cst_9 : f32 to vector<16x1xf32>
    %12 = arith.divf %10, %11 : vector<16x1xf32>
    %13 = vector.broadcast %12 : vector<16x1xf32> to vector<16x32xf32>
    %14 = arith.subf %4, %13 : vector<16x32xf32>
    %15 = arith.mulf %14, %14 : vector<16x32xf32>
    %cst_10 = arith.constant dense<0.000000e+00> : vector<16xf32>
    %16 = vector.multi_reduction <add>, %15, %cst_10 [1] : vector<16x32xf32> to vector<16xf32>
    %17 = vector.shape_cast %16 : vector<16xf32> to vector<16x1xf32>
    %cst_11 = arith.constant 3.200000e+01 : f32
    %18 = vector.broadcast %cst_11 : f32 to vector<16x1xf32>
    %19 = arith.divf %17, %18 : vector<16x1xf32>
    %20 = vector.broadcast %12 : vector<16x1xf32> to vector<16x32xf32>
    %21 = arith.subf %4, %20 : vector<16x32xf32>
    %cst_12 = arith.constant 9.99999974E-6 : f32
    %22 = vector.broadcast %cst_12 : f32 to vector<16x1xf32>
    %23 = arith.addf %19, %22 : vector<16x1xf32>
    %24 = math.rsqrt %23 : vector<16x1xf32>
    %25 = vector.broadcast %24 : vector<16x1xf32> to vector<16x32xf32>
    %26 = arith.mulf %21, %25 : vector<16x32xf32>
    %27 = vector.broadcast %6 : vector<1x32xf32> to vector<16x32xf32>
    %28 = arith.mulf %26, %27 : vector<16x32xf32>
    %29 = vector.broadcast %8 : vector<1x32xf32> to vector<16x32xf32>
    %30 = arith.addf %28, %29 : vector<16x32xf32>
    %31 = arith.truncf %30 : vector<16x32xf32> to vector<16x32xbf16>
    %c0_13 = arith.constant 0 : index
    %c0_14 = arith.constant 0 : index
    %c0_15 = arith.constant 0 : index
    %32 = vector.load %arg5[%c0_13, %c0_14, %c0_15] : memref<1x32x32xbf16, #tpu.memory_space<vmem>>, vector<1x32x32xbf16>
    %33 = vector.shape_cast %32 : vector<1x32x32xbf16> to vector<32x32xbf16>
    %cst_16 = arith.constant dense<0.000000e+00> : vector<16x32xf32>
    %34 = tpu.matmul %31, %33, %cst_16 {dimension_numbers = #tpu.dot_dimension_numbers<[1], [0], [0], [1], [0, 0, 1, 1], [], []>} : vector<16x32xbf16>, vector<32x32xbf16>, vector<16x32xf32> -> vector<16x32xf32>
    %c0_17 = arith.constant 0 : index
    %c0_18 = arith.constant 0 : index
    %c0_19 = arith.constant 0 : index
    %35 = vector.load %arg6[%c0_17, %c0_18, %c0_19] : memref<1x1x32xf32, #tpu.memory_space<vmem>>, vector<1x1x32xf32>
    %36 = vector.shape_cast %35 : vector<1x1x32xf32> to vector<1x32xf32>
    %37 = vector.broadcast %36 : vector<1x32xf32> to vector<16x32xf32>
    %38 = arith.addf %34, %37 : vector<16x32xf32>
    %c0_20 = arith.constant 0 : index
    %c0_21 = arith.constant 0 : index
    %c0_22 = arith.constant 0 : index
    %39 = vector.load %arg7[%c0_20, %c0_21, %c0_22] : memref<1x32x32xbf16, #tpu.memory_space<vmem>>, vector<1x32x32xbf16>
    %40 = vector.shape_cast %39 : vector<1x32x32xbf16> to vector<32x32xbf16>
    %cst_23 = arith.constant dense<0.000000e+00> : vector<16x32xf32>
    %41 = tpu.matmul %31, %40, %cst_23 {dimension_numbers = #tpu.dot_dimension_numbers<[1], [0], [0], [1], [0, 0, 1, 1], [], []>} : vector<16x32xbf16>, vector<32x32xbf16>, vector<16x32xf32> -> vector<16x32xf32>
    %c0_24 = arith.constant 0 : index
    %c0_25 = arith.constant 0 : index
    %c0_26 = arith.constant 0 : index
    %42 = vector.load %arg8[%c0_24, %c0_25, %c0_26] : memref<1x1x32xf32, #tpu.memory_space<vmem>>, vector<1x1x32xf32>
    %43 = vector.shape_cast %42 : vector<1x1x32xf32> to vector<1x32xf32>
    %44 = vector.broadcast %43 : vector<1x32xf32> to vector<16x32xf32>
    %45 = arith.addf %41, %44 : vector<16x32xf32>
    %c0_27 = arith.constant 0 : index
    %c0_28 = arith.constant 0 : index
    %c0_29 = arith.constant 0 : index
    %46 = vector.load %arg9[%c0_27, %c0_28, %c0_29] : memref<1x32x32xbf16, #tpu.memory_space<vmem>>, vector<1x32x32xbf16>
    %47 = vector.shape_cast %46 : vector<1x32x32xbf16> to vector<32x32xbf16>
    %cst_30 = arith.constant dense<0.000000e+00> : vector<16x32xf32>
    %48 = tpu.matmul %31, %47, %cst_30 {dimension_numbers = #tpu.dot_dimension_numbers<[1], [0], [0], [1], [0, 0, 1, 1], [], []>} : vector<16x32xbf16>, vector<32x32xbf16>, vector<16x32xf32> -> vector<16x32xf32>
    %c0_31 = arith.constant 0 : index
    %c0_32 = arith.constant 0 : index
    %c0_33 = arith.constant 0 : index
    %49 = vector.load %arg10[%c0_31, %c0_32, %c0_33] : memref<1x1x32xf32, #tpu.memory_space<vmem>>, vector<1x1x32xf32>
    %50 = vector.shape_cast %49 : vector<1x1x32xf32> to vector<1x32xf32>
    %51 = vector.broadcast %50 : vector<1x32xf32> to vector<16x32xf32>
    %52 = arith.addf %48, %51 : vector<16x32xf32>
    %53 = arith.truncf %38 : vector<16x32xf32> to vector<16x32xbf16>
    %54 = vector.shape_cast %53 : vector<16x32xbf16> to vector<2x8x32xbf16>
    %55 = arith.truncf %45 : vector<16x32xf32> to vector<16x32xbf16>
    %56 = vector.shape_cast %55 : vector<16x32xbf16> to vector<2x8x32xbf16>
    %57 = arith.truncf %52 : vector<16x32xf32> to vector<16x32xbf16>
    %58 = vector.shape_cast %57 : vector<16x32xbf16> to vector<2x8x32xbf16>
    %cst_34 = arith.constant 0.000000e+00 : f32
    %59 = vector.broadcast %cst_34 : f32 to vector<16x32xf32>
    %60 = vector.extract_strided_slice %54 {offsets = [0, 0, 0], sizes = [2, 8, 8], strides = [1, 1, 1]} : vector<2x8x32xbf16> to vector<2x8x8xbf16>
    %61 = vector.extract_strided_slice %56 {offsets = [0, 0, 0], sizes = [2, 8, 8], strides = [1, 1, 1]} : vector<2x8x32xbf16> to vector<2x8x8xbf16>
    %62 = vector.extract_strided_slice %58 {offsets = [0, 0, 0], sizes = [2, 8, 8], strides = [1, 1, 1]} : vector<2x8x32xbf16> to vector<2x8x8xbf16>
    "tpu.trace_start"() <{level = 10 : i32, message = "bqd,bkd->bqk"}> : () -> ()
    %cst_35 = arith.constant dense<0.000000e+00> : vector<2x8x8xf32>
    %63 = tpu.matmul %60, %61, %cst_35 {dimension_numbers = #tpu.dot_dimension_numbers<[2], [2], [1], [1], [0, 0, 0, 1, 1, 1], [0], [0]>} : vector<2x8x8xbf16>, vector<2x8x8xbf16>, vector<2x8x8xf32> -> vector<2x8x8xf32>
    "tpu.trace_stop"() : () -> ()
    %cst_36 = arith.constant dense<0xFF800000> : vector<2x8xf32>
    %64 = vector.multi_reduction <maximumf>, %63, %cst_36 [2] : vector<2x8x8xf32> to vector<2x8xf32>
    %65 = vector.shape_cast %64 : vector<2x8xf32> to vector<2x8x1xf32>
    %66 = vector.broadcast %65 : vector<2x8x1xf32> to vector<2x8x8xf32>
    %67 = arith.subf %63, %66 : vector<2x8x8xf32>
    %68 = math.exp %67 : vector<2x8x8xf32>
    %cst_37 = arith.constant dense<0.000000e+00> : vector<2x8xf32>
    %69 = vector.multi_reduction <add>, %68, %cst_37 [2] : vector<2x8x8xf32> to vector<2x8xf32>
    %70 = vector.shape_cast %69 : vector<2x8xf32> to vector<2x8x1xf32>
    %71 = tpu.reciprocal %70 {approx = true} : vector<2x8x1xf32> -> vector<2x8x1xf32>
    %72 = arith.truncf %68 : vector<2x8x8xf32> to vector<2x8x8xbf16>
    "tpu.trace_start"() <{level = 10 : i32, message = "bqk,bkd->bqd"}> : () -> ()
    %cst_38 = arith.constant dense<0.000000e+00> : vector<2x8x8xf32>
    %73 = tpu.matmul %72, %62, %cst_38 {dimension_numbers = #tpu.dot_dimension_numbers<[2], [1], [1], [2], [0, 0, 0, 1, 1, 2], [0], [0]>} : vector<2x8x8xbf16>, vector<2x8x8xbf16>, vector<2x8x8xf32> -> vector<2x8x8xf32>
    "tpu.trace_stop"() : () -> ()
    %74 = vector.broadcast %71 : vector<2x8x1xf32> to vector<2x8x8xf32>
    %75 = arith.mulf %73, %74 : vector<2x8x8xf32>
    %76 = arith.truncf %75 : vector<2x8x8xf32> to vector<2x8x8xbf16>
    %c0_39 = arith.constant 0 : index
    %c0_40 = arith.constant 0 : index
    %c0_41 = arith.constant 0 : index
    %77 = vector.load %arg11[%c0_39, %c0_40, %c0_41] : memref<1x32x32xbf16, #tpu.memory_space<vmem>>, vector<1x8x32xbf16>
    %78 = vector.shape_cast %77 : vector<1x8x32xbf16> to vector<8x32xbf16>
    %79 = vector.shape_cast %76 : vector<2x8x8xbf16> to vector<16x8xbf16>
    %cst_42 = arith.constant dense<0.000000e+00> : vector<16x32xf32>
    %80 = tpu.matmul %79, %78, %cst_42 {dimension_numbers = #tpu.dot_dimension_numbers<[1], [0], [0], [1], [0, 0, 1, 1], [], []>} : vector<16x8xbf16>, vector<8x32xbf16>, vector<16x32xf32> -> vector<16x32xf32>
    %81 = arith.addf %59, %80 : vector<16x32xf32>
    %82 = vector.extract_strided_slice %54 {offsets = [0, 0, 8], sizes = [2, 8, 8], strides = [1, 1, 1]} : vector<2x8x32xbf16> to vector<2x8x8xbf16>
    %83 = vector.extract_strided_slice %56 {offsets = [0, 0, 8], sizes = [2, 8, 8], strides = [1, 1, 1]} : vector<2x8x32xbf16> to vector<2x8x8xbf16>
    %84 = vector.extract_strided_slice %58 {offsets = [0, 0, 8], sizes = [2, 8, 8], strides = [1, 1, 1]} : vector<2x8x32xbf16> to vector<2x8x8xbf16>
    "tpu.trace_start"() <{level = 10 : i32, message = "bqd,bkd->bqk"}> : () -> ()
    %cst_43 = arith.constant dense<0.000000e+00> : vector<2x8x8xf32>
    %85 = tpu.matmul %82, %83, %cst_43 {dimension_numbers = #tpu.dot_dimension_numbers<[2], [2], [1], [1], [0, 0, 0, 1, 1, 1], [0], [0]>} : vector<2x8x8xbf16>, vector<2x8x8xbf16>, vector<2x8x8xf32> -> vector<2x8x8xf32>
    "tpu.trace_stop"() : () -> ()
    %cst_44 = arith.constant dense<0xFF800000> : vector<2x8xf32>
    %86 = vector.multi_reduction <maximumf>, %85, %cst_44 [2] : vector<2x8x8xf32> to vector<2x8xf32>
    %87 = vector.shape_cast %86 : vector<2x8xf32> to vector<2x8x1xf32>
    %88 = vector.broadcast %87 : vector<2x8x1xf32> to vector<2x8x8xf32>
    %89 = arith.subf %85, %88 : vector<2x8x8xf32>
    %90 = math.exp %89 : vector<2x8x8xf32>
    %cst_45 = arith.constant dense<0.000000e+00> : vector<2x8xf32>
    %91 = vector.multi_reduction <add>, %90, %cst_45 [2] : vector<2x8x8xf32> to vector<2x8xf32>
    %92 = vector.shape_cast %91 : vector<2x8xf32> to vector<2x8x1xf32>
    %93 = tpu.reciprocal %92 {approx = true} : vector<2x8x1xf32> -> vector<2x8x1xf32>
    %94 = arith.truncf %90 : vector<2x8x8xf32> to vector<2x8x8xbf16>
    "tpu.trace_start"() <{level = 10 : i32, message = "bqk,bkd->bqd"}> : () -> ()
    %cst_46 = arith.constant dense<0.000000e+00> : vector<2x8x8xf32>
    %95 = tpu.matmul %94, %84, %cst_46 {dimension_numbers = #tpu.dot_dimension_numbers<[2], [1], [1], [2], [0, 0, 0, 1, 1, 2], [0], [0]>} : vector<2x8x8xbf16>, vector<2x8x8xbf16>, vector<2x8x8xf32> -> vector<2x8x8xf32>
    "tpu.trace_stop"() : () -> ()
    %96 = vector.broadcast %93 : vector<2x8x1xf32> to vector<2x8x8xf32>
    %97 = arith.mulf %95, %96 : vector<2x8x8xf32>
    %98 = arith.truncf %97 : vector<2x8x8xf32> to vector<2x8x8xbf16>
    %c0_47 = arith.constant 0 : index
    %c8 = arith.constant 8 : index
    %c0_48 = arith.constant 0 : index
    %99 = vector.load %arg11[%c0_47, %c8, %c0_48] : memref<1x32x32xbf16, #tpu.memory_space<vmem>>, vector<1x8x32xbf16>
    %100 = vector.shape_cast %99 : vector<1x8x32xbf16> to vector<8x32xbf16>
    %101 = vector.shape_cast %98 : vector<2x8x8xbf16> to vector<16x8xbf16>
    %cst_49 = arith.constant dense<0.000000e+00> : vector<16x32xf32>
    %102 = tpu.matmul %101, %100, %cst_49 {dimension_numbers = #tpu.dot_dimension_numbers<[1], [0], [0], [1], [0, 0, 1, 1], [], []>} : vector<16x8xbf16>, vector<8x32xbf16>, vector<16x32xf32> -> vector<16x32xf32>
    %103 = arith.addf %81, %102 : vector<16x32xf32>
    %104 = vector.extract_strided_slice %54 {offsets = [0, 0, 16], sizes = [2, 8, 8], strides = [1, 1, 1]} : vector<2x8x32xbf16> to vector<2x8x8xbf16>
    %105 = vector.extract_strided_slice %56 {offsets = [0, 0, 16], sizes = [2, 8, 8], strides = [1, 1, 1]} : vector<2x8x32xbf16> to vector<2x8x8xbf16>
    %106 = vector.extract_strided_slice %58 {offsets = [0, 0, 16], sizes = [2, 8, 8], strides = [1, 1, 1]} : vector<2x8x32xbf16> to vector<2x8x8xbf16>
    "tpu.trace_start"() <{level = 10 : i32, message = "bqd,bkd->bqk"}> : () -> ()
    %cst_50 = arith.constant dense<0.000000e+00> : vector<2x8x8xf32>
    %107 = tpu.matmul %104, %105, %cst_50 {dimension_numbers = #tpu.dot_dimension_numbers<[2], [2], [1], [1], [0, 0, 0, 1, 1, 1], [0], [0]>} : vector<2x8x8xbf16>, vector<2x8x8xbf16>, vector<2x8x8xf32> -> vector<2x8x8xf32>
    "tpu.trace_stop"() : () -> ()
    %cst_51 = arith.constant dense<0xFF800000> : vector<2x8xf32>
    %108 = vector.multi_reduction <maximumf>, %107, %cst_51 [2] : vector<2x8x8xf32> to vector<2x8xf32>
    %109 = vector.shape_cast %108 : vector<2x8xf32> to vector<2x8x1xf32>
    %110 = vector.broadcast %109 : vector<2x8x1xf32> to vector<2x8x8xf32>
    %111 = arith.subf %107, %110 : vector<2x8x8xf32>
    %112 = math.exp %111 : vector<2x8x8xf32>
    %cst_52 = arith.constant dense<0.000000e+00> : vector<2x8xf32>
    %113 = vector.multi_reduction <add>, %112, %cst_52 [2] : vector<2x8x8xf32> to vector<2x8xf32>
    %114 = vector.shape_cast %113 : vector<2x8xf32> to vector<2x8x1xf32>
    %115 = tpu.reciprocal %114 {approx = true} : vector<2x8x1xf32> -> vector<2x8x1xf32>
    %116 = arith.truncf %112 : vector<2x8x8xf32> to vector<2x8x8xbf16>
    "tpu.trace_start"() <{level = 10 : i32, message = "bqk,bkd->bqd"}> : () -> ()
    %cst_53 = arith.constant dense<0.000000e+00> : vector<2x8x8xf32>
    %117 = tpu.matmul %116, %106, %cst_53 {dimension_numbers = #tpu.dot_dimension_numbers<[2], [1], [1], [2], [0, 0, 0, 1, 1, 2], [0], [0]>} : vector<2x8x8xbf16>, vector<2x8x8xbf16>, vector<2x8x8xf32> -> vector<2x8x8xf32>
    "tpu.trace_stop"() : () -> ()
    %118 = vector.broadcast %115 : vector<2x8x1xf32> to vector<2x8x8xf32>
    %119 = arith.mulf %117, %118 : vector<2x8x8xf32>
    %120 = arith.truncf %119 : vector<2x8x8xf32> to vector<2x8x8xbf16>
    %c0_54 = arith.constant 0 : index
    %c16 = arith.constant 16 : index
    %c0_55 = arith.constant 0 : index
    %121 = vector.load %arg11[%c0_54, %c16, %c0_55] : memref<1x32x32xbf16, #tpu.memory_space<vmem>>, vector<1x8x32xbf16>
    %122 = vector.shape_cast %121 : vector<1x8x32xbf16> to vector<8x32xbf16>
    %123 = vector.shape_cast %120 : vector<2x8x8xbf16> to vector<16x8xbf16>
    %cst_56 = arith.constant dense<0.000000e+00> : vector<16x32xf32>
    %124 = tpu.matmul %123, %122, %cst_56 {dimension_numbers = #tpu.dot_dimension_numbers<[1], [0], [0], [1], [0, 0, 1, 1], [], []>} : vector<16x8xbf16>, vector<8x32xbf16>, vector<16x32xf32> -> vector<16x32xf32>
    %125 = arith.addf %103, %124 : vector<16x32xf32>
    %126 = vector.extract_strided_slice %54 {offsets = [0, 0, 24], sizes = [2, 8, 8], strides = [1, 1, 1]} : vector<2x8x32xbf16> to vector<2x8x8xbf16>
    %127 = vector.extract_strided_slice %56 {offsets = [0, 0, 24], sizes = [2, 8, 8], strides = [1, 1, 1]} : vector<2x8x32xbf16> to vector<2x8x8xbf16>
    %128 = vector.extract_strided_slice %58 {offsets = [0, 0, 24], sizes = [2, 8, 8], strides = [1, 1, 1]} : vector<2x8x32xbf16> to vector<2x8x8xbf16>
    "tpu.trace_start"() <{level = 10 : i32, message = "bqd,bkd->bqk"}> : () -> ()
    %cst_57 = arith.constant dense<0.000000e+00> : vector<2x8x8xf32>
    %129 = tpu.matmul %126, %127, %cst_57 {dimension_numbers = #tpu.dot_dimension_numbers<[2], [2], [1], [1], [0, 0, 0, 1, 1, 1], [0], [0]>} : vector<2x8x8xbf16>, vector<2x8x8xbf16>, vector<2x8x8xf32> -> vector<2x8x8xf32>
    "tpu.trace_stop"() : () -> ()
    %cst_58 = arith.constant dense<0xFF800000> : vector<2x8xf32>
    %130 = vector.multi_reduction <maximumf>, %129, %cst_58 [2] : vector<2x8x8xf32> to vector<2x8xf32>
    %131 = vector.shape_cast %130 : vector<2x8xf32> to vector<2x8x1xf32>
    %132 = vector.broadcast %131 : vector<2x8x1xf32> to vector<2x8x8xf32>
    %133 = arith.subf %129, %132 : vector<2x8x8xf32>
    %134 = math.exp %133 : vector<2x8x8xf32>
    %cst_59 = arith.constant dense<0.000000e+00> : vector<2x8xf32>
    %135 = vector.multi_reduction <add>, %134, %cst_59 [2] : vector<2x8x8xf32> to vector<2x8xf32>
    %136 = vector.shape_cast %135 : vector<2x8xf32> to vector<2x8x1xf32>
    %137 = tpu.reciprocal %136 {approx = true} : vector<2x8x1xf32> -> vector<2x8x1xf32>
    %138 = arith.truncf %134 : vector<2x8x8xf32> to vector<2x8x8xbf16>
    "tpu.trace_start"() <{level = 10 : i32, message = "bqk,bkd->bqd"}> : () -> ()
    %cst_60 = arith.constant dense<0.000000e+00> : vector<2x8x8xf32>
    %139 = tpu.matmul %138, %128, %cst_60 {dimension_numbers = #tpu.dot_dimension_numbers<[2], [1], [1], [2], [0, 0, 0, 1, 1, 2], [0], [0]>} : vector<2x8x8xbf16>, vector<2x8x8xbf16>, vector<2x8x8xf32> -> vector<2x8x8xf32>
    "tpu.trace_stop"() : () -> ()
    %140 = vector.broadcast %137 : vector<2x8x1xf32> to vector<2x8x8xf32>
    %141 = arith.mulf %139, %140 : vector<2x8x8xf32>
    %142 = arith.truncf %141 : vector<2x8x8xf32> to vector<2x8x8xbf16>
    %c0_61 = arith.constant 0 : index
    %c24 = arith.constant 24 : index
    %c0_62 = arith.constant 0 : index
    %143 = vector.load %arg11[%c0_61, %c24, %c0_62] : memref<1x32x32xbf16, #tpu.memory_space<vmem>>, vector<1x8x32xbf16>
    %144 = vector.shape_cast %143 : vector<1x8x32xbf16> to vector<8x32xbf16>
    %145 = vector.shape_cast %142 : vector<2x8x8xbf16> to vector<16x8xbf16>
    %cst_63 = arith.constant dense<0.000000e+00> : vector<16x32xf32>
    %146 = tpu.matmul %145, %144, %cst_63 {dimension_numbers = #tpu.dot_dimension_numbers<[1], [0], [0], [1], [0, 0, 1, 1], [], []>} : vector<16x8xbf16>, vector<8x32xbf16>, vector<16x32xf32> -> vector<16x32xf32>
    %147 = arith.addf %125, %146 : vector<16x32xf32>
    %148 = arith.addf %4, %147 : vector<16x32xf32>
    %c0_64 = arith.constant 0 : index
    %c0_65 = arith.constant 0 : index
    %c0_66 = arith.constant 0 : index
    %149 = vector.load %arg12[%c0_64, %c0_65, %c0_66] : memref<1x1x32xf32, #tpu.memory_space<vmem>>, vector<1x1x32xf32>
    %150 = vector.shape_cast %149 : vector<1x1x32xf32> to vector<1x32xf32>
    %151 = vector.broadcast %150 : vector<1x32xf32> to vector<16x32xf32>
    %152 = arith.addf %148, %151 : vector<16x32xf32>
    %c0_67 = arith.constant 0 : index
    %c0_68 = arith.constant 0 : index
    %c0_69 = arith.constant 0 : index
    %153 = vector.load %arg13[%c0_67, %c0_68, %c0_69] : memref<1x1x32xf32, #tpu.memory_space<vmem>>, vector<1x1x32xf32>
    %154 = vector.shape_cast %153 : vector<1x1x32xf32> to vector<1x32xf32>
    %c0_70 = arith.constant 0 : index
    %c0_71 = arith.constant 0 : index
    %c0_72 = arith.constant 0 : index
    %155 = vector.load %arg14[%c0_70, %c0_71, %c0_72] : memref<1x1x32xf32, #tpu.memory_space<vmem>>, vector<1x1x32xf32>
    %156 = vector.shape_cast %155 : vector<1x1x32xf32> to vector<1x32xf32>
    %cst_73 = arith.constant dense<0.000000e+00> : vector<16xf32>
    %157 = vector.multi_reduction <add>, %152, %cst_73 [1] : vector<16x32xf32> to vector<16xf32>
    %158 = vector.shape_cast %157 : vector<16xf32> to vector<16x1xf32>
    %cst_74 = arith.constant 3.200000e+01 : f32
    %159 = vector.broadcast %cst_74 : f32 to vector<16x1xf32>
    %160 = arith.divf %158, %159 : vector<16x1xf32>
    %161 = vector.broadcast %160 : vector<16x1xf32> to vector<16x32xf32>
    %162 = arith.subf %152, %161 : vector<16x32xf32>
    %163 = arith.mulf %162, %162 : vector<16x32xf32>
    %cst_75 = arith.constant dense<0.000000e+00> : vector<16xf32>
    %164 = vector.multi_reduction <add>, %163, %cst_75 [1] : vector<16x32xf32> to vector<16xf32>
    %165 = vector.shape_cast %164 : vector<16xf32> to vector<16x1xf32>
    %cst_76 = arith.constant 3.200000e+01 : f32
    %166 = vector.broadcast %cst_76 : f32 to vector<16x1xf32>
    %167 = arith.divf %165, %166 : vector<16x1xf32>
    %168 = vector.broadcast %160 : vector<16x1xf32> to vector<16x32xf32>
    %169 = arith.subf %152, %168 : vector<16x32xf32>
    %cst_77 = arith.constant 9.99999974E-6 : f32
    %170 = vector.broadcast %cst_77 : f32 to vector<16x1xf32>
    %171 = arith.addf %167, %170 : vector<16x1xf32>
    %172 = math.rsqrt %171 : vector<16x1xf32>
    %173 = vector.broadcast %172 : vector<16x1xf32> to vector<16x32xf32>
    %174 = arith.mulf %169, %173 : vector<16x32xf32>
    %175 = vector.broadcast %154 : vector<1x32xf32> to vector<16x32xf32>
    %176 = arith.mulf %174, %175 : vector<16x32xf32>
    %177 = vector.broadcast %156 : vector<1x32xf32> to vector<16x32xf32>
    %178 = arith.addf %176, %177 : vector<16x32xf32>
    %179 = arith.truncf %178 : vector<16x32xf32> to vector<16x32xbf16>
    %c0_78 = arith.constant 0 : index
    %c0_79 = arith.constant 0 : index
    %c0_80 = arith.constant 0 : index
    %180 = vector.load %arg15[%c0_78, %c0_79, %c0_80] : memref<1x32x64xbf16, #tpu.memory_space<vmem>>, vector<1x32x64xbf16>
    %181 = vector.shape_cast %180 : vector<1x32x64xbf16> to vector<32x64xbf16>
    %cst_81 = arith.constant dense<0.000000e+00> : vector<16x64xf32>
    %182 = tpu.matmul %179, %181, %cst_81 {dimension_numbers = #tpu.dot_dimension_numbers<[1], [0], [0], [1], [0, 0, 1, 1], [], []>} : vector<16x32xbf16>, vector<32x64xbf16>, vector<16x64xf32> -> vector<16x64xf32>
    %c0_82 = arith.constant 0 : index
    %c0_83 = arith.constant 0 : index
    %c0_84 = arith.constant 0 : index
    %183 = vector.load %arg16[%c0_82, %c0_83, %c0_84] : memref<1x1x64xf32, #tpu.memory_space<vmem>>, vector<1x1x64xf32>
    %184 = vector.shape_cast %183 : vector<1x1x64xf32> to vector<1x64xf32>
    %185 = vector.broadcast %184 : vector<1x64xf32> to vector<16x64xf32>
    %186 = arith.addf %182, %185 : vector<16x64xf32>
    %cst_85 = arith.constant 0.000000e+00 : f32
    %187 = vector.broadcast %cst_85 : f32 to vector<16x64xf32>
    %188 = arith.maximumf %186, %187 : vector<16x64xf32>
    %189 = arith.truncf %188 : vector<16x64xf32> to vector<16x64xbf16>
    %c0_86 = arith.constant 0 : index
    %c0_87 = arith.constant 0 : index
    %c0_88 = arith.constant 0 : index
    %190 = vector.load %arg17[%c0_86, %c0_87, %c0_88] : memref<1x64x32xbf16, #tpu.memory_space<vmem>>, vector<1x64x32xbf16>
    %191 = vector.shape_cast %190 : vector<1x64x32xbf16> to vector<64x32xbf16>
    %cst_89 = arith.constant dense<0.000000e+00> : vector<16x32xf32>
    %192 = tpu.matmul %189, %191, %cst_89 {dimension_numbers = #tpu.dot_dimension_numbers<[1], [0], [0], [1], [0, 0, 1, 1], [], []>} : vector<16x64xbf16>, vector<64x32xbf16>, vector<16x32xf32> -> vector<16x32xf32>
    %193 = arith.addf %152, %192 : vector<16x32xf32>
    %c0_90 = arith.constant 0 : index
    %c0_91 = arith.constant 0 : index
    %c0_92 = arith.constant 0 : index
    %194 = vector.load %arg18[%c0_90, %c0_91, %c0_92] : memref<1x1x32xf32, #tpu.memory_space<vmem>>, vector<1x1x32xf32>
    %195 = vector.shape_cast %194 : vector<1x1x32xf32> to vector<1x32xf32>
    %196 = vector.broadcast %195 : vector<1x32xf32> to vector<16x32xf32>
    %197 = arith.addf %193, %196 : vector<16x32xf32>
    %c1_i32 = arith.constant 1 : i32
    %198 = arith.cmpi slt, %arg1, %c1_i32 : i32
    %199 = arith.extui %198 : i1 to i32
    %c0_i32_93 = arith.constant 0 : i32
    %200 = arith.cmpi ne, %199, %c0_i32_93 : i32
    scf.if %200 {
      %204 = vector.shape_cast %197 : vector<16x32xf32> to vector<2x8x32xf32>
      %c0_96 = arith.constant 0 : index
      %c0_97 = arith.constant 0 : index
      %c0_98 = arith.constant 0 : index
      %205 = vector.load %arg21[%c0_96, %c0_97, %c0_98] : memref<2x8x32xf32, #tpu.memory_space<vmem>>, vector<2x8x32xf32>
      tpu.vector_store %arg21[%c0_96, %c0_97, %c0_98], %204 {strides = array<i32>} : memref<2x8x32xf32, #tpu.memory_space<vmem>>, vector<2x8x32xf32>,
    } else {
    }
    %c1_i32_94 = arith.constant 1 : i32
    %201 = arith.cmpi eq, %arg1, %c1_i32_94 : i32
    %202 = arith.extui %201 : i1 to i32
    %c0_i32_95 = arith.constant 0 : i32
    %203 = arith.cmpi ne, %202, %c0_i32_95 : i32
    scf.if %203 {
      %c0_96 = arith.constant 0 : index
      %c0_97 = arith.constant 0 : index
      %204 = vector.load %arg19[%c0_96, %c0_97] : memref<1x32xf32, #tpu.memory_space<vmem>>, vector<1x32xf32>
      %c0_98 = arith.constant 0 : index
      %c0_99 = arith.constant 0 : index
      %205 = vector.load %arg20[%c0_98, %c0_99] : memref<1x32xf32, #tpu.memory_space<vmem>>, vector<1x32xf32>
      %cst_100 = arith.constant dense<0.000000e+00> : vector<16xf32>
      %206 = vector.multi_reduction <add>, %197, %cst_100 [1] : vector<16x32xf32> to vector<16xf32>
      %207 = vector.shape_cast %206 : vector<16xf32> to vector<16x1xf32>
      %cst_101 = arith.constant 3.200000e+01 : f32
      %208 = vector.broadcast %cst_101 : f32 to vector<16x1xf32>
      %209 = arith.divf %207, %208 : vector<16x1xf32>
      %210 = vector.broadcast %209 : vector<16x1xf32> to vector<16x32xf32>
      %211 = arith.subf %197, %210 : vector<16x32xf32>
      %212 = arith.mulf %211, %211 : vector<16x32xf32>
      %cst_102 = arith.constant dense<0.000000e+00> : vector<16xf32>
      %213 = vector.multi_reduction <add>, %212, %cst_102 [1] : vector<16x32xf32> to vector<16xf32>
      %214 = vector.shape_cast %213 : vector<16xf32> to vector<16x1xf32>
      %cst_103 = arith.constant 3.200000e+01 : f32
      %215 = vector.broadcast %cst_103 : f32 to vector<16x1xf32>
      %216 = arith.divf %214, %215 : vector<16x1xf32>
      %217 = vector.broadcast %209 : vector<16x1xf32> to vector<16x32xf32>
      %218 = arith.subf %197, %217 : vector<16x32xf32>
      %cst_104 = arith.constant 9.99999974E-6 : f32
      %219 = vector.broadcast %cst_104 : f32 to vector<16x1xf32>
      %220 = arith.addf %216, %219 : vector<16x1xf32>
      %221 = math.rsqrt %220 : vector<16x1xf32>
      %222 = vector.broadcast %221 : vector<16x1xf32> to vector<16x32xf32>
      %223 = arith.mulf %218, %222 : vector<16x32xf32>
      %224 = vector.broadcast %204 : vector<1x32xf32> to vector<16x32xf32>
      %225 = arith.mulf %223, %224 : vector<16x32xf32>
      %226 = vector.broadcast %205 : vector<1x32xf32> to vector<16x32xf32>
      %227 = arith.addf %225, %226 : vector<16x32xf32>
      %228 = vector.shape_cast %227 : vector<16x32xf32> to vector<2x8x32xf32>
      %c0_105 = arith.constant 0 : index
      %c0_106 = arith.constant 0 : index
      %c0_107 = arith.constant 0 : index
      %229 = vector.load %arg21[%c0_105, %c0_106, %c0_107] : memref<2x8x32xf32, #tpu.memory_space<vmem>>, vector<2x8x32xf32>
      tpu.vector_store %arg21[%c0_105, %c0_106, %c0_107], %228 {strides = array<i32>} : memref<2x8x32xf32, #tpu.memory_space<vmem>>, vector<2x8x32xf32>,
    } else {
    }
    return
  }
  func.func @transform_0(%arg0: i32, %arg1: i32) -> (i32, i32, i32) {
    %c0_i32 = arith.constant 0 : i32
    %c0_i32_0 = arith.constant 0 : i32
    %c0_i32_1 = arith.constant 0 : i32
    return %arg0, %c0_i32, %c0_i32_0 : i32, i32, i32
  }
  func.func @transform_1(%arg0: i32, %arg1: i32) -> (i32, i32, i32) {
    %c0_i32 = arith.constant 0 : i32
    %c0_i32_0 = arith.constant 0 : i32
    %c0_i32_1 = arith.constant 0 : i32
    return %arg1, %c0_i32, %c0_i32_0 : i32, i32, i32
  }
  func.func @transform_2(%arg0: i32, %arg1: i32) -> (i32, i32, i32) {
    %c0_i32 = arith.constant 0 : i32
    %c0_i32_0 = arith.constant 0 : i32
    %c0_i32_1 = arith.constant 0 : i32
    return %arg1, %c0_i32, %c0_i32_0 : i32, i32, i32
  }
  func.func @transform_3(%arg0: i32, %arg1: i32) -> (i32, i32, i32) {
    %c0_i32 = arith.constant 0 : i32
    %c0_i32_0 = arith.constant 0 : i32
    %c0_i32_1 = arith.constant 0 : i32
    return %arg1, %c0_i32, %c0_i32_0 : i32, i32, i32
  }
  func.func @transform_4(%arg0: i32, %arg1: i32) -> (i32, i32, i32) {
    %c0_i32 = arith.constant 0 : i32
    %c0_i32_0 = arith.constant 0 : i32
    %c0_i32_1 = arith.constant 0 : i32
    return %arg1, %c0_i32, %c0_i32_0 : i32, i32, i32
  }
  func.func @transform_5(%arg0: i32, %arg1: i32) -> (i32, i32, i32) {
    %c0_i32 = arith.constant 0 : i32
    %c0_i32_0 = arith.constant 0 : i32
    %c0_i32_1 = arith.constant 0 : i32
    return %arg1, %c0_i32, %c0_i32_0 : i32, i32, i32
  }
  func.func @transform_6(%arg0: i32, %arg1: i32) -> (i32, i32, i32) {
    %c0_i32 = arith.constant 0 : i32
    %c0_i32_0 = arith.constant 0 : i32
    %c0_i32_1 = arith.constant 0 : i32
    return %arg1, %c0_i32, %c0_i32_0 : i32, i32, i32
  }
  func.func @transform_7(%arg0: i32, %arg1: i32) -> (i32, i32, i32) {
    %c0_i32 = arith.constant 0 : i32
    %c0_i32_0 = arith.constant 0 : i32
    %c0_i32_1 = arith.constant 0 : i32
    return %arg1, %c0_i32, %c0_i32_0 : i32, i32, i32
  }
  func.func @transform_8(%arg0: i32, %arg1: i32) -> (i32, i32, i32) {
    %c0_i32 = arith.constant 0 : i32
    %c0_i32_0 = arith.constant 0 : i32
    %c0_i32_1 = arith.constant 0 : i32
    return %arg1, %c0_i32, %c0_i32_0 : i32, i32, i32
  }
  func.func @transform_9(%arg0: i32, %arg1: i32) -> (i32, i32, i32) {
    %c0_i32 = arith.constant 0 : i32
    %c0_i32_0 = arith.constant 0 : i32
    %c0_i32_1 = arith.constant 0 : i32
    return %arg1, %c0_i32, %c0_i32_0 : i32, i32, i32
  }
  func.func @transform_10(%arg0: i32, %arg1: i32) -> (i32, i32, i32) {
    %c0_i32 = arith.constant 0 : i32
    %c0_i32_0 = arith.constant 0 : i32
    %c0_i32_1 = arith.constant 0 : i32
    return %arg1, %c0_i32, %c0_i32_0 : i32, i32, i32
  }
  func.func @transform_11(%arg0: i32, %arg1: i32) -> (i32, i32, i32) {
    %c0_i32 = arith.constant 0 : i32
    %c0_i32_0 = arith.constant 0 : i32
    %c0_i32_1 = arith.constant 0 : i32
    return %arg1, %c0_i32, %c0_i32_0 : i32, i32, i32
  }
  func.func @transform_12(%arg0: i32, %arg1: i32) -> (i32, i32, i32) {
    %c0_i32 = arith.constant 0 : i32
    %c0_i32_0 = arith.constant 0 : i32
    %c0_i32_1 = arith.constant 0 : i32
    return %arg1, %c0_i32, %c0_i32_0 : i32, i32, i32
  }
  func.func @transform_13(%arg0: i32, %arg1: i32) -> (i32, i32, i32) {
    %c0_i32 = arith.constant 0 : i32
    %c0_i32_0 = arith.constant 0 : i32
    %c0_i32_1 = arith.constant 0 : i32
    return %arg1, %c0_i32, %c0_i32_0 : i32, i32, i32
  }
  func.func @transform_14(%arg0: i32, %arg1: i32) -> (i32, i32, i32) {
    %c0_i32 = arith.constant 0 : i32
    %c0_i32_0 = arith.constant 0 : i32
    %c0_i32_1 = arith.constant 0 : i32
    return %arg1, %c0_i32, %c0_i32_0 : i32, i32, i32
  }
  func.func @transform_15(%arg0: i32, %arg1: i32) -> (i32, i32, i32) {
    %c0_i32 = arith.constant 0 : i32
    %c0_i32_0 = arith.constant 0 : i32
    %c0_i32_1 = arith.constant 0 : i32
    return %arg1, %c0_i32, %c0_i32_0 : i32, i32, i32
  }
  func.func @transform_16(%arg0: i32, %arg1: i32) -> (i32, i32, i32) {
    %c0_i32 = arith.constant 0 : i32
    %c0_i32_0 = arith.constant 0 : i32
    %c0_i32_1 = arith.constant 0 : i32
    return %arg1, %c0_i32, %c0_i32_0 : i32, i32, i32
  }
  func.func @transform_17(%arg0: i32, %arg1: i32) -> (i32, i32) {
    %c0_i32 = arith.constant 0 : i32
    %c0_i32_0 = arith.constant 0 : i32
    %c0_i32_1 = arith.constant 0 : i32
    return %c0_i32, %c0_i32_0 : i32, i32
  }
  func.func @transform_18(%arg0: i32, %arg1: i32) -> (i32, i32) {
    %c0_i32 = arith.constant 0 : i32
    %c0_i32_0 = arith.constant 0 : i32
    %c0_i32_1 = arith.constant 0 : i32
    return %c0_i32, %c0_i32_0 : i32, i32
  }
  func.func @transform_19(%arg0: i32, %arg1: i32) -> (i32, i32, i32) {
    %c0_i32 = arith.constant 0 : i32
    %c0_i32_0 = arith.constant 0 : i32
    %c0_i32_1 = arith.constant 0 : i32
    return %arg0, %c0_i32, %c0_i32_0 : i32, i32, i32
  }
}

</mosaic_0001>

<llo_original>
// kernel: tpu_custom_call.1
$region0: #{tpu_custom_call.1}
  #allocation0 [shape = 'u32[]', space=smem, size = 0x4, offset = 0x4, fixed_abs, tag = 'smem constant byte address 0x4 - core index']
  #allocation1 [shape = 'u32[144,128]{1,0:T(1,128)}', space=vmem, size = 0x12000, scoped, tag = 'internal scratch']
  %s0 = inlined_call_operand.hbm [shape: f32[2,8,32], index: 0, kind: input, shape index: {}]
  %s1 = inlined_call_operand.vmem [shape: f32[2,1,32], index: 1, kind: input, shape index: {}]
  %s2 = inlined_call_operand.vmem [shape: f32[2,1,32], index: 2, kind: input, shape index: {}]
  %s3 = inlined_call_operand.vmem [shape: bf16[2,32,32], index: 3, kind: input, shape index: {}]
  %s4 = inlined_call_operand.vmem [shape: f32[2,1,32], index: 4, kind: input, shape index: {}]
  %s5 = inlined_call_operand.vmem [shape: bf16[2,32,32], index: 5, kind: input, shape index: {}]
  %s6 = inlined_call_operand.vmem [shape: f32[2,1,32], index: 6, kind: input, shape index: {}]
  %s7 = inlined_call_operand.vmem [shape: bf16[2,32,32], index: 7, kind: input, shape index: {}]
  %s8 = inlined_call_operand.vmem [shape: f32[2,1,32], index: 8, kind: input, shape index: {}]
  %s9 = inlined_call_operand.hbm [shape: bf16[2,32,32], index: 9, kind: input, shape index: {}]
  %s10 = inlined_call_operand.vmem [shape: f32[2,1,32], index: 10, kind: input, shape index: {}]
  %s11 = inlined_call_operand.vmem [shape: f32[2,1,32], index: 11, kind: input, shape index: {}]
  %s12 = inlined_call_operand.vmem [shape: f32[2,1,32], index: 12, kind: input, shape index: {}]
  %s13 = inlined_call_operand.hbm [shape: bf16[2,32,64], index: 13, kind: input, shape index: {}]
  %s14 = inlined_call_operand.vmem [shape: f32[2,1,64], index: 14, kind: input, shape index: {}]
  %s15 = inlined_call_operand.vmem [shape: bf16[2,64,32], index: 15, kind: input, shape index: {}]
  %s16 = inlined_call_operand.vmem [shape: f32[2,1,32], index: 16, kind: input, shape index: {}]
  %s17 = inlined_call_operand.vmem [shape: f32[1,32], index: 17, kind: input, shape index: {}]
  %s18 = inlined_call_operand.vmem [shape: f32[1,32], index: 18, kind: input, shape index: {}]
  %s19 = inlined_call_operand.hbm [shape: f32[2,8,32], index: 19, kind: output, shape index: {}]
  %s20 = sld [smem:[#allocation0]]
  $region133: #{tpu_custom_call.1} parent=0
    _
  %s22 = ssub.s32 1, %s20
  %s23 = scalar_select 0, %s22, %s20
  $region1: #{tpu_custom_call.1} parent=0
    #allocation2 [shape = 'u8[8192]{0}', space=vmem, size = 0x2000, scoped, tag = 'input window, operand 0, single buffered']
    #allocation3 [shape = 's32[2]{0}', space=sflag, size = 0x8, scoped, tag = 'scoped memory for tpu_custom_call.1']
    #allocation4 [shape = 's32[2]{0}', space=sflag, size = 0x8, scoped, tag = 'scoped memory for tpu_custom_call.1']
    #allocation5 [shape = 'u8[16384]{0}', space=vmem, size = 0x4000, scoped, tag = 'input window, operand 9']
    #allocation6 [shape = 's32[2]{0}', space=sflag, size = 0x8, scoped, tag = 'scoped memory for tpu_custom_call.1']
    #allocation7 [shape = 'u8[16384]{0}', space=vmem, size = 0x4000, scoped, tag = 'input window, operand 13']
    #allocation8 [shape = 'u8[8192]{0}', space=vmem, size = 0x2000, scoped, tag = 'output window, operand 0, single buffered']
    %24 = vsyncpa [#allocation3], 0
    %25 = vsyncpa [#allocation6], 0
    %s26 = scalar_lea.sflag [#allocation6], 1
    %27 = vsyncpa %s26, 0
    %28 = vsyncpa [#allocation4], 0
    loop: start=0, step=1, limit=4
    $region2: #{tpu_custom_call.1} parent=1 // loop_pre_header
      _
    $region3: #{tpu_custom_call.1} parent=1 // loop_header
      %s30 = sphi 0, %s34
      %p31 = scmp.ge.s32.totalorder %s30, 4
      %s37 = sphi 0, %s49
      %s38 = sphi 0, %s45
      %s39 = sphi 0, %s37
      %s40 = sphi 0, %s38
      %s41 = sphi 0, %s39
      %s42 = sphi 0, %s40
      %s52 = sphi 0, %s54
      %s55 = sphi 0, %s52
      %s56 = sphi 0, %s55
      %s72 = sphi 0, %s56
      %s78 = sphi 0, %s80
      %s81 = sphi 0, %s78
      %s82 = sphi 0, %s81
      %s98 = sphi 0, %s82
      %s104 = sphi 0, %s106
      %s107 = sphi 0, %s104
      %s108 = sphi 0, %s107
      %s124 = sphi 0, %s108
      %s130 = sphi 0, %s132
      %s133 = sphi 0, %s130
      %s134 = sphi 0, %s133
      %s150 = sphi 0, %s134
      %s156 = sphi 0, %s158
      %s159 = sphi 0, %s156
      %s160 = sphi 0, %s159
      %s176 = sphi 0, %s160
      %s182 = sphi 0, %s184
      %s185 = sphi 0, %s182
      %s186 = sphi 0, %s185
      %s202 = sphi 0, %s186
      %s208 = sphi 0, %s210
      %s211 = sphi 0, %s208
      %s212 = sphi 0, %s211
      %s228 = sphi 0, %s212
      %s234 = sphi 0, %s236
      %s237 = sphi 0, %s234
      %s238 = sphi 0, %s237
      %s254 = sphi 0, %s238
      %s260 = sphi 0, %s262
      %s263 = sphi 0, %s260
      %s264 = sphi 0, %s263
      %s280 = sphi 0, %s264
      %s286 = sphi 0, %s288
      %s289 = sphi 0, %s286
      %s290 = sphi 0, %s289
      %s306 = sphi 0, %s290
      %s312 = sphi 0, %s314
      %s315 = sphi 0, %s312
      %s316 = sphi 0, %s315
      %s332 = sphi 0, %s316
      %s338 = sphi 0, %s340
      %s341 = sphi 0, %s338
      %s342 = sphi 0, %s341
      %s358 = sphi 0, %s342
      %s364 = sphi 0, %s366
      %s367 = sphi 0, %s364
      %s368 = sphi 0, %s367
      %s384 = sphi 0, %s368
      %s390 = sphi 0, %s392
      %s393 = sphi 0, %s390
      %s394 = sphi 0, %s393
      %s410 = sphi 0, %s394
      %s416 = sphi 0, %s418
      %s419 = sphi 0, %s416
      %s420 = sphi 0, %s419
      %s436 = sphi 0, %s420
      %s442 = sphi 0, %s444
      %s445 = sphi 0, %s442
      %s446 = sphi 0, %s445
      %s462 = sphi 0, %s446
      %s468 = sphi 0, %s470
      %s471 = sphi 0, %s468
      %s472 = sphi 0, %s471
      %s488 = sphi 0, %s472
      %s492 = sphi 0, %s492
      %s494 = sphi 0, %s492
      %s495 = sphi 0, %s494
      %s509 = sphi 0, %s495
      %s513 = sphi 0, %s513
      %s515 = sphi 0, %s513
      %s516 = sphi 0, %s515
      %s530 = sphi 0, %s516
      %s536 = sphi 0, %s538
      %s539 = sphi 0, %s536
      %s540 = sphi 0, %s539
      %s556 = sphi 0, %s540
    $region4: #{tpu_custom_call.1} parent=1 // loop_header_branch
      %33 = sbr.rel (%p31) target = $region8
    $region5: #{tpu_custom_call.1} parent=1 // loop_body
      %s35 = ssub.s32 %s30, 1
      %s36 = ssub.s32 %s30, 2
      %s43 = sadd.s32 1, %s38
      %p44 = scmp.ge.s32.totalorder %s43, 2
      %s45 = scalar_select %p44, 0, %s43
      %s46 = sadd.s32 1, %s37
      %s47 = scalar_select %p44, %s46, %s37
      %p48 = scmp.ge.s32.totalorder %s47, 1
      %s49 = scalar_select %p48, 0, %s47
      %s50 = ssub.s32 %s37, %s49
      %p51 = scmp.eq.s32.totalorder %s50, 0
      %s53 = sadd.s32 %s52, 1
      %s54 = scalar_select %p51, %s52, %s53
      %p57 = pneg %p51
      %p58 = scmp.eq.s32.totalorder %s30, 1
      %p59 = por %p57, %p58
      %p60 = scmp.ne.s32.totalorder %s52, %s55
      %p61 = scmp.eq.s32.totalorder %s30, 0
      %p62 = por %p60, %p61
      %p63 = scmp.ne.s32.totalorder %s52, %s55
      %p64 = scmp.eq.s32.totalorder %s35, 1
      %p65 = por %p63, %p64
      %p66 = scmp.ne.s32.totalorder %s55, %s56
      %p67 = scmp.eq.s32.totalorder %s35, 0
      %p68 = por %p66, %p67
      %p69 = scmp.ne.s32.totalorder %s55, %s56
      %p70 = scmp.eq.s32.totalorder %s36, 1
      %p71 = por %p69, %p70
      %p73 = scmp.ne.s32.totalorder %s56, %s72
      %p74 = scmp.eq.s32.totalorder %s36, 0
      %p75 = por %p73, %p74
      %s76 = ssub.s32 %s38, %s45
      %p77 = scmp.eq.s32.totalorder %s76, 0
      %s79 = sadd.s32 %s78, 1
      %s80 = scalar_select %p77, %s78, %s79
      %p83 = pneg %p77
      %p84 = scmp.eq.s32.totalorder %s30, 1
      %p85 = por %p83, %p84
      %p86 = scmp.ne.s32.totalorder %s78, %s81
      %p87 = scmp.eq.s32.totalorder %s30, 0
      %p88 = por %p86, %p87
      %p89 = scmp.ne.s32.totalorder %s78, %s81
      %p90 = scmp.eq.s32.totalorder %s35, 1
      %p91 = por %p89, %p90
      %p92 = scmp.ne.s32.totalorder %s81, %s82
      %p93 = scmp.eq.s32.totalorder %s35, 0
      %p94 = por %p92, %p93
      %p95 = scmp.ne.s32.totalorder %s81, %s82
      %p96 = scmp.eq.s32.totalorder %s36, 1
      %p97 = por %p95, %p96
      %p99 = scmp.ne.s32.totalorder %s82, %s98
      %p100 = scmp.eq.s32.totalorder %s36, 0
      %p101 = por %p99, %p100
      %s102 = ssub.s32 %s38, %s45
      %p103 = scmp.eq.s32.totalorder %s102, 0
      %s105 = sadd.s32 %s104, 1
      %s106 = scalar_select %p103, %s104, %s105
      %p109 = pneg %p103
      %p110 = scmp.eq.s32.totalorder %s30, 1
      %p111 = por %p109, %p110
      %p112 = scmp.ne.s32.totalorder %s104, %s107
      %p113 = scmp.eq.s32.totalorder %s30, 0
      %p114 = por %p112, %p113
      %p115 = scmp.ne.s32.totalorder %s104, %s107
      %p116 = scmp.eq.s32.totalorder %s35, 1
      %p117 = por %p115, %p116
      %p118 = scmp.ne.s32.totalorder %s107, %s108
      %p119 = scmp.eq.s32.totalorder %s35, 0
      %p120 = por %p118, %p119
      %p121 = scmp.ne.s32.totalorder %s107, %s108
      %p122 = scmp.eq.s32.totalorder %s36, 1
      %p123 = por %p121, %p122
      %p125 = scmp.ne.s32.totalorder %s108, %s124
      %p126 = scmp.eq.s32.totalorder %s36, 0
      %p127 = por %p125, %p126
      %s128 = ssub.s32 %s38, %s45
      %p129 = scmp.eq.s32.totalorder %s128, 0
      %s131 = sadd.s32 %s130, 1
      %s132 = scalar_select %p129, %s130, %s131
      %p135 = pneg %p129
      %p136 = scmp.eq.s32.totalorder %s30, 1
      %p137 = por %p135, %p136
      %p138 = scmp.ne.s32.totalorder %s130, %s133
      %p139 = scmp.eq.s32.totalorder %s30, 0
      %p140 = por %p138, %p139
      %p141 = scmp.ne.s32.totalorder %s130, %s133
      %p142 = scmp.eq.s32.totalorder %s35, 1
      %p143 = por %p141, %p142
      %p144 = scmp.ne.s32.totalorder %s133, %s134
      %p145 = scmp.eq.s32.totalorder %s35, 0
      %p146 = por %p144, %p145
      %p147 = scmp.ne.s32.totalorder %s133, %s134
      %p148 = scmp.eq.s32.totalorder %s36, 1
      %p149 = por %p147, %p148
      %p151 = scmp.ne.s32.totalorder %s134, %s150
      %p152 = scmp.eq.s32.totalorder %s36, 0
      %p153 = por %p151, %p152
      %s154 = ssub.s32 %s38, %s45
      %p155 = scmp.eq.s32.totalorder %s154, 0
      %s157 = sadd.s32 %s156, 1
      %s158 = scalar_select %p155, %s156, %s157
      %p161 = pneg %p155
      %p162 = scmp.eq.s32.totalorder %s30, 1
      %p163 = por %p161, %p162
      %p164 = scmp.ne.s32.totalorder %s156, %s159
      %p165 = scmp.eq.s32.totalorder %s30, 0
      %p166 = por %p164, %p165
      %p167 = scmp.ne.s32.totalorder %s156, %s159
      %p168 = scmp.eq.s32.totalorder %s35, 1
      %p169 = por %p167, %p168
      %p170 = scmp.ne.s32.totalorder %s159, %s160
      %p171 = scmp.eq.s32.totalorder %s35, 0
      %p172 = por %p170, %p171
      %p173 = scmp.ne.s32.totalorder %s159, %s160
      %p174 = scmp.eq.s32.totalorder %s36, 1
      %p175 = por %p173, %p174
      %p177 = scmp.ne.s32.totalorder %s160, %s176
      %p178 = scmp.eq.s32.totalorder %s36, 0
      %p179 = por %p177, %p178
      %s180 = ssub.s32 %s38, %s45
      %p181 = scmp.eq.s32.totalorder %s180, 0
      %s183 = sadd.s32 %s182, 1
      %s184 = scalar_select %p181, %s182, %s183
      %p187 = pneg %p181
      %p188 = scmp.eq.s32.totalorder %s30, 1
      %p189 = por %p187, %p188
      %p190 = scmp.ne.s32.totalorder %s182, %s185
      %p191 = scmp.eq.s32.totalorder %s30, 0
      %p192 = por %p190, %p191
      %p193 = scmp.ne.s32.totalorder %s182, %s185
      %p194 = scmp.eq.s32.totalorder %s35, 1
      %p195 = por %p193, %p194
      %p196 = scmp.ne.s32.totalorder %s185, %s186
      %p197 = scmp.eq.s32.totalorder %s35, 0
      %p198 = por %p196, %p197
      %p199 = scmp.ne.s32.totalorder %s185, %s186
      %p200 = scmp.eq.s32.totalorder %s36, 1
      %p201 = por %p199, %p200
      %p203 = scmp.ne.s32.totalorder %s186, %s202
      %p204 = scmp.eq.s32.totalorder %s36, 0
      %p205 = por %p203, %p204
      %s206 = ssub.s32 %s38, %s45
      %p207 = scmp.eq.s32.totalorder %s206, 0
      %s209 = sadd.s32 %s208, 1
      %s210 = scalar_select %p207, %s208, %s209
      %p213 = pneg %p207
      %p214 = scmp.eq.s32.totalorder %s30, 1
      %p215 = por %p213, %p214
      %p216 = scmp.ne.s32.totalorder %s208, %s211
      %p217 = scmp.eq.s32.totalorder %s30, 0
      %p218 = por %p216, %p217
      %p219 = scmp.ne.s32.totalorder %s208, %s211
      %p220 = scmp.eq.s32.totalorder %s35, 1
      %p221 = por %p219, %p220
      %p222 = scmp.ne.s32.totalorder %s211, %s212
      %p223 = scmp.eq.s32.totalorder %s35, 0
      %p224 = por %p222, %p223
      %p225 = scmp.ne.s32.totalorder %s211, %s212
      %p226 = scmp.eq.s32.totalorder %s36, 1
      %p227 = por %p225, %p226
      %p229 = scmp.ne.s32.totalorder %s212, %s228
      %p230 = scmp.eq.s32.totalorder %s36, 0
      %p231 = por %p229, %p230
      %s232 = ssub.s32 %s38, %s45
      %p233 = scmp.eq.s32.totalorder %s232, 0
      %s235 = sadd.s32 %s234, 1
      %s236 = scalar_select %p233, %s234, %s235
      %p239 = pneg %p233
      %p240 = scmp.eq.s32.totalorder %s30, 1
      %p241 = por %p239, %p240
      %p242 = scmp.ne.s32.totalorder %s234, %s237
      %p243 = scmp.eq.s32.totalorder %s30, 0
      %p244 = por %p242, %p243
      %p245 = scmp.ne.s32.totalorder %s234, %s237
      %p246 = scmp.eq.s32.totalorder %s35, 1
      %p247 = por %p245, %p246
      %p248 = scmp.ne.s32.totalorder %s237, %s238
      %p249 = scmp.eq.s32.totalorder %s35, 0
      %p250 = por %p248, %p249
      %p251 = scmp.ne.s32.totalorder %s237, %s238
      %p252 = scmp.eq.s32.totalorder %s36, 1
      %p253 = por %p251, %p252
      %p255 = scmp.ne.s32.totalorder %s238, %s254
      %p256 = scmp.eq.s32.totalorder %s36, 0
      %p257 = por %p255, %p256
      %s258 = ssub.s32 %s38, %s45
      %p259 = scmp.eq.s32.totalorder %s258, 0
      %s261 = sadd.s32 %s260, 1
      %s262 = scalar_select %p259, %s260, %s261
      %p265 = pneg %p259
      %p266 = scmp.eq.s32.totalorder %s30, 1
      %p267 = por %p265, %p266
      %p268 = scmp.ne.s32.totalorder %s260, %s263
      %p269 = scmp.eq.s32.totalorder %s30, 0
      %p270 = por %p268, %p269
      %p271 = scmp.ne.s32.totalorder %s260, %s263
      %p272 = scmp.eq.s32.totalorder %s35, 1
      %p273 = por %p271, %p272
      %p274 = scmp.ne.s32.totalorder %s263, %s264
      %p275 = scmp.eq.s32.totalorder %s35, 0
      %p276 = por %p274, %p275
      %p277 = scmp.ne.s32.totalorder %s263, %s264
      %p278 = scmp.eq.s32.totalorder %s36, 1
      %p279 = por %p277, %p278
      %p281 = scmp.ne.s32.totalorder %s264, %s280
      %p282 = scmp.eq.s32.totalorder %s36, 0
      %p283 = por %p281, %p282
      %s284 = ssub.s32 %s38, %s45
      %p285 = scmp.eq.s32.totalorder %s284, 0
      %s287 = sadd.s32 %s286, 1
      %s288 = scalar_select %p285, %s286, %s287
      %p291 = pneg %p285
      %p292 = scmp.eq.s32.totalorder %s30, 1
      %p293 = por %p291, %p292
      %p294 = scmp.ne.s32.totalorder %s286, %s289
      %p295 = scmp.eq.s32.totalorder %s30, 0
      %p296 = por %p294, %p295
      %p297 = scmp.ne.s32.totalorder %s286, %s289
      %p298 = scmp.eq.s32.totalorder %s35, 1
      %p299 = por %p297, %p298
      %p300 = scmp.ne.s32.totalorder %s289, %s290
      %p301 = scmp.eq.s32.totalorder %s35, 0
      %p302 = por %p300, %p301
      %p303 = scmp.ne.s32.totalorder %s289, %s290
      %p304 = scmp.eq.s32.totalorder %s36, 1
      %p305 = por %p303, %p304
      %p307 = scmp.ne.s32.totalorder %s290, %s306
      %p308 = scmp.eq.s32.totalorder %s36, 0
      %p309 = por %p307, %p308
      %s310 = ssub.s32 %s38, %s45
      %p311 = scmp.eq.s32.totalorder %s310, 0
      %s313 = sadd.s32 %s312, 1
      %s314 = scalar_select %p311, %s312, %s313
      %p317 = pneg %p311
      %p318 = scmp.eq.s32.totalorder %s30, 1
      %p319 = por %p317, %p318
      %p320 = scmp.ne.s32.totalorder %s312, %s315
      %p321 = scmp.eq.s32.totalorder %s30, 0
      %p322 = por %p320, %p321
      %p323 = scmp.ne.s32.totalorder %s312, %s315
      %p324 = scmp.eq.s32.totalorder %s35, 1
      %p325 = por %p323, %p324
      %p326 = scmp.ne.s32.totalorder %s315, %s316
      %p327 = scmp.eq.s32.totalorder %s35, 0
      %p328 = por %p326, %p327
      %p329 = scmp.ne.s32.totalorder %s315, %s316
      %p330 = scmp.eq.s32.totalorder %s36, 1
      %p331 = por %p329, %p330
      %p333 = scmp.ne.s32.totalorder %s316, %s332
      %p334 = scmp.eq.s32.totalorder %s36, 0
      %p335 = por %p333, %p334
      %s336 = ssub.s32 %s38, %s45
      %p337 = scmp.eq.s32.totalorder %s336, 0
      %s339 = sadd.s32 %s338, 1
      %s340 = scalar_select %p337, %s338, %s339
      %p343 = pneg %p337
      %p344 = scmp.eq.s32.totalorder %s30, 1
      %p345 = por %p343, %p344
      %p346 = scmp.ne.s32.totalorder %s338, %s341
      %p347 = scmp.eq.s32.totalorder %s30, 0
      %p348 = por %p346, %p347
      %p349 = scmp.ne.s32.totalorder %s338, %s341
      %p350 = scmp.eq.s32.totalorder %s35, 1
      %p351 = por %p349, %p350
      %p352 = scmp.ne.s32.totalorder %s341, %s342
      %p353 = scmp.eq.s32.totalorder %s35, 0
      %p354 = por %p352, %p353
      %p355 = scmp.ne.s32.totalorder %s341, %s342
      %p356 = scmp.eq.s32.totalorder %s36, 1
      %p357 = por %p355, %p356
      %p359 = scmp.ne.s32.totalorder %s342, %s358
      %p360 = scmp.eq.s32.totalorder %s36, 0
      %p361 = por %p359, %p360
      %s362 = ssub.s32 %s38, %s45
      %p363 = scmp.eq.s32.totalorder %s362, 0
      %s365 = sadd.s32 %s364, 1
      %s366 = scalar_select %p363, %s364, %s365
      %p369 = pneg %p363
      %p370 = scmp.eq.s32.totalorder %s30, 1
      %p371 = por %p369, %p370
      %p372 = scmp.ne.s32.totalorder %s364, %s367
      %p373 = scmp.eq.s32.totalorder %s30, 0
      %p374 = por %p372, %p373
      %p375 = scmp.ne.s32.totalorder %s364, %s367
      %p376 = scmp.eq.s32.totalorder %s35, 1
      %p377 = por %p375, %p376
      %p378 = scmp.ne.s32.totalorder %s367, %s368
      %p379 = scmp.eq.s32.totalorder %s35, 0
      %p380 = por %p378, %p379
      %p381 = scmp.ne.s32.totalorder %s367, %s368
      %p382 = scmp.eq.s32.totalorder %s36, 1
      %p383 = por %p381, %p382
      %p385 = scmp.ne.s32.totalorder %s368, %s384
      %p386 = scmp.eq.s32.totalorder %s36, 0
      %p387 = por %p385, %p386
      %s388 = ssub.s32 %s38, %s45
      %p389 = scmp.eq.s32.totalorder %s388, 0
      %s391 = sadd.s32 %s390, 1
      %s392 = scalar_select %p389, %s390, %s391
      %p395 = pneg %p389
      %p396 = scmp.eq.s32.totalorder %s30, 1
      %p397 = por %p395, %p396
      %p398 = scmp.ne.s32.totalorder %s390, %s393
      %p399 = scmp.eq.s32.totalorder %s30, 0
      %p400 = por %p398, %p399
      %p401 = scmp.ne.s32.totalorder %s390, %s393
      %p402 = scmp.eq.s32.totalorder %s35, 1
      %p403 = por %p401, %p402
      %p404 = scmp.ne.s32.totalorder %s393, %s394
      %p405 = scmp.eq.s32.totalorder %s35, 0
      %p406 = por %p404, %p405
      %p407 = scmp.ne.s32.totalorder %s393, %s394
      %p408 = scmp.eq.s32.totalorder %s36, 1
      %p409 = por %p407, %p408
      %p411 = scmp.ne.s32.totalorder %s394, %s410
      %p412 = scmp.eq.s32.totalorder %s36, 0
      %p413 = por %p411, %p412
      %s414 = ssub.s32 %s38, %s45
      %p415 = scmp.eq.s32.totalorder %s414, 0
      %s417 = sadd.s32 %s416, 1
      %s418 = scalar_select %p415, %s416, %s417
      %p421 = pneg %p415
      %p422 = scmp.eq.s32.totalorder %s30, 1
      %p423 = por %p421, %p422
      %p424 = scmp.ne.s32.totalorder %s416, %s419
      %p425 = scmp.eq.s32.totalorder %s30, 0
      %p426 = por %p424, %p425
      %p427 = scmp.ne.s32.totalorder %s416, %s419
      %p428 = scmp.eq.s32.totalorder %s35, 1
      %p429 = por %p427, %p428
      %p430 = scmp.ne.s32.totalorder %s419, %s420
      %p431 = scmp.eq.s32.totalorder %s35, 0
      %p432 = por %p430, %p431
      %p433 = scmp.ne.s32.totalorder %s419, %s420
      %p434 = scmp.eq.s32.totalorder %s36, 1
      %p435 = por %p433, %p434
      %p437 = scmp.ne.s32.totalorder %s420, %s436
      %p438 = scmp.eq.s32.totalorder %s36, 0
      %p439 = por %p437, %p438
      %s440 = ssub.s32 %s38, %s45
      %p441 = scmp.eq.s32.totalorder %s440, 0
      %s443 = sadd.s32 %s442, 1
      %s444 = scalar_select %p441, %s442, %s443
      %p447 = pneg %p441
      %p448 = scmp.eq.s32.totalorder %s30, 1
      %p449 = por %p447, %p448
      %p450 = scmp.ne.s32.totalorder %s442, %s445
      %p451 = scmp.eq.s32.totalorder %s30, 0
      %p452 = por %p450, %p451
      %p453 = scmp.ne.s32.totalorder %s442, %s445
      %p454 = scmp.eq.s32.totalorder %s35, 1
      %p455 = por %p453, %p454
      %p456 = scmp.ne.s32.totalorder %s445, %s446
      %p457 = scmp.eq.s32.totalorder %s35, 0
      %p458 = por %p456, %p457
      %p459 = scmp.ne.s32.totalorder %s445, %s446
      %p460 = scmp.eq.s32.totalorder %s36, 1
      %p461 = por %p459, %p460
      %p463 = scmp.ne.s32.totalorder %s446, %s462
      %p464 = scmp.eq.s32.totalorder %s36, 0
      %p465 = por %p463, %p464
      %s466 = ssub.s32 %s38, %s45
      %p467 = scmp.eq.s32.totalorder %s466, 0
      %s469 = sadd.s32 %s468, 1
      %s470 = scalar_select %p467, %s468, %s469
      %p473 = pneg %p467
      %p474 = scmp.eq.s32.totalorder %s30, 1
      %p475 = por %p473, %p474
      %p476 = scmp.ne.s32.totalorder %s468, %s471
      %p477 = scmp.eq.s32.totalorder %s30, 0
      %p478 = por %p476, %p477
      %p479 = scmp.ne.s32.totalorder %s468, %s471
      %p480 = scmp.eq.s32.totalorder %s35, 1
      %p481 = por %p479, %p480
      %p482 = scmp.ne.s32.totalorder %s471, %s472
      %p483 = scmp.eq.s32.totalorder %s35, 0
      %p484 = por %p482, %p483
      %p485 = scmp.ne.s32.totalorder %s471, %s472
      %p486 = scmp.eq.s32.totalorder %s36, 1
      %p487 = por %p485, %p486
      %p489 = scmp.ne.s32.totalorder %s472, %s488
      %p490 = scmp.eq.s32.totalorder %s36, 0
      %p491 = por %p489, %p490
      %s493 = sadd.s32 %s492, 1
      %p496 = scmp.eq.s32.totalorder %s30, 1
      %p497 = scmp.ne.s32.totalorder %s492, %s494
      %p498 = scmp.eq.s32.totalorder %s30, 0
      %p499 = por %p497, %p498
      %p500 = scmp.ne.s32.totalorder %s492, %s494
      %p501 = scmp.eq.s32.totalorder %s35, 1
      %p502 = por %p500, %p501
      %p503 = scmp.ne.s32.totalorder %s494, %s495
      %p504 = scmp.eq.s32.totalorder %s35, 0
      %p505 = por %p503, %p504
      %p506 = scmp.ne.s32.totalorder %s494, %s495
      %p507 = scmp.eq.s32.totalorder %s36, 1
      %p508 = por %p506, %p507
      %p510 = scmp.ne.s32.totalorder %s495, %s509
      %p511 = scmp.eq.s32.totalorder %s36, 0
      %p512 = por %p510, %p511
      %s514 = sadd.s32 %s513, 1
      %p517 = scmp.eq.s32.totalorder %s30, 1
      %p518 = scmp.ne.s32.totalorder %s513, %s515
      %p519 = scmp.eq.s32.totalorder %s30, 0
      %p520 = por %p518, %p519
      %p521 = scmp.ne.s32.totalorder %s513, %s515
      %p522 = scmp.eq.s32.totalorder %s35, 1
      %p523 = por %p521, %p522
      %p524 = scmp.ne.s32.totalorder %s515, %s516
      %p525 = scmp.eq.s32.totalorder %s35, 0
      %p526 = por %p524, %p525
      %p527 = scmp.ne.s32.totalorder %s515, %s516
      %p528 = scmp.eq.s32.totalorder %s36, 1
      %p529 = por %p527, %p528
      %p531 = scmp.ne.s32.totalorder %s516, %s530
      %p532 = scmp.eq.s32.totalorder %s36, 0
      %p533 = por %p531, %p532
      %s534 = ssub.s32 %s37, %s49
      %p535 = scmp.eq.s32.totalorder %s534, 0
      %s537 = sadd.s32 %s536, 1
      %s538 = scalar_select %p535, %s536, %s537
      %p541 = pneg %p535
      %p542 = scmp.eq.s32.totalorder %s30, 1
      %p543 = por %p541, %p542
      %p544 = scmp.ne.s32.totalorder %s536, %s539
      %p545 = scmp.eq.s32.totalorder %s30, 0
      %p546 = por %p544, %p545
      %p547 = scmp.ne.s32.totalorder %s536, %s539
      %p548 = scmp.eq.s32.totalorder %s35, 1
      %p549 = por %p547, %p548
      %p550 = scmp.ne.s32.totalorder %s539, %s540
      %p551 = scmp.eq.s32.totalorder %s35, 0
      %p552 = por %p550, %p551
      %p553 = scmp.ne.s32.totalorder %s539, %s540
      %p554 = scmp.eq.s32.totalorder %s36, 1
      %p555 = por %p553, %p554
      %p557 = scmp.ne.s32.totalorder %s540, %s556
      %p558 = scmp.eq.s32.totalorder %s36, 0
      %p559 = por %p557, %p558
      %p560 = scmp.le.s32.totalorder 1, %s30
      %p561 = scmp.lt.s32.totalorder %s30, 3
      %p562 = pnand %p560, %p561
      %p563 = pneg %p562
      // Predicated region
      $region9: #{tpu_custom_call.1} parent=5 // pred_check
        _
      $region10: #{tpu_custom_call.1} parent=5 // pred_check_branch
        %565 = sbr.rel (%p562) target = $region12
      $region11: #{tpu_custom_call.1} parent=5 // pred_region
        %s566 = ssub.s32 %s30, 1
        // Predicated region
        $region13: #{tpu_custom_call.1} parent=11 // pred_check
          %p567 = pneg %p68
        $region14: #{tpu_custom_call.1} parent=11 // pred_check_branch
          %569 = sbr.rel (%p567) target = $region16
        $region15: #{tpu_custom_call.1} parent=11 // pred_region
          %s570 = smul.u32 2, %s39
          %s572 = ssub.s32 256, 256
          %573 = vsyncadd [#allocation3], %s572
          %s574 = smul.addr %s570, 128
          %s575 = scalar_lea.hbm %s0, %s574
          %s576 = sshll.u32 [#allocation2], 4
          %s577 = int_to_ptr.vmem [resolvable:$true] %s576
          %582 = dma.hbm_to_vmem [thread:$0]  %s575, 256, %s577, [#allocation3], 128, 128, 8
        $region16: #{tpu_custom_call.1} parent=11 // pred_fallthru
          _
        // Predicated region
        $region17: #{tpu_custom_call.1} parent=11 // pred_check
          %p583 = pneg %p505
        $region18: #{tpu_custom_call.1} parent=11 // pred_check_branch
          %585 = sbr.rel (%p583) target = $region20
        $region19: #{tpu_custom_call.1} parent=11 // pred_region
          _
        $region20: #{tpu_custom_call.1} parent=11 // pred_fallthru
          _
        // Predicated region
        $region21: #{tpu_custom_call.1} parent=11 // pred_check
          %p586 = pneg %p526
        $region22: #{tpu_custom_call.1} parent=11 // pred_check_branch
          %588 = sbr.rel (%p586) target = $region24
        $region23: #{tpu_custom_call.1} parent=11 // pred_region
          _
        $region24: #{tpu_custom_call.1} parent=11 // pred_fallthru
          _
      $region12: #{tpu_custom_call.1} parent=5 // pred_fallthru
        _
      %p589 = scmp.lt.s32.totalorder %s30, 2
      // Predicated region
      $region25: #{tpu_custom_call.1} parent=5 // pred_check
        %p590 = pneg %p589
      $region26: #{tpu_custom_call.1} parent=5 // pred_check_branch
        %592 = sbr.rel (%p590) target = $region28
      $region27: #{tpu_custom_call.1} parent=5 // pred_region
        // Predicated region
        $region29: #{tpu_custom_call.1} parent=27 // pred_check
          %p593 = pneg %p88
        $region30: #{tpu_custom_call.1} parent=27 // pred_check_branch
          %595 = sbr.rel (%p593) target = $region32
        $region31: #{tpu_custom_call.1} parent=27 // pred_region
          %p596 = scmp.lt.s32.totalorder %s38, 1
          %s597 = scalar_select %p596, %s38, 1
          %s598 = scalar_lea.vmem %s1, %s597
        $region32: #{tpu_custom_call.1} parent=27 // pred_fallthru
          _
        // Predicated region
        $region33: #{tpu_custom_call.1} parent=27 // pred_check
          %p599 = pneg %p114
        $region34: #{tpu_custom_call.1} parent=27 // pred_check_branch
          %601 = sbr.rel (%p599) target = $region36
        $region35: #{tpu_custom_call.1} parent=27 // pred_region
          %p602 = scmp.lt.s32.totalorder %s38, 1
          %s603 = scalar_select %p602, %s38, 1
          %s604 = scalar_lea.vmem %s2, %s603
        $region36: #{tpu_custom_call.1} parent=27 // pred_fallthru
          _
        // Predicated region
        $region37: #{tpu_custom_call.1} parent=27 // pred_check
          %p605 = pneg %p140
        $region38: #{tpu_custom_call.1} parent=27 // pred_check_branch
          %607 = sbr.rel (%p605) target = $region40
        $region39: #{tpu_custom_call.1} parent=27 // pred_region
          %p608 = scmp.lt.s32.totalorder %s38, 1
          %s609 = scalar_select %p608, %s38, 1
          %s610 = smul.addr %s609, 4
          %s611 = smul.addr %s610, 4
          %s612 = scalar_lea.vmem %s3, %s611
        $region40: #{tpu_custom_call.1} parent=27 // pred_fallthru
          _
        // Predicated region
        $region41: #{tpu_custom_call.1} parent=27 // pred_check
          %p613 = pneg %p166
        $region42: #{tpu_custom_call.1} parent=27 // pred_check_branch
          %615 = sbr.rel (%p613) target = $region44
        $region43: #{tpu_custom_call.1} parent=27 // pred_region
          %p616 = scmp.lt.s32.totalorder %s38, 1
          %s617 = scalar_select %p616, %s38, 1
          %s618 = scalar_lea.vmem %s4, %s617
        $region44: #{tpu_custom_call.1} parent=27 // pred_fallthru
          _
        // Predicated region
        $region45: #{tpu_custom_call.1} parent=27 // pred_check
          %p619 = pneg %p192
        $region46: #{tpu_custom_call.1} parent=27 // pred_check_branch
          %621 = sbr.rel (%p619) target = $region48
        $region47: #{tpu_custom_call.1} parent=27 // pred_region
          %p622 = scmp.lt.s32.totalorder %s38, 1
          %s623 = scalar_select %p622, %s38, 1
          %s624 = smul.addr %s623, 4
          %s625 = smul.addr %s624, 4
          %s626 = scalar_lea.vmem %s5, %s625
        $region48: #{tpu_custom_call.1} parent=27 // pred_fallthru
          _
        // Predicated region
        $region49: #{tpu_custom_call.1} parent=27 // pred_check
          %p627 = pneg %p218
        $region50: #{tpu_custom_call.1} parent=27 // pred_check_branch
          %629 = sbr.rel (%p627) target = $region52
        $region51: #{tpu_custom_call.1} parent=27 // pred_region
          %p630 = scmp.lt.s32.totalorder %s38, 1
          %s631 = scalar_select %p630, %s38, 1
          %s632 = scalar_lea.vmem %s6, %s631
        $region52: #{tpu_custom_call.1} parent=27 // pred_fallthru
          _
        // Predicated region
        $region53: #{tpu_custom_call.1} parent=27 // pred_check
          %p633 = pneg %p244
        $region54: #{tpu_custom_call.1} parent=27 // pred_check_branch
          %635 = sbr.rel (%p633) target = $region56
        $region55: #{tpu_custom_call.1} parent=27 // pred_region
          %p636 = scmp.lt.s32.totalorder %s38, 1
          %s637 = scalar_select %p636, %s38, 1
          %s638 = smul.addr %s637, 4
          %s639 = smul.addr %s638, 4
          %s640 = scalar_lea.vmem %s7, %s639
        $region56: #{tpu_custom_call.1} parent=27 // pred_fallthru
          _
        // Predicated region
        $region57: #{tpu_custom_call.1} parent=27 // pred_check
          %p641 = pneg %p270
        $region58: #{tpu_custom_call.1} parent=27 // pred_check_branch
          %643 = sbr.rel (%p641) target = $region60
        $region59: #{tpu_custom_call.1} parent=27 // pred_region
          %p644 = scmp.lt.s32.totalorder %s38, 1
          %s645 = scalar_select %p644, %s38, 1
          %s646 = scalar_lea.vmem %s8, %s645
        $region60: #{tpu_custom_call.1} parent=27 // pred_fallthru
          _
        // Predicated region
        $region61: #{tpu_custom_call.1} parent=27 // pred_check
          %p647 = pneg %p296
        $region62: #{tpu_custom_call.1} parent=27 // pred_check_branch
          %649 = sbr.rel (%p647) target = $region64
        $region63: #{tpu_custom_call.1} parent=27 // pred_region
          %s650 = sand.u32 %s30, 1
          %s651 = scalar_lea.sflag [#allocation6], %s650
          %s652 = sand.u32 %s286, 1
          %s653 = smul.addr %s652, 16
          %s654 = scalar_lea.vmem [#allocation5], %s653
          %s656 = ssub.s32 256, 256
          %657 = vsyncadd %s651, %s656
          %s658 = smul.addr %s38, 4
          %s659 = smul.addr %s658, 64
          %s660 = scalar_lea.hbm %s9, %s659
          %s661 = sshll.u32 %s654, 4
          %s662 = int_to_ptr.vmem [resolvable:$true] %s661
          %667 = dma.hbm_to_vmem [thread:$0]  %s660, 256, %s662, %s651, 64, 64, 4
        $region64: #{tpu_custom_call.1} parent=27 // pred_fallthru
          _
        // Predicated region
        $region65: #{tpu_custom_call.1} parent=27 // pred_check
          %p668 = pneg %p322
        $region66: #{tpu_custom_call.1} parent=27 // pred_check_branch
          %670 = sbr.rel (%p668) target = $region68
        $region67: #{tpu_custom_call.1} parent=27 // pred_region
          %p671 = scmp.lt.s32.totalorder %s38, 1
          %s672 = scalar_select %p671, %s38, 1
          %s673 = scalar_lea.vmem %s10, %s672
        $region68: #{tpu_custom_call.1} parent=27 // pred_fallthru
          _
        // Predicated region
        $region69: #{tpu_custom_call.1} parent=27 // pred_check
          %p674 = pneg %p348
        $region70: #{tpu_custom_call.1} parent=27 // pred_check_branch
          %676 = sbr.rel (%p674) target = $region72
        $region71: #{tpu_custom_call.1} parent=27 // pred_region
          %p677 = scmp.lt.s32.totalorder %s38, 1
          %s678 = scalar_select %p677, %s38, 1
          %s679 = scalar_lea.vmem %s11, %s678
        $region72: #{tpu_custom_call.1} parent=27 // pred_fallthru
          _
        // Predicated region
        $region73: #{tpu_custom_call.1} parent=27 // pred_check
          %p680 = pneg %p374
        $region74: #{tpu_custom_call.1} parent=27 // pred_check_branch
          %682 = sbr.rel (%p680) target = $region76
        $region75: #{tpu_custom_call.1} parent=27 // pred_region
          %p683 = scmp.lt.s32.totalorder %s38, 1
          %s684 = scalar_select %p683, %s38, 1
          %s685 = scalar_lea.vmem %s12, %s684
        $region76: #{tpu_custom_call.1} parent=27 // pred_fallthru
          _
        // Predicated region
        $region77: #{tpu_custom_call.1} parent=27 // pred_check
          %p686 = pneg %p400
        $region78: #{tpu_custom_call.1} parent=27 // pred_check_branch
          %688 = sbr.rel (%p686) target = $region80
        $region79: #{tpu_custom_call.1} parent=27 // pred_region
          %s689 = sand.u32 %s30, 1
          %s690 = scalar_lea.sflag [#allocation6], %s689
          %s691 = sand.u32 %s390, 1
          %s692 = smul.addr %s691, 16
          %s693 = scalar_lea.vmem [#allocation7], %s692
          %s695 = ssub.s32 256, 256
          %696 = vsyncadd %s690, %s695
          %s697 = smul.addr %s38, 4
          %s698 = smul.addr %s697, 64
          %s699 = scalar_lea.hbm %s13, %s698
          %s700 = sshll.u32 %s693, 4
          %s701 = int_to_ptr.vmem [resolvable:$true] %s700
          %706 = dma.hbm_to_vmem [thread:$0]  %s699, 256, %s701, %s690, 64, 64, 4
        $region80: #{tpu_custom_call.1} parent=27 // pred_fallthru
          _
        // Predicated region
        $region81: #{tpu_custom_call.1} parent=27 // pred_check
          %p707 = pneg %p426
        $region82: #{tpu_custom_call.1} parent=27 // pred_check_branch
          %709 = sbr.rel (%p707) target = $region84
        $region83: #{tpu_custom_call.1} parent=27 // pred_region
          %p710 = scmp.lt.s32.totalorder %s38, 1
          %s711 = scalar_select %p710, %s38, 1
          %s712 = scalar_lea.vmem %s14, %s711
        $region84: #{tpu_custom_call.1} parent=27 // pred_fallthru
          _
        // Predicated region
        $region85: #{tpu_custom_call.1} parent=27 // pred_check
          %p713 = pneg %p452
        $region86: #{tpu_custom_call.1} parent=27 // pred_check_branch
          %715 = sbr.rel (%p713) target = $region88
        $region87: #{tpu_custom_call.1} parent=27 // pred_region
          %p716 = scmp.lt.s32.totalorder %s38, 1
          %s717 = scalar_select %p716, %s38, 1
          %s718 = smul.addr %s717, 8
          %s719 = smul.addr %s718, 4
          %s720 = scalar_lea.vmem %s15, %s719
        $region88: #{tpu_custom_call.1} parent=27 // pred_fallthru
          _
        // Predicated region
        $region89: #{tpu_custom_call.1} parent=27 // pred_check
          %p721 = pneg %p478
        $region90: #{tpu_custom_call.1} parent=27 // pred_check_branch
          %723 = sbr.rel (%p721) target = $region92
        $region91: #{tpu_custom_call.1} parent=27 // pred_region
          %p724 = scmp.lt.s32.totalorder %s38, 1
          %s725 = scalar_select %p724, %s38, 1
          %s726 = scalar_lea.vmem %s16, %s725
        $region92: #{tpu_custom_call.1} parent=27 // pred_fallthru
          _
      $region28: #{tpu_custom_call.1} parent=5 // pred_fallthru
        _
      %p727 = scmp.le.s32.totalorder 1, %s30
      %p728 = scmp.lt.s32.totalorder %s30, 3
      %p729 = pnand %p727, %p728
      %p730 = pneg %p729
      // Predicated region
      $region93: #{tpu_custom_call.1} parent=5 // pred_check
        _
      $region94: #{tpu_custom_call.1} parent=5 // pred_check_branch
        %732 = sbr.rel (%p729) target = $region96
      $region95: #{tpu_custom_call.1} parent=5 // pred_region
        %s733 = ssub.s32 %s30, 1
        // Predicated region
        $region97: #{tpu_custom_call.1} parent=95 // pred_check
          %p734 = pneg %p68
        $region98: #{tpu_custom_call.1} parent=95 // pred_check_branch
          %736 = sbr.rel (%p734) target = $region100
        $region99: #{tpu_custom_call.1} parent=95 // pred_region
          %737 = dma.done [#allocation3], 256
        $region100: #{tpu_custom_call.1} parent=95 // pred_fallthru
          _
        %s738 = sand.u32 %s35, 1
        %s739 = scalar_lea.sflag [#allocation6], %s738
        %s740 = sand.u32 %s289, 1
        %s741 = smul.addr %s740, 16
        %s742 = scalar_lea.vmem [#allocation5], %s741
        // Predicated region
        $region101: #{tpu_custom_call.1} parent=95 // pred_check
          %p743 = pneg %p302
        $region102: #{tpu_custom_call.1} parent=95 // pred_check_branch
          %745 = sbr.rel (%p743) target = $region104
        $region103: #{tpu_custom_call.1} parent=95 // pred_region
          %746 = dma.done %s739, 256
        $region104: #{tpu_custom_call.1} parent=95 // pred_fallthru
          _
        %s747 = sand.u32 %s35, 1
        %s748 = scalar_lea.sflag [#allocation6], %s747
        %s749 = sand.u32 %s393, 1
        %s750 = smul.addr %s749, 16
        %s751 = scalar_lea.vmem [#allocation7], %s750
        // Predicated region
        $region105: #{tpu_custom_call.1} parent=95 // pred_check
          %p752 = pneg %p406
        $region106: #{tpu_custom_call.1} parent=95 // pred_check_branch
          %754 = sbr.rel (%p752) target = $region108
        $region107: #{tpu_custom_call.1} parent=95 // pred_region
          %755 = dma.done %s748, 256
        $region108: #{tpu_custom_call.1} parent=95 // pred_fallthru
          _
        %p756 = pneg %p68
        %p757 = pneg %p65
        %p758 = scmp.lt.s32.totalorder %s40, 1
        %s759 = scalar_select %p758, %s40, 1
        %s760 = scalar_lea.vmem %s1, %s759
        %p761 = pneg %p94
        %p762 = pneg %p91
        %p763 = scmp.lt.s32.totalorder %s40, 1
        %s764 = scalar_select %p763, %s40, 1
        %s765 = scalar_lea.vmem %s2, %s764
        %p766 = pneg %p120
        %p767 = pneg %p117
        %p768 = scmp.lt.s32.totalorder %s40, 1
        %s769 = scalar_select %p768, %s40, 1
        %s770 = smul.addr %s769, 4
        %s771 = smul.addr %s770, 4
        %s772 = scalar_lea.vmem %s3, %s771
        %p773 = pneg %p146
        %p774 = pneg %p143
        %p775 = scmp.lt.s32.totalorder %s40, 1
        %s776 = scalar_select %p775, %s40, 1
        %s777 = scalar_lea.vmem %s4, %s776
        %p778 = pneg %p172
        %p779 = pneg %p169
        %p780 = scmp.lt.s32.totalorder %s40, 1
        %s781 = scalar_select %p780, %s40, 1
        %s782 = smul.addr %s781, 4
        %s783 = smul.addr %s782, 4
        %s784 = scalar_lea.vmem %s5, %s783
        %p785 = pneg %p198
        %p786 = pneg %p195
        %p787 = scmp.lt.s32.totalorder %s40, 1
        %s788 = scalar_select %p787, %s40, 1
        %s789 = scalar_lea.vmem %s6, %s788
        %p790 = pneg %p224
        %p791 = pneg %p221
        %p792 = scmp.lt.s32.totalorder %s40, 1
        %s793 = scalar_select %p792, %s40, 1
        %s794 = smul.addr %s793, 4
        %s795 = smul.addr %s794, 4
        %s796 = scalar_lea.vmem %s7, %s795
        %p797 = pneg %p250
        %p798 = pneg %p247
        %p799 = scmp.lt.s32.totalorder %s40, 1
        %s800 = scalar_select %p799, %s40, 1
        %s801 = scalar_lea.vmem %s8, %s800
        %p802 = pneg %p276
        %p803 = pneg %p273
        %s804 = sand.u32 %s35, 1
        %s805 = scalar_lea.sflag [#allocation6], %s804
        %s806 = sand.u32 %s289, 1
        %s807 = smul.addr %s806, 16
        %s808 = scalar_lea.vmem [#allocation5], %s807
        %p809 = pneg %p302
        %p810 = pneg %p299
        %p811 = scmp.lt.s32.totalorder %s40, 1
        %s812 = scalar_select %p811, %s40, 1
        %s813 = scalar_lea.vmem %s10, %s812
        %p814 = pneg %p328
        %p815 = pneg %p325
        %p816 = scmp.lt.s32.totalorder %s40, 1
        %s817 = scalar_select %p816, %s40, 1
        %s818 = scalar_lea.vmem %s11, %s817
        %p819 = pneg %p354
        %p820 = pneg %p351
        %p821 = scmp.lt.s32.totalorder %s40, 1
        %s822 = scalar_select %p821, %s40, 1
        %s823 = scalar_lea.vmem %s12, %s822
        %p824 = pneg %p380
        %p825 = pneg %p377
        %s826 = sand.u32 %s35, 1
        %s827 = scalar_lea.sflag [#allocation6], %s826
        %s828 = sand.u32 %s393, 1
        %s829 = smul.addr %s828, 16
        %s830 = scalar_lea.vmem [#allocation7], %s829
        %p831 = pneg %p406
        %p832 = pneg %p403
        %p833 = scmp.lt.s32.totalorder %s40, 1
        %s834 = scalar_select %p833, %s40, 1
        %s835 = scalar_lea.vmem %s14, %s834
        %p836 = pneg %p432
        %p837 = pneg %p429
        %p838 = scmp.lt.s32.totalorder %s40, 1
        %s839 = scalar_select %p838, %s40, 1
        %s840 = smul.addr %s839, 8
        %s841 = smul.addr %s840, 4
        %s842 = scalar_lea.vmem %s15, %s841
        %p843 = pneg %p458
        %p844 = pneg %p455
        %p845 = scmp.lt.s32.totalorder %s40, 1
        %s846 = scalar_select %p845, %s40, 1
        %s847 = scalar_lea.vmem %s16, %s846
        %p848 = pneg %p484
        %p849 = pneg %p481
        %p850 = pneg %p505
        %p851 = pneg %p502
        %p852 = pneg %p526
        %p853 = pneg %p523
        %p854 = pneg %p552
        %p855 = pneg %p549
        %s856 = smul.u32 2, %s39
        %p857 = scmp.lt.s32.totalorder %s40, 1
        %s858 = scalar_select %p857, %s40, 1
        %s859 = scalar_lea.vmem %s1, %s858
        %p860 = scmp.lt.s32.totalorder %s40, 1
        %s861 = scalar_select %p860, %s40, 1
        %s862 = scalar_lea.vmem %s2, %s861
        %p863 = scmp.lt.s32.totalorder %s40, 1
        %s864 = scalar_select %p863, %s40, 1
        %s865 = smul.addr %s864, 4
        %s866 = smul.addr %s865, 4
        %s867 = scalar_lea.vmem %s3, %s866
        %p868 = scmp.lt.s32.totalorder %s40, 1
        %s869 = scalar_select %p868, %s40, 1
        %s870 = scalar_lea.vmem %s4, %s869
        %p871 = scmp.lt.s32.totalorder %s40, 1
        %s872 = scalar_select %p871, %s40, 1
        %s873 = smul.addr %s872, 4
        %s874 = smul.addr %s873, 4
        %s875 = scalar_lea.vmem %s5, %s874
        %p876 = scmp.lt.s32.totalorder %s40, 1
        %s877 = scalar_select %p876, %s40, 1
        %s878 = scalar_lea.vmem %s6, %s877
        %p879 = scmp.lt.s32.totalorder %s40, 1
        %s880 = scalar_select %p879, %s40, 1
        %s881 = smul.addr %s880, 4
        %s882 = smul.addr %s881, 4
        %s883 = scalar_lea.vmem %s7, %s882
        %p884 = scmp.lt.s32.totalorder %s40, 1
        %s885 = scalar_select %p884, %s40, 1
        %s886 = scalar_lea.vmem %s8, %s885
        %p887 = scmp.lt.s32.totalorder %s40, 1
        %s888 = scalar_select %p887, %s40, 1
        %s889 = scalar_lea.vmem %s10, %s888
        %p890 = scmp.lt.s32.totalorder %s40, 1
        %s891 = scalar_select %p890, %s40, 1
        %s892 = scalar_lea.vmem %s11, %s891
        %p893 = scmp.lt.s32.totalorder %s40, 1
        %s894 = scalar_select %p893, %s40, 1
        %s895 = scalar_lea.vmem %s12, %s894
        %p896 = scmp.lt.s32.totalorder %s40, 1
        %s897 = scalar_select %p896, %s40, 1
        %s898 = scalar_lea.vmem %s14, %s897
        %p899 = scmp.lt.s32.totalorder %s40, 1
        %s900 = scalar_select %p899, %s40, 1
        %s901 = smul.addr %s900, 8
        %s902 = smul.addr %s901, 4
        %s903 = scalar_lea.vmem %s15, %s902
        %p904 = scmp.lt.s32.totalorder %s40, 1
        %s905 = scalar_select %p904, %s40, 1
        %s906 = scalar_lea.vmem %s16, %s905
        %s907 = smul.u32 2, %s39
        %p909 = scmp.eq.s32.totalorder %s40, 0
        // Predicated region
        $region109: #{tpu_custom_call.1} parent=95 // pred_check
          %p910 = pneg %p909
        $region110: #{tpu_custom_call.1} parent=95 // pred_check_branch
          %912 = sbr.rel (%p910) target = $region112
        $region111: #{tpu_custom_call.1} parent=95 // pred_region
          %v913 = vld [vmem:[#allocation2] sm:$0xff]
          %v914 = vld [vmem:[#allocation2 + $0x8] sm:$0xff]
          %vm915 = vcmask 261120
          %916 = vst.msk [vmem:[#allocation8] sm:$0xff] %vm915, %v913
          %917 = vst.msk [vmem:[#allocation8 + $0x8] sm:$0xff] %vm915, %v914
        $region112: #{tpu_custom_call.1} parent=95 // pred_fallthru
          _
        %v918 = vld [vmem:[#allocation8] sm:$0xff]
        %v919 = vld [vmem:[#allocation8 + $0x8] sm:$0xff]
        %v920 = vld [vmem:[%s859] sm:$0x1]
        %v921 = vld [vmem:[%s862] sm:$0x1]
        %vm922 = vcmask 261120
        %v923 = vsel %vm922, %v918, 0.0
        %924 = vadd.xlane.f32.xlu0 %v923
        %v925 = vpop.xlane.xlu0 %924
        %v926 = vsel %vm922, %v919, 0.0
        %927 = vadd.xlane.f32.xlu0 %v926
        %v928 = vpop.xlane.xlu0 %927
        %v929 = vrcp.pop 32.0
        %v930 = vmul.f32 %v925, %v929
        %v931 = vmul.f32 %v928, %v929
        %v932 = vsub.f32 %v918, %v930
        %v933 = vsub.f32 %v919, %v931
        %v934 = vmul.f32 %v932, %v932
        %v935 = vmul.f32 %v933, %v933
        %v936 = vsel %vm922, %v934, 0.0
        %937 = vadd.xlane.f32.xlu0 %v936
        %v938 = vpop.xlane.xlu0 %937
        %v939 = vsel %vm922, %v935, 0.0
        %940 = vadd.xlane.f32.xlu0 %v939
        %v941 = vpop.xlane.xlu0 %940
        %v942 = vmul.f32 %v938, %v929
        %v943 = vmul.f32 %v941, %v929
        %v944 = vadd.f32 %v942, 1e-05
        %v945 = vadd.f32 %v943, 1e-05
        %v946 = vrsqrt.pop %v944
        %v947 = vrsqrt.pop %v945
        %v948 = vmul.f32 %v932, %v946
        %v949 = vmul.f32 %v933, %v947
        %v951 = vlaneseq
        %v952 = vshrl.u32 %v951, 7
        %v953 = vsub.s32 0, %v952
        %v954 = vrot.slane %v920, %v953
        %v956 = vmul.f32 %v948, %v954
        %v957 = vmul.f32 %v949, %v954
        %v959 = vlaneseq
        %v960 = vshrl.u32 %v959, 7
        %v961 = vsub.s32 0, %v960
        %v962 = vrot.slane %v921, %v961
        %v964 = vadd.f32 %v956, %v962
        %v965 = vadd.f32 %v957, %v962
        %v966 = vpack.c.bf16 %v965, %v964
        %v967 = vld [vmem:[%s867] sm:$0xf]
        %v968 = vld [vmem:[%s867 + $0x4] sm:$0xf]
        %v969 = vld [vmem:[%s867 + $0x8] sm:$0xf]
        %v970 = vld [vmem:[%s867 + $0xc] sm:$0xf]
        %v971 = vld [vmem:[%s870] sm:$0x1]
        %v973 = vlaneseq
        %v974 = vshrl.u32 %v973, 7
        %v975 = vsub.s32 0, %v974
        %v976 = vrot.slane %v971, %v975
        %v982 = vunpack.c.l.b16 %v967
        %v983 = vunpack.c.l.b16 %v968
        %v984 = vunpack.c.l.b16 %v969
        %v985 = vunpack.c.l.b16 %v970
        %v986 = vpack.c.b16 %v983, %v982
        %v987 = vpack.c.b16 %v985, %v984
        %v991 = vsel %vm922, %v966, 0
        %993 = vmatprep.subr.bf16.mxu0 0
        %994 = vmatpush1.bf16.msra.mxu0 %v986
        %995 = vmatprep.subr.bf16.mxu0 0
        %996 = vmatpush1.bf16.msra.mxu0 %v987
        %997 = vmatprep.subr.bf16.mxu0 0
        %998 = vmatpush1.bf16.msra.mxu0 0
        %999 = vmatprep.subr.bf16.mxu0 0
        %1000 = vmatpush1.bf16.msra.mxu0 0
        %1001 = vmatprep.subr.bf16.mxu0 0
        %1002 = vmatpush1.bf16.msra.mxu0 0
        %1003 = vmatprep.subr.bf16.mxu0 0
        %1004 = vmatpush1.bf16.msra.mxu0 0
        %1005 = vmatprep.subr.bf16.mxu0 0
        %1006 = vmatpush1.bf16.msra.mxu0 0
        %1007 = vmatprep.subr.bf16.mxu0 0
        %1008 = vmatpush1.bf16.msra.mxu0 0
        %1009 = vmatprep.subr.bf16.mxu0 0
        %1010 = vmatpush1.bf16.msra.mxu0 0
        %1011 = vmatprep.subr.bf16.mxu0 0
        %1012 = vmatpush1.bf16.msra.mxu0 0
        %1013 = vmatprep.subr.bf16.mxu0 0
        %1014 = vmatpush1.bf16.msra.mxu0 0
        %1015 = vmatprep.subr.bf16.mxu0 0
        %1016 = vmatpush1.bf16.msra.mxu0 0
        %1017 = vmatprep.subr.bf16.mxu0 0
        %1018 = vmatpush1.bf16.msra.mxu0 0
        %1019 = vmatprep.subr.bf16.mxu0 0
        %1020 = vmatpush1.bf16.msra.mxu0 0
        %1021 = vmatprep.subr.bf16.mxu0 0
        %1022 = vmatpush1.bf16.msra.mxu0 0
        %1023 = vmatprep.subr.bf16.mxu0 0
        %1024 = vmatpush1.bf16.msra.mxu0 0
        %1025 = vmatprep.mubr.bf16.mxu0 0
        %1026 = vmatmul.mubr.bf16.gmra.mrb[0].mxu0 %v991
        %v1027 = vpop.f32.mrb[0].mxu0
        %v1028 = vadd.f32 %v976, %v1027
        %v1029 = vpop.f32.mrb[0].mxu0
        %v1030 = vpop.f32.mrb[0].mxu0
        %v1031 = vadd.f32 %v976, %v1030
        %v1032 = vpop.f32.mrb[0].mxu0
        %1033 = vdwg.mxu0
        %v1034 = vld [vmem:[%s875] sm:$0xf]
        %v1035 = vld [vmem:[%s875 + $0x4] sm:$0xf]
        %v1036 = vld [vmem:[%s875 + $0x8] sm:$0xf]
        %v1037 = vld [vmem:[%s875 + $0xc] sm:$0xf]
        %v1038 = vld [vmem:[%s878] sm:$0x1]
        %v1040 = vlaneseq
        %v1041 = vshrl.u32 %v1040, 7
        %v1042 = vsub.s32 0, %v1041
        %v1043 = vrot.slane %v1038, %v1042
        %v1049 = vunpack.c.l.b16 %v1034
        %v1050 = vunpack.c.l.b16 %v1035
        %v1051 = vunpack.c.l.b16 %v1036
        %v1052 = vunpack.c.l.b16 %v1037
        %v1053 = vpack.c.b16 %v1050, %v1049
        %v1054 = vpack.c.b16 %v1052, %v1051
        %1057 = vmatprep.subr.bf16.mxu0 0
        %1058 = vmatpush1.bf16.msra.mxu0 %v1053
        %1059 = vmatprep.subr.bf16.mxu0 0
        %1060 = vmatpush1.bf16.msra.mxu0 %v1054
        %1061 = vmatprep.subr.bf16.mxu0 0
        %1062 = vmatpush1.bf16.msra.mxu0 0
        %1063 = vmatprep.subr.bf16.mxu0 0
        %1064 = vmatpush1.bf16.msra.mxu0 0
        %1065 = vmatprep.subr.bf16.mxu0 0
        %1066 = vmatpush1.bf16.msra.mxu0 0
        %1067 = vmatprep.subr.bf16.mxu0 0
        %1068 = vmatpush1.bf16.msra.mxu0 0
        %1069 = vmatprep.subr.bf16.mxu0 0
        %1070 = vmatpush1.bf16.msra.mxu0 0
        %1071 = vmatprep.subr.bf16.mxu0 0
        %1072 = vmatpush1.bf16.msra.mxu0 0
        %1073 = vmatprep.subr.bf16.mxu0 0
        %1074 = vmatpush1.bf16.msra.mxu0 0
        %1075 = vmatprep.subr.bf16.mxu0 0
        %1076 = vmatpush1.bf16.msra.mxu0 0
        %1077 = vmatprep.subr.bf16.mxu0 0
        %1078 = vmatpush1.bf16.msra.mxu0 0
        %1079 = vmatprep.subr.bf16.mxu0 0
        %1080 = vmatpush1.bf16.msra.mxu0 0
        %1081 = vmatprep.subr.bf16.mxu0 0
        %1082 = vmatpush1.bf16.msra.mxu0 0
        %1083 = vmatprep.subr.bf16.mxu0 0
        %1084 = vmatpush1.bf16.msra.mxu0 0
        %1085 = vmatprep.subr.bf16.mxu0 0
        %1086 = vmatpush1.bf16.msra.mxu0 0
        %1087 = vmatprep.subr.bf16.mxu0 0
        %1088 = vmatpush1.bf16.msra.mxu0 0
        %1089 = vmatprep.mubr.bf16.mxu0 0
        %1090 = vmatmul.mubr.bf16.gmra.mrb[0].mxu0 %v991
        %v1091 = vpop.f32.mrb[0].mxu0
        %v1092 = vadd.f32 %v1043, %v1091
        %v1093 = vpop.f32.mrb[0].mxu0
        %v1094 = vpop.f32.mrb[0].mxu0
        %v1095 = vadd.f32 %v1043, %v1094
        %v1096 = vpop.f32.mrb[0].mxu0
        %1097 = vdwg.mxu0
        %v1098 = vld [vmem:[%s883] sm:$0xf]
        %v1099 = vld [vmem:[%s883 + $0x4] sm:$0xf]
        %v1100 = vld [vmem:[%s883 + $0x8] sm:$0xf]
        %v1101 = vld [vmem:[%s883 + $0xc] sm:$0xf]
        %v1102 = vld [vmem:[%s886] sm:$0x1]
        %v1104 = vlaneseq
        %v1105 = vshrl.u32 %v1104, 7
        %v1106 = vsub.s32 0, %v1105
        %v1107 = vrot.slane %v1102, %v1106
        %v1113 = vunpack.c.l.b16 %v1098
        %v1114 = vunpack.c.l.b16 %v1099
        %v1115 = vunpack.c.l.b16 %v1100
        %v1116 = vunpack.c.l.b16 %v1101
        %v1117 = vpack.c.b16 %v1114, %v1113
        %v1118 = vpack.c.b16 %v1116, %v1115
        %1121 = vmatprep.subr.bf16.mxu0 0
        %1122 = vmatpush1.bf16.msra.mxu0 %v1117
        %1123 = vmatprep.subr.bf16.mxu0 0
        %1124 = vmatpush1.bf16.msra.mxu0 %v1118
        %1125 = vmatprep.subr.bf16.mxu0 0
        %1126 = vmatpush1.bf16.msra.mxu0 0
        %1127 = vmatprep.subr.bf16.mxu0 0
        %1128 = vmatpush1.bf16.msra.mxu0 0
        %1129 = vmatprep.subr.bf16.mxu0 0
        %1130 = vmatpush1.bf16.msra.mxu0 0
        %1131 = vmatprep.subr.bf16.mxu0 0
        %1132 = vmatpush1.bf16.msra.mxu0 0
        %1133 = vmatprep.subr.bf16.mxu0 0
        %1134 = vmatpush1.bf16.msra.mxu0 0
        %1135 = vmatprep.subr.bf16.mxu0 0
        %1136 = vmatpush1.bf16.msra.mxu0 0
        %1137 = vmatprep.subr.bf16.mxu0 0
        %1138 = vmatpush1.bf16.msra.mxu0 0
        %1139 = vmatprep.subr.bf16.mxu0 0
        %1140 = vmatpush1.bf16.msra.mxu0 0
        %1141 = vmatprep.subr.bf16.mxu0 0
        %1142 = vmatpush1.bf16.msra.mxu0 0
        %1143 = vmatprep.subr.bf16.mxu0 0
        %1144 = vmatpush1.bf16.msra.mxu0 0
        %1145 = vmatprep.subr.bf16.mxu0 0
        %1146 = vmatpush1.bf16.msra.mxu0 0
        %1147 = vmatprep.subr.bf16.mxu0 0
        %1148 = vmatpush1.bf16.msra.mxu0 0
        %1149 = vmatprep.subr.bf16.mxu0 0
        %1150 = vmatpush1.bf16.msra.mxu0 0
        %1151 = vmatprep.subr.bf16.mxu0 0
        %1152 = vmatpush1.bf16.msra.mxu0 0
        %1153 = vmatprep.mubr.bf16.mxu0 0
        %1154 = vmatmul.mubr.bf16.gmra.mrb[0].mxu0 %v991
        %v1155 = vpop.f32.mrb[0].mxu0
        %v1156 = vadd.f32 %v1107, %v1155
        %v1157 = vpop.f32.mrb[0].mxu0
        %v1158 = vpop.f32.mrb[0].mxu0
        %v1159 = vadd.f32 %v1107, %v1158
        %v1160 = vpop.f32.mrb[0].mxu0
        %1161 = vdwg.mxu0
        %v1162 = vpack.c.bf16 %v1031, %v1028
        %v1164 = vunpack.c.l.b16 %v1162
        %v1165 = vunpack.c.h.b16 %v1162
        %v1166 = vpack.c.b16 %v1164, %v1164
        %v1167 = vpack.c.b16 %v1165, %v1165
        %v1168 = vpack.c.bf16 %v1095, %v1092
        %v1170 = vunpack.c.l.b16 %v1168
        %v1171 = vunpack.c.h.b16 %v1168
        %v1172 = vpack.c.b16 %v1170, %v1170
        %v1173 = vpack.c.b16 %v1171, %v1171
        %v1174 = vpack.c.bf16 %v1159, %v1156
        %v1176 = vunpack.c.l.b16 %v1174
        %v1177 = vunpack.c.h.b16 %v1174
        %v1178 = vpack.c.b16 %v1176, %v1176
        %v1179 = vpack.c.b16 %v1177, %v1177
        %vm1180 = vcmask 64512
        %v1182 = vsel %vm1180, %v1166, 0
        %v1185 = vsel %vm1180, %v1172, 0
        %1187 = vmatprep.subr.bf16.mxu0 0
        %1188 = vmatpush1.bf16.xpose.msra.mxu0 %v1185
        %1189 = vmatprep.subr.bf16.mxu0 0
        %1190 = vmatpush1.bf16.xpose.msra.mxu0 0
        %1191 = vmatprep.subr.bf16.mxu0 0
        %1192 = vmatpush1.bf16.xpose.msra.mxu0 0
        %1193 = vmatprep.subr.bf16.mxu0 0
        %1194 = vmatpush1.bf16.xpose.msra.mxu0 0
        %1195 = vmatprep.subr.bf16.mxu0 0
        %1196 = vmatpush1.bf16.xpose.msra.mxu0 0
        %1197 = vmatprep.subr.bf16.mxu0 0
        %1198 = vmatpush1.bf16.xpose.msra.mxu0 0
        %1199 = vmatprep.subr.bf16.mxu0 0
        %1200 = vmatpush1.bf16.xpose.msra.mxu0 0
        %1201 = vmatprep.subr.bf16.mxu0 0
        %1202 = vmatpush1.bf16.xpose.msra.mxu0 0
        %1203 = vmatprep.subr.bf16.mxu0 0
        %1204 = vmatpush1.bf16.xpose.msra.mxu0 0
        %1205 = vmatprep.subr.bf16.mxu0 0
        %1206 = vmatpush1.bf16.xpose.msra.mxu0 0
        %1207 = vmatprep.subr.bf16.mxu0 0
        %1208 = vmatpush1.bf16.xpose.msra.mxu0 0
        %1209 = vmatprep.subr.bf16.mxu0 0
        %1210 = vmatpush1.bf16.xpose.msra.mxu0 0
        %1211 = vmatprep.subr.bf16.mxu0 0
        %1212 = vmatpush1.bf16.xpose.msra.mxu0 0
        %1213 = vmatprep.subr.bf16.mxu0 0
        %1214 = vmatpush1.bf16.xpose.msra.mxu0 0
        %1215 = vmatprep.subr.bf16.mxu0 0
        %1216 = vmatpush1.bf16.xpose.msra.mxu0 0
        %1217 = vmatprep.subr.bf16.mxu0 0
        %1218 = vmatpush1.bf16.xpose.msra.mxu0 0
        %1219 = vmatprep.mubr.bf16.mxu0 0
        %1220 = vmatmul.mubr.bf16.gmra.mrb[0].mxu0 %v1182
        %v1221 = vpop.f32.mrb[0].mxu0
        %v1222 = vadd.f32 0.0, %v1221
        %v1223 = vpop.f32.mrb[0].mxu0
        %v1224 = vpop.f32.mrb[0].mxu0
        %v1225 = vpop.f32.mrb[0].mxu0
        %1226 = vdwg.mxu0
        %v1228 = vsel %vm1180, %v1167, 0
        %v1231 = vsel %vm1180, %v1173, 0
        %1233 = vmatprep.subr.bf16.mxu0 0
        %1234 = vmatpush1.bf16.xpose.msra.mxu0 %v1231
        %1235 = vmatprep.subr.bf16.mxu0 0
        %1236 = vmatpush1.bf16.xpose.msra.mxu0 0
        %1237 = vmatprep.subr.bf16.mxu0 0
        %1238 = vmatpush1.bf16.xpose.msra.mxu0 0
        %1239 = vmatprep.subr.bf16.mxu0 0
        %1240 = vmatpush1.bf16.xpose.msra.mxu0 0
        %1241 = vmatprep.subr.bf16.mxu0 0
        %1242 = vmatpush1.bf16.xpose.msra.mxu0 0
        %1243 = vmatprep.subr.bf16.mxu0 0
        %1244 = vmatpush1.bf16.xpose.msra.mxu0 0
        %1245 = vmatprep.subr.bf16.mxu0 0
        %1246 = vmatpush1.bf16.xpose.msra.mxu0 0
        %1247 = vmatprep.subr.bf16.mxu0 0
        %1248 = vmatpush1.bf16.xpose.msra.mxu0 0
        %1249 = vmatprep.subr.bf16.mxu0 0
        %1250 = vmatpush1.bf16.xpose.msra.mxu0 0
        %1251 = vmatprep.subr.bf16.mxu0 0
        %1252 = vmatpush1.bf16.xpose.msra.mxu0 0
        %1253 = vmatprep.subr.bf16.mxu0 0
        %1254 = vmatpush1.bf16.xpose.msra.mxu0 0
        %1255 = vmatprep.subr.bf16.mxu0 0
        %1256 = vmatpush1.bf16.xpose.msra.mxu0 0
        %1257 = vmatprep.subr.bf16.mxu0 0
        %1258 = vmatpush1.bf16.xpose.msra.mxu0 0
        %1259 = vmatprep.subr.bf16.mxu0 0
        %1260 = vmatpush1.bf16.xpose.msra.mxu0 0
        %1261 = vmatprep.subr.bf16.mxu0 0
        %1262 = vmatpush1.bf16.xpose.msra.mxu0 0
        %1263 = vmatprep.subr.bf16.mxu0 0
        %1264 = vmatpush1.bf16.xpose.msra.mxu0 0
        %1265 = vmatprep.mubr.bf16.mxu0 0
        %1266 = vmatmul.mubr.bf16.gmra.mrb[0].mxu0 %v1228
        %v1267 = vpop.f32.mrb[0].mxu0
        %v1268 = vadd.f32 0.0, %v1267
        %v1269 = vpop.f32.mrb[0].mxu0
        %v1270 = vpop.f32.mrb[0].mxu0
        %v1271 = vpop.f32.mrb[0].mxu0
        %1272 = vdwg.mxu0
        %v1273 = vsel %vm1180, %v1222, -inf
        %1274 = vmax.xlane.f32.xlu0 %v1273
        %v1275 = vpop.xlane.xlu0 %1274
        %v1276 = vsel %vm1180, %v1268, -inf
        %1277 = vmax.xlane.f32.xlu0 %v1276
        %v1278 = vpop.xlane.xlu0 %1277
        %v1279 = vsub.f32 %v1222, %v1275
        %v1280 = vsub.f32 %v1268, %v1278
        %v1281 = vmul.f32 %v1279, 1.442695
        %v1282 = vpow.pop %v1281
        %v1283 = vmul.f32 %v1280, 1.442695
        %v1284 = vpow.pop %v1283
        %v1285 = vsel %vm1180, %v1282, 0.0
        %1286 = vadd.xlane.f32.xlu0 %v1285
        %v1287 = vpop.xlane.xlu0 %1286
        %v1288 = vsel %vm1180, %v1284, 0.0
        %1289 = vadd.xlane.f32.xlu0 %v1288
        %v1290 = vpop.xlane.xlu0 %1289
        %v1291 = vrcp.pop %v1287
        %v1292 = vrcp.pop %v1290
        %v1293 = vpack.c.bf16 %v1282, %v1282
        %v1294 = vpack.c.bf16 %v1284, %v1284
        %v1296 = vsel %vm1180, %v1293, 0
        %vm1298 = vcmask 1043456
        %v1300 = vsel %vm1298, %v1178, 0
        %1302 = vmatprep.subr.bf16.mxu0 0
        %1303 = vmatpush1.bf16.msra.mxu0 %v1300
        %1304 = vmatprep.subr.bf16.mxu0 0
        %1305 = vmatpush1.bf16.msra.mxu0 0
        %1306 = vmatprep.subr.bf16.mxu0 0
        %1307 = vmatpush1.bf16.msra.mxu0 0
        %1308 = vmatprep.subr.bf16.mxu0 0
        %1309 = vmatpush1.bf16.msra.mxu0 0
        %1310 = vmatprep.subr.bf16.mxu0 0
        %1311 = vmatpush1.bf16.msra.mxu0 0
        %1312 = vmatprep.subr.bf16.mxu0 0
        %1313 = vmatpush1.bf16.msra.mxu0 0
        %1314 = vmatprep.subr.bf16.mxu0 0
        %1315 = vmatpush1.bf16.msra.mxu0 0
        %1316 = vmatprep.subr.bf16.mxu0 0
        %1317 = vmatpush1.bf16.msra.mxu0 0
        %1318 = vmatprep.subr.bf16.mxu0 0
        %1319 = vmatpush1.bf16.msra.mxu0 0
        %1320 = vmatprep.subr.bf16.mxu0 0
        %1321 = vmatpush1.bf16.msra.mxu0 0
        %1322 = vmatprep.subr.bf16.mxu0 0
        %1323 = vmatpush1.bf16.msra.mxu0 0
        %1324 = vmatprep.subr.bf16.mxu0 0
        %1325 = vmatpush1.bf16.msra.mxu0 0
        %1326 = vmatprep.subr.bf16.mxu0 0
        %1327 = vmatpush1.bf16.msra.mxu0 0
        %1328 = vmatprep.subr.bf16.mxu0 0
        %1329 = vmatpush1.bf16.msra.mxu0 0
        %1330 = vmatprep.subr.bf16.mxu0 0
        %1331 = vmatpush1.bf16.msra.mxu0 0
        %1332 = vmatprep.subr.bf16.mxu0 0
        %1333 = vmatpush1.bf16.msra.mxu0 0
        %1334 = vmatprep.mubr.bf16.mxu0 0
        %1335 = vmatmul.mubr.bf16.gmra.mrb[0].mxu0 %v1296
        %v1336 = vpop.f32.mrb[0].mxu0
        %v1337 = vadd.f32 0.0, %v1336
        %v1338 = vpop.f32.mrb[0].mxu0
        %v1339 = vpop.f32.mrb[0].mxu0
        %v1340 = vpop.f32.mrb[0].mxu0
        %1341 = vdwg.mxu0
        %v1343 = vsel %vm1180, %v1294, 0
        %v1346 = vsel %vm1298, %v1179, 0
        %1348 = vmatprep.subr.bf16.mxu0 0
        %1349 = vmatpush1.bf16.msra.mxu0 %v1346
        %1350 = vmatprep.subr.bf16.mxu0 0
        %1351 = vmatpush1.bf16.msra.mxu0 0
        %1352 = vmatprep.subr.bf16.mxu0 0
        %1353 = vmatpush1.bf16.msra.mxu0 0
        %1354 = vmatprep.subr.bf16.mxu0 0
        %1355 = vmatpush1.bf16.msra.mxu0 0
        %1356 = vmatprep.subr.bf16.mxu0 0
        %1357 = vmatpush1.bf16.msra.mxu0 0
        %1358 = vmatprep.subr.bf16.mxu0 0
        %1359 = vmatpush1.bf16.msra.mxu0 0
        %1360 = vmatprep.subr.bf16.mxu0 0
        %1361 = vmatpush1.bf16.msra.mxu0 0
        %1362 = vmatprep.subr.bf16.mxu0 0
        %1363 = vmatpush1.bf16.msra.mxu0 0
        %1364 = vmatprep.subr.bf16.mxu0 0
        %1365 = vmatpush1.bf16.msra.mxu0 0
        %1366 = vmatprep.subr.bf16.mxu0 0
        %1367 = vmatpush1.bf16.msra.mxu0 0
        %1368 = vmatprep.subr.bf16.mxu0 0
        %1369 = vmatpush1.bf16.msra.mxu0 0
        %1370 = vmatprep.subr.bf16.mxu0 0
        %1371 = vmatpush1.bf16.msra.mxu0 0
        %1372 = vmatprep.subr.bf16.mxu0 0
        %1373 = vmatpush1.bf16.msra.mxu0 0
        %1374 = vmatprep.subr.bf16.mxu0 0
        %1375 = vmatpush1.bf16.msra.mxu0 0
        %1376 = vmatprep.subr.bf16.mxu0 0
        %1377 = vmatpush1.bf16.msra.mxu0 0
        %1378 = vmatprep.subr.bf16.mxu0 0
        %1379 = vmatpush1.bf16.msra.mxu0 0
        %1380 = vmatprep.mubr.bf16.mxu0 0
        %1381 = vmatmul.mubr.bf16.gmra.mrb[0].mxu0 %v1343
        %v1382 = vpop.f32.mrb[0].mxu0
        %v1383 = vadd.f32 0.0, %v1382
        %v1384 = vpop.f32.mrb[0].mxu0
        %v1385 = vpop.f32.mrb[0].mxu0
        %v1386 = vpop.f32.mrb[0].mxu0
        %1387 = vdwg.mxu0
        %v1388 = vmul.f32 %v1337, %v1291
        %v1389 = vmul.f32 %v1383, %v1292
        %v1390 = vpack.c.bf16 %v1388, %v1388
        %v1391 = vpack.c.bf16 %v1389, %v1389
        %v1392 = vld [vmem:[%s742] sm:$0xf]
        %1393 = vrot.lane.b32.xlu0 %v1166, 120
        %v1394 = vpop.permute.xlu0 %1393
        %1395 = vrot.lane.b32.xlu0 %v1172, 120
        %v1396 = vpop.permute.xlu0 %1395
        %v1398 = vsel %vm1180, %v1394, 0
        %v1401 = vsel %vm1180, %v1396, 0
        %1403 = vmatprep.subr.bf16.mxu0 0
        %1404 = vmatpush1.bf16.xpose.msra.mxu0 %v1401
        %1405 = vmatprep.subr.bf16.mxu0 0
        %1406 = vmatpush1.bf16.xpose.msra.mxu0 0
        %1407 = vmatprep.subr.bf16.mxu0 0
        %1408 = vmatpush1.bf16.xpose.msra.mxu0 0
        %1409 = vmatprep.subr.bf16.mxu0 0
        %1410 = vmatpush1.bf16.xpose.msra.mxu0 0
        %1411 = vmatprep.subr.bf16.mxu0 0
        %1412 = vmatpush1.bf16.xpose.msra.mxu0 0
        %1413 = vmatprep.subr.bf16.mxu0 0
        %1414 = vmatpush1.bf16.xpose.msra.mxu0 0
        %1415 = vmatprep.subr.bf16.mxu0 0
        %1416 = vmatpush1.bf16.xpose.msra.mxu0 0
        %1417 = vmatprep.subr.bf16.mxu0 0
        %1418 = vmatpush1.bf16.xpose.msra.mxu0 0
        %1419 = vmatprep.subr.bf16.mxu0 0
        %1420 = vmatpush1.bf16.xpose.msra.mxu0 0
        %1421 = vmatprep.subr.bf16.mxu0 0
        %1422 = vmatpush1.bf16.xpose.msra.mxu0 0
        %1423 = vmatprep.subr.bf16.mxu0 0
        %1424 = vmatpush1.bf16.xpose.msra.mxu0 0
        %1425 = vmatprep.subr.bf16.mxu0 0
        %1426 = vmatpush1.bf16.xpose.msra.mxu0 0
        %1427 = vmatprep.subr.bf16.mxu0 0
        %1428 = vmatpush1.bf16.xpose.msra.mxu0 0
        %1429 = vmatprep.subr.bf16.mxu0 0
        %1430 = vmatpush1.bf16.xpose.msra.mxu0 0
        %1431 = vmatprep.subr.bf16.mxu0 0
        %1432 = vmatpush1.bf16.xpose.msra.mxu0 0
        %1433 = vmatprep.subr.bf16.mxu0 0
        %1434 = vmatpush1.bf16.xpose.msra.mxu0 0
        %1435 = vmatprep.mubr.bf16.mxu0 0
        %1436 = vmatmul.mubr.bf16.gmra.mrb[0].mxu0 %v1398
        %v1437 = vpop.f32.mrb[0].mxu0
        %v1438 = vadd.f32 0.0, %v1437
        %v1439 = vpop.f32.mrb[0].mxu0
        %v1440 = vpop.f32.mrb[0].mxu0
        %v1441 = vpop.f32.mrb[0].mxu0
        %1442 = vdwg.mxu0
        %1443 = vrot.lane.b32.xlu0 %v1167, 120
        %v1444 = vpop.permute.xlu0 %1443
        %1445 = vrot.lane.b32.xlu0 %v1173, 120
        %v1446 = vpop.permute.xlu0 %1445
        %v1448 = vsel %vm1180, %v1444, 0
        %v1451 = vsel %vm1180, %v1446, 0
        %1453 = vmatprep.subr.bf16.mxu0 0
        %1454 = vmatpush1.bf16.xpose.msra.mxu0 %v1451
        %1455 = vmatprep.subr.bf16.mxu0 0
        %1456 = vmatpush1.bf16.xpose.msra.mxu0 0
        %1457 = vmatprep.subr.bf16.mxu0 0
        %1458 = vmatpush1.bf16.xpose.msra.mxu0 0
        %1459 = vmatprep.subr.bf16.mxu0 0
        %1460 = vmatpush1.bf16.xpose.msra.mxu0 0
        %1461 = vmatprep.subr.bf16.mxu0 0
        %1462 = vmatpush1.bf16.xpose.msra.mxu0 0
        %1463 = vmatprep.subr.bf16.mxu0 0
        %1464 = vmatpush1.bf16.xpose.msra.mxu0 0
        %1465 = vmatprep.subr.bf16.mxu0 0
        %1466 = vmatpush1.bf16.xpose.msra.mxu0 0
        %1467 = vmatprep.subr.bf16.mxu0 0
        %1468 = vmatpush1.bf16.xpose.msra.mxu0 0
        %1469 = vmatprep.subr.bf16.mxu0 0
        %1470 = vmatpush1.bf16.xpose.msra.mxu0 0
        %1471 = vmatprep.subr.bf16.mxu0 0
        %1472 = vmatpush1.bf16.xpose.msra.mxu0 0
        %1473 = vmatprep.subr.bf16.mxu0 0
        %1474 = vmatpush1.bf16.xpose.msra.mxu0 0
        %1475 = vmatprep.subr.bf16.mxu0 0
        %1476 = vmatpush1.bf16.xpose.msra.mxu0 0
        %1477 = vmatprep.subr.bf16.mxu0 0
        %1478 = vmatpush1.bf16.xpose.msra.mxu0 0
        %1479 = vmatprep.subr.bf16.mxu0 0
        %1480 = vmatpush1.bf16.xpose.msra.mxu0 0
        %1481 = vmatprep.subr.bf16.mxu0 0
        %1482 = vmatpush1.bf16.xpose.msra.mxu0 0
        %1483 = vmatprep.subr.bf16.mxu0 0
        %1484 = vmatpush1.bf16.xpose.msra.mxu0 0
        %1485 = vmatprep.mubr.bf16.mxu0 0
        %1486 = vmatmul.mubr.bf16.gmra.mrb[0].mxu0 %v1448
        %v1487 = vpop.f32.mrb[0].mxu0
        %v1488 = vadd.f32 0.0, %v1487
        %v1489 = vpop.f32.mrb[0].mxu0
        %v1490 = vpop.f32.mrb[0].mxu0
        %v1491 = vpop.f32.mrb[0].mxu0
        %1492 = vdwg.mxu0
        %v1493 = vsel %vm1180, %v1438, -inf
        %1494 = vmax.xlane.f32.xlu0 %v1493
        %v1495 = vpop.xlane.xlu0 %1494
        %v1496 = vsel %vm1180, %v1488, -inf
        %1497 = vmax.xlane.f32.xlu0 %v1496
        %v1498 = vpop.xlane.xlu0 %1497
        %v1499 = vsub.f32 %v1438, %v1495
        %v1500 = vsub.f32 %v1488, %v1498
        %v1501 = vmul.f32 %v1499, 1.442695
        %v1502 = vpow.pop %v1501
        %v1503 = vmul.f32 %v1500, 1.442695
        %v1504 = vpow.pop %v1503
        %v1505 = vsel %vm1180, %v1502, 0.0
        %1506 = vadd.xlane.f32.xlu0 %v1505
        %v1507 = vpop.xlane.xlu0 %1506
        %v1508 = vsel %vm1180, %v1504, 0.0
        %1509 = vadd.xlane.f32.xlu0 %v1508
        %v1510 = vpop.xlane.xlu0 %1509
        %v1511 = vrcp.pop %v1507
        %v1512 = vrcp.pop %v1510
        %v1513 = vpack.c.bf16 %v1502, %v1502
        %v1514 = vpack.c.bf16 %v1504, %v1504
        %1515 = vrot.lane.b32.xlu0 %v1178, 120
        %v1516 = vpop.permute.xlu0 %1515
        %v1518 = vsel %vm1180, %v1513, 0
        %v1521 = vsel %vm1298, %v1516, 0
        %1523 = vmatprep.subr.bf16.mxu0 0
        %1524 = vmatpush1.bf16.msra.mxu0 %v1521
        %1525 = vmatprep.subr.bf16.mxu0 0
        %1526 = vmatpush1.bf16.msra.mxu0 0
        %1527 = vmatprep.subr.bf16.mxu0 0
        %1528 = vmatpush1.bf16.msra.mxu0 0
        %1529 = vmatprep.subr.bf16.mxu0 0
        %1530 = vmatpush1.bf16.msra.mxu0 0
        %1531 = vmatprep.subr.bf16.mxu0 0
        %1532 = vmatpush1.bf16.msra.mxu0 0
        %1533 = vmatprep.subr.bf16.mxu0 0
        %1534 = vmatpush1.bf16.msra.mxu0 0
        %1535 = vmatprep.subr.bf16.mxu0 0
        %1536 = vmatpush1.bf16.msra.mxu0 0
        %1537 = vmatprep.subr.bf16.mxu0 0
        %1538 = vmatpush1.bf16.msra.mxu0 0
        %1539 = vmatprep.subr.bf16.mxu0 0
        %1540 = vmatpush1.bf16.msra.mxu0 0
        %1541 = vmatprep.subr.bf16.mxu0 0
        %1542 = vmatpush1.bf16.msra.mxu0 0
        %1543 = vmatprep.subr.bf16.mxu0 0
        %1544 = vmatpush1.bf16.msra.mxu0 0
        %1545 = vmatprep.subr.bf16.mxu0 0
        %1546 = vmatpush1.bf16.msra.mxu0 0
        %1547 = vmatprep.subr.bf16.mxu0 0
        %1548 = vmatpush1.bf16.msra.mxu0 0
        %1549 = vmatprep.subr.bf16.mxu0 0
        %1550 = vmatpush1.bf16.msra.mxu0 0
        %1551 = vmatprep.subr.bf16.mxu0 0
        %1552 = vmatpush1.bf16.msra.mxu0 0
        %1553 = vmatprep.subr.bf16.mxu0 0
        %1554 = vmatpush1.bf16.msra.mxu0 0
        %1555 = vmatprep.mubr.bf16.mxu0 0
        %1556 = vmatmul.mubr.bf16.gmra.mrb[0].mxu0 %v1518
        %v1557 = vpop.f32.mrb[0].mxu0
        %v1558 = vadd.f32 0.0, %v1557
        %v1559 = vpop.f32.mrb[0].mxu0
        %v1560 = vpop.f32.mrb[0].mxu0
        %v1561 = vpop.f32.mrb[0].mxu0
        %1562 = vdwg.mxu0
        %1563 = vrot.lane.b32.xlu0 %v1179, 120
        %v1564 = vpop.permute.xlu0 %1563
        %v1566 = vsel %vm1180, %v1514, 0
        %v1569 = vsel %vm1298, %v1564, 0
        %1571 = vmatprep.subr.bf16.mxu0 0
        %1572 = vmatpush1.bf16.msra.mxu0 %v1569
        %1573 = vmatprep.subr.bf16.mxu0 0
        %1574 = vmatpush1.bf16.msra.mxu0 0
        %1575 = vmatprep.subr.bf16.mxu0 0
        %1576 = vmatpush1.bf16.msra.mxu0 0
        %1577 = vmatprep.subr.bf16.mxu0 0
        %1578 = vmatpush1.bf16.msra.mxu0 0
        %1579 = vmatprep.subr.bf16.mxu0 0
        %1580 = vmatpush1.bf16.msra.mxu0 0
        %1581 = vmatprep.subr.bf16.mxu0 0
        %1582 = vmatpush1.bf16.msra.mxu0 0
        %1583 = vmatprep.subr.bf16.mxu0 0
        %1584 = vmatpush1.bf16.msra.mxu0 0
        %1585 = vmatprep.subr.bf16.mxu0 0
        %1586 = vmatpush1.bf16.msra.mxu0 0
        %1587 = vmatprep.subr.bf16.mxu0 0
        %1588 = vmatpush1.bf16.msra.mxu0 0
        %1589 = vmatprep.subr.bf16.mxu0 0
        %1590 = vmatpush1.bf16.msra.mxu0 0
        %1591 = vmatprep.subr.bf16.mxu0 0
        %1592 = vmatpush1.bf16.msra.mxu0 0
        %1593 = vmatprep.subr.bf16.mxu0 0
        %1594 = vmatpush1.bf16.msra.mxu0 0
        %1595 = vmatprep.subr.bf16.mxu0 0
        %1596 = vmatpush1.bf16.msra.mxu0 0
        %1597 = vmatprep.subr.bf16.mxu0 0
        %1598 = vmatpush1.bf16.msra.mxu0 0
        %1599 = vmatprep.subr.bf16.mxu0 0
        %1600 = vmatpush1.bf16.msra.mxu0 0
        %1601 = vmatprep.subr.bf16.mxu0 0
        %1602 = vmatpush1.bf16.msra.mxu0 0
        %1603 = vmatprep.mubr.bf16.mxu0 0
        %1604 = vmatmul.mubr.bf16.gmra.mrb[0].mxu0 %v1566
        %v1605 = vpop.f32.mrb[0].mxu0
        %v1606 = vadd.f32 0.0, %v1605
        %v1607 = vpop.f32.mrb[0].mxu0
        %v1608 = vpop.f32.mrb[0].mxu0
        %v1609 = vpop.f32.mrb[0].mxu0
        %1610 = vdwg.mxu0
        %v1611 = vmul.f32 %v1558, %v1511
        %v1612 = vmul.f32 %v1606, %v1512
        %v1613 = vpack.c.bf16 %v1611, %v1611
        %v1614 = vpack.c.bf16 %v1612, %v1612
        %v1615 = vld [vmem:[%s742 + $0x4] sm:$0xf]
        %v1618 = vunpack.c.l.b16 %v1613
        %v1619 = vunpack.c.l.b16 %v1614
        %v1620 = vpack.c.b16 %v1619, %v1618
        %v1622 = vsel %vm1180, %v1620, 0
        %v1625 = vsel %vm1298, %v1615, 0
        %1627 = vmatprep.subr.bf16.mxu0 0
        %1628 = vmatpush1.bf16.msra.mxu0 %v1625
        %1629 = vmatprep.subr.bf16.mxu0 0
        %1630 = vmatpush1.bf16.msra.mxu0 0
        %1631 = vmatprep.subr.bf16.mxu0 0
        %1632 = vmatpush1.bf16.msra.mxu0 0
        %1633 = vmatprep.subr.bf16.mxu0 0
        %1634 = vmatpush1.bf16.msra.mxu0 0
        %1635 = vmatprep.subr.bf16.mxu0 0
        %1636 = vmatpush1.bf16.msra.mxu0 0
        %1637 = vmatprep.subr.bf16.mxu0 0
        %1638 = vmatpush1.bf16.msra.mxu0 0
        %1639 = vmatprep.subr.bf16.mxu0 0
        %1640 = vmatpush1.bf16.msra.mxu0 0
        %1641 = vmatprep.subr.bf16.mxu0 0
        %1642 = vmatpush1.bf16.msra.mxu0 0
        %1643 = vmatprep.subr.bf16.mxu0 0
        %1644 = vmatpush1.bf16.msra.mxu0 0
        %1645 = vmatprep.subr.bf16.mxu0 0
        %1646 = vmatpush1.bf16.msra.mxu0 0
        %1647 = vmatprep.subr.bf16.mxu0 0
        %1648 = vmatpush1.bf16.msra.mxu0 0
        %1649 = vmatprep.subr.bf16.mxu0 0
        %1650 = vmatpush1.bf16.msra.mxu0 0
        %1651 = vmatprep.subr.bf16.mxu0 0
        %1652 = vmatpush1.bf16.msra.mxu0 0
        %1653 = vmatprep.subr.bf16.mxu0 0
        %1654 = vmatpush1.bf16.msra.mxu0 0
        %1655 = vmatprep.subr.bf16.mxu0 0
        %1656 = vmatpush1.bf16.msra.mxu0 0
        %1657 = vmatprep.subr.bf16.mxu0 0
        %1658 = vmatpush1.bf16.msra.mxu0 0
        %1659 = vmatprep.mubr.bf16.mxu0 0
        %1660 = vmatmul.mubr.bf16.gmra.mrb[0].mxu0 %v1622
        %v1661 = vpop.f32.mrb[0].mxu0
        %v1662 = vadd.f32 0.0, %v1661
        %v1663 = vpop.f32.mrb[0].mxu0
        %v1664 = vpop.f32.mrb[0].mxu0
        %v1665 = vadd.f32 0.0, %v1664
        %v1666 = vpop.f32.mrb[0].mxu0
        %1667 = vdwg.mxu0
        %v1670 = vunpack.c.l.b16 %v1390
        %v1671 = vunpack.c.l.b16 %v1391
        %v1672 = vpack.c.b16 %v1671, %v1670
        %v1674 = vsel %vm1180, %v1672, 0
        %v1677 = vsel %vm1298, %v1392, 0
        %1679 = vmatprep.subr.bf16.mxu0 0
        %1680 = vmatpush1.bf16.msra.mxu0 %v1677
        %1681 = vmatprep.subr.bf16.mxu0 0
        %1682 = vmatpush1.bf16.msra.mxu0 0
        %1683 = vmatprep.subr.bf16.mxu0 0
        %1684 = vmatpush1.bf16.msra.mxu0 0
        %1685 = vmatprep.subr.bf16.mxu0 0
        %1686 = vmatpush1.bf16.msra.mxu0 0
        %1687 = vmatprep.subr.bf16.mxu0 0
        %1688 = vmatpush1.bf16.msra.mxu0 0
        %1689 = vmatprep.subr.bf16.mxu0 0
        %1690 = vmatpush1.bf16.msra.mxu0 0
        %1691 = vmatprep.subr.bf16.mxu0 0
        %1692 = vmatpush1.bf16.msra.mxu0 0
        %1693 = vmatprep.subr.bf16.mxu0 0
        %1694 = vmatpush1.bf16.msra.mxu0 0
        %1695 = vmatprep.subr.bf16.mxu0 0
        %1696 = vmatpush1.bf16.msra.mxu0 0
        %1697 = vmatprep.subr.bf16.mxu0 0
        %1698 = vmatpush1.bf16.msra.mxu0 0
        %1699 = vmatprep.subr.bf16.mxu0 0
        %1700 = vmatpush1.bf16.msra.mxu0 0
        %1701 = vmatprep.subr.bf16.mxu0 0
        %1702 = vmatpush1.bf16.msra.mxu0 0
        %1703 = vmatprep.subr.bf16.mxu0 0
        %1704 = vmatpush1.bf16.msra.mxu0 0
        %1705 = vmatprep.subr.bf16.mxu0 0
        %1706 = vmatpush1.bf16.msra.mxu0 0
        %1707 = vmatprep.subr.bf16.mxu0 0
        %1708 = vmatpush1.bf16.msra.mxu0 0
        %1709 = vmatprep.subr.bf16.mxu0 0
        %1710 = vmatpush1.bf16.msra.mxu0 0
        %1711 = vmatprep.mubr.bf16.mxu0 0
        %1712 = vmatmul.mubr.bf16.gmra.mrb[0].mxu0 %v1674
        %v1713 = vpop.f32.mrb[0].mxu0
        %v1714 = vadd.f32 %v1662, %v1713
        %v1715 = vpop.f32.mrb[0].mxu0
        %v1716 = vpop.f32.mrb[0].mxu0
        %v1717 = vadd.f32 %v1665, %v1716
        %v1718 = vpop.f32.mrb[0].mxu0
        %1719 = vdwg.mxu0
        %1720 = vrot.lane.b32.xlu0 %v1166, 112
        %v1721 = vpop.permute.xlu0 %1720
        %1722 = vrot.lane.b32.xlu0 %v1172, 112
        %v1723 = vpop.permute.xlu0 %1722
        %v1725 = vsel %vm1180, %v1721, 0
        %v1728 = vsel %vm1180, %v1723, 0
        %1730 = vmatprep.subr.bf16.mxu0 0
        %1731 = vmatpush1.bf16.xpose.msra.mxu0 %v1728
        %1732 = vmatprep.subr.bf16.mxu0 0
        %1733 = vmatpush1.bf16.xpose.msra.mxu0 0
        %1734 = vmatprep.subr.bf16.mxu0 0
        %1735 = vmatpush1.bf16.xpose.msra.mxu0 0
        %1736 = vmatprep.subr.bf16.mxu0 0
        %1737 = vmatpush1.bf16.xpose.msra.mxu0 0
        %1738 = vmatprep.subr.bf16.mxu0 0
        %1739 = vmatpush1.bf16.xpose.msra.mxu0 0
        %1740 = vmatprep.subr.bf16.mxu0 0
        %1741 = vmatpush1.bf16.xpose.msra.mxu0 0
        %1742 = vmatprep.subr.bf16.mxu0 0
        %1743 = vmatpush1.bf16.xpose.msra.mxu0 0
        %1744 = vmatprep.subr.bf16.mxu0 0
        %1745 = vmatpush1.bf16.xpose.msra.mxu0 0
        %1746 = vmatprep.subr.bf16.mxu0 0
        %1747 = vmatpush1.bf16.xpose.msra.mxu0 0
        %1748 = vmatprep.subr.bf16.mxu0 0
        %1749 = vmatpush1.bf16.xpose.msra.mxu0 0
        %1750 = vmatprep.subr.bf16.mxu0 0
        %1751 = vmatpush1.bf16.xpose.msra.mxu0 0
        %1752 = vmatprep.subr.bf16.mxu0 0
        %1753 = vmatpush1.bf16.xpose.msra.mxu0 0
        %1754 = vmatprep.subr.bf16.mxu0 0
        %1755 = vmatpush1.bf16.xpose.msra.mxu0 0
        %1756 = vmatprep.subr.bf16.mxu0 0
        %1757 = vmatpush1.bf16.xpose.msra.mxu0 0
        %1758 = vmatprep.subr.bf16.mxu0 0
        %1759 = vmatpush1.bf16.xpose.msra.mxu0 0
        %1760 = vmatprep.subr.bf16.mxu0 0
        %1761 = vmatpush1.bf16.xpose.msra.mxu0 0
        %1762 = vmatprep.mubr.bf16.mxu0 0
        %1763 = vmatmul.mubr.bf16.gmra.mrb[0].mxu0 %v1725
        %v1764 = vpop.f32.mrb[0].mxu0
        %v1765 = vadd.f32 0.0, %v1764
        %v1766 = vpop.f32.mrb[0].mxu0
        %v1767 = vpop.f32.mrb[0].mxu0
        %v1768 = vpop.f32.mrb[0].mxu0
        %1769 = vdwg.mxu0
        %1770 = vrot.lane.b32.xlu0 %v1167, 112
        %v1771 = vpop.permute.xlu0 %1770
        %1772 = vrot.lane.b32.xlu0 %v1173, 112
        %v1773 = vpop.permute.xlu0 %1772
        %v1775 = vsel %vm1180, %v1771, 0
        %v1778 = vsel %vm1180, %v1773, 0
        %1780 = vmatprep.subr.bf16.mxu0 0
        %1781 = vmatpush1.bf16.xpose.msra.mxu0 %v1778
        %1782 = vmatprep.subr.bf16.mxu0 0
        %1783 = vmatpush1.bf16.xpose.msra.mxu0 0
        %1784 = vmatprep.subr.bf16.mxu0 0
        %1785 = vmatpush1.bf16.xpose.msra.mxu0 0
        %1786 = vmatprep.subr.bf16.mxu0 0
        %1787 = vmatpush1.bf16.xpose.msra.mxu0 0
        %1788 = vmatprep.subr.bf16.mxu0 0
        %1789 = vmatpush1.bf16.xpose.msra.mxu0 0
        %1790 = vmatprep.subr.bf16.mxu0 0
        %1791 = vmatpush1.bf16.xpose.msra.mxu0 0
        %1792 = vmatprep.subr.bf16.mxu0 0
        %1793 = vmatpush1.bf16.xpose.msra.mxu0 0
        %1794 = vmatprep.subr.bf16.mxu0 0
        %1795 = vmatpush1.bf16.xpose.msra.mxu0 0
        %1796 = vmatprep.subr.bf16.mxu0 0
        %1797 = vmatpush1.bf16.xpose.msra.mxu0 0
        %1798 = vmatprep.subr.bf16.mxu0 0
        %1799 = vmatpush1.bf16.xpose.msra.mxu0 0
        %1800 = vmatprep.subr.bf16.mxu0 0
        %1801 = vmatpush1.bf16.xpose.msra.mxu0 0
        %1802 = vmatprep.subr.bf16.mxu0 0
        %1803 = vmatpush1.bf16.xpose.msra.mxu0 0
        %1804 = vmatprep.subr.bf16.mxu0 0
        %1805 = vmatpush1.bf16.xpose.msra.mxu0 0
        %1806 = vmatprep.subr.bf16.mxu0 0
        %1807 = vmatpush1.bf16.xpose.msra.mxu0 0
        %1808 = vmatprep.subr.bf16.mxu0 0
        %1809 = vmatpush1.bf16.xpose.msra.mxu0 0
        %1810 = vmatprep.subr.bf16.mxu0 0
        %1811 = vmatpush1.bf16.xpose.msra.mxu0 0
        %1812 = vmatprep.mubr.bf16.mxu0 0
        %1813 = vmatmul.mubr.bf16.gmra.mrb[0].mxu0 %v1775
        %v1814 = vpop.f32.mrb[0].mxu0
        %v1815 = vadd.f32 0.0, %v1814
        %v1816 = vpop.f32.mrb[0].mxu0
        %v1817 = vpop.f32.mrb[0].mxu0
        %v1818 = vpop.f32.mrb[0].mxu0
        %1819 = vdwg.mxu0
        %v1820 = vsel %vm1180, %v1765, -inf
        %1821 = vmax.xlane.f32.xlu0 %v1820
        %v1822 = vpop.xlane.xlu0 %1821
        %v1823 = vsel %vm1180, %v1815, -inf
        %1824 = vmax.xlane.f32.xlu0 %v1823
        %v1825 = vpop.xlane.xlu0 %1824
        %v1826 = vsub.f32 %v1765, %v1822
        %v1827 = vsub.f32 %v1815, %v1825
        %v1828 = vmul.f32 %v1826, 1.442695
        %v1829 = vpow.pop %v1828
        %v1830 = vmul.f32 %v1827, 1.442695
        %v1831 = vpow.pop %v1830
        %v1832 = vsel %vm1180, %v1829, 0.0
        %1833 = vadd.xlane.f32.xlu0 %v1832
        %v1834 = vpop.xlane.xlu0 %1833
        %v1835 = vsel %vm1180, %v1831, 0.0
        %1836 = vadd.xlane.f32.xlu0 %v1835
        %v1837 = vpop.xlane.xlu0 %1836
        %v1838 = vrcp.pop %v1834
        %v1839 = vrcp.pop %v1837
        %v1840 = vpack.c.bf16 %v1829, %v1829
        %v1841 = vpack.c.bf16 %v1831, %v1831
        %1842 = vrot.lane.b32.xlu0 %v1178, 112
        %v1843 = vpop.permute.xlu0 %1842
        %v1845 = vsel %vm1180, %v1840, 0
        %v1848 = vsel %vm1298, %v1843, 0
        %1850 = vmatprep.subr.bf16.mxu0 0
        %1851 = vmatpush1.bf16.msra.mxu0 %v1848
        %1852 = vmatprep.subr.bf16.mxu0 0
        %1853 = vmatpush1.bf16.msra.mxu0 0
        %1854 = vmatprep.subr.bf16.mxu0 0
        %1855 = vmatpush1.bf16.msra.mxu0 0
        %1856 = vmatprep.subr.bf16.mxu0 0
        %1857 = vmatpush1.bf16.msra.mxu0 0
        %1858 = vmatprep.subr.bf16.mxu0 0
        %1859 = vmatpush1.bf16.msra.mxu0 0
        %1860 = vmatprep.subr.bf16.mxu0 0
        %1861 = vmatpush1.bf16.msra.mxu0 0
        %1862 = vmatprep.subr.bf16.mxu0 0
        %1863 = vmatpush1.bf16.msra.mxu0 0
        %1864 = vmatprep.subr.bf16.mxu0 0
        %1865 = vmatpush1.bf16.msra.mxu0 0
        %1866 = vmatprep.subr.bf16.mxu0 0
        %1867 = vmatpush1.bf16.msra.mxu0 0
        %1868 = vmatprep.subr.bf16.mxu0 0
        %1869 = vmatpush1.bf16.msra.mxu0 0
        %1870 = vmatprep.subr.bf16.mxu0 0
        %1871 = vmatpush1.bf16.msra.mxu0 0
        %1872 = vmatprep.subr.bf16.mxu0 0
        %1873 = vmatpush1.bf16.msra.mxu0 0
        %1874 = vmatprep.subr.bf16.mxu0 0
        %1875 = vmatpush1.bf16.msra.mxu0 0
        %1876 = vmatprep.subr.bf16.mxu0 0
        %1877 = vmatpush1.bf16.msra.mxu0 0
        %1878 = vmatprep.subr.bf16.mxu0 0
        %1879 = vmatpush1.bf16.msra.mxu0 0
        %1880 = vmatprep.subr.bf16.mxu0 0
        %1881 = vmatpush1.bf16.msra.mxu0 0
        %1882 = vmatprep.mubr.bf16.mxu0 0
        %1883 = vmatmul.mubr.bf16.gmra.mrb[0].mxu0 %v1845
        %v1884 = vpop.f32.mrb[0].mxu0
        %v1885 = vadd.f32 0.0, %v1884
        %v1886 = vpop.f32.mrb[0].mxu0
        %v1887 = vpop.f32.mrb[0].mxu0
        %v1888 = vpop.f32.mrb[0].mxu0
        %1889 = vdwg.mxu0
        %1890 = vrot.lane.b32.xlu0 %v1179, 112
        %v1891 = vpop.permute.xlu0 %1890
        %v1893 = vsel %vm1180, %v1841, 0
        %v1896 = vsel %vm1298, %v1891, 0
        %1898 = vmatprep.subr.bf16.mxu0 0
        %1899 = vmatpush1.bf16.msra.mxu0 %v1896
        %1900 = vmatprep.subr.bf16.mxu0 0
        %1901 = vmatpush1.bf16.msra.mxu0 0
        %1902 = vmatprep.subr.bf16.mxu0 0
        %1903 = vmatpush1.bf16.msra.mxu0 0
        %1904 = vmatprep.subr.bf16.mxu0 0
        %1905 = vmatpush1.bf16.msra.mxu0 0
        %1906 = vmatprep.subr.bf16.mxu0 0
        %1907 = vmatpush1.bf16.msra.mxu0 0
        %1908 = vmatprep.subr.bf16.mxu0 0
        %1909 = vmatpush1.bf16.msra.mxu0 0
        %1910 = vmatprep.subr.bf16.mxu0 0
        %1911 = vmatpush1.bf16.msra.mxu0 0
        %1912 = vmatprep.subr.bf16.mxu0 0
        %1913 = vmatpush1.bf16.msra.mxu0 0
        %1914 = vmatprep.subr.bf16.mxu0 0
        %1915 = vmatpush1.bf16.msra.mxu0 0
        %1916 = vmatprep.subr.bf16.mxu0 0
        %1917 = vmatpush1.bf16.msra.mxu0 0
        %1918 = vmatprep.subr.bf16.mxu0 0
        %1919 = vmatpush1.bf16.msra.mxu0 0
        %1920 = vmatprep.subr.bf16.mxu0 0
        %1921 = vmatpush1.bf16.msra.mxu0 0
        %1922 = vmatprep.subr.bf16.mxu0 0
        %1923 = vmatpush1.bf16.msra.mxu0 0
        %1924 = vmatprep.subr.bf16.mxu0 0
        %1925 = vmatpush1.bf16.msra.mxu0 0
        %1926 = vmatprep.subr.bf16.mxu0 0
        %1927 = vmatpush1.bf16.msra.mxu0 0
        %1928 = vmatprep.subr.bf16.mxu0 0
        %1929 = vmatpush1.bf16.msra.mxu0 0
        %1930 = vmatprep.mubr.bf16.mxu0 0
        %1931 = vmatmul.mubr.bf16.gmra.mrb[0].mxu0 %v1893
        %v1932 = vpop.f32.mrb[0].mxu0
        %v1933 = vadd.f32 0.0, %v1932
        %v1934 = vpop.f32.mrb[0].mxu0
        %v1935 = vpop.f32.mrb[0].mxu0
        %v1936 = vpop.f32.mrb[0].mxu0
        %1937 = vdwg.mxu0
        %v1938 = vmul.f32 %v1885, %v1838
        %v1939 = vmul.f32 %v1933, %v1839
        %v1940 = vpack.c.bf16 %v1938, %v1938
        %v1941 = vpack.c.bf16 %v1939, %v1939
        %v1942 = vld [vmem:[%s742 + $0x8] sm:$0xf]
        %v1945 = vunpack.c.l.b16 %v1940
        %v1946 = vunpack.c.l.b16 %v1941
        %v1947 = vpack.c.b16 %v1946, %v1945
        %v1949 = vsel %vm1180, %v1947, 0
        %v1952 = vsel %vm1298, %v1942, 0
        %1954 = vmatprep.subr.bf16.mxu0 0
        %1955 = vmatpush1.bf16.msra.mxu0 %v1952
        %1956 = vmatprep.subr.bf16.mxu0 0
        %1957 = vmatpush1.bf16.msra.mxu0 0
        %1958 = vmatprep.subr.bf16.mxu0 0
        %1959 = vmatpush1.bf16.msra.mxu0 0
        %1960 = vmatprep.subr.bf16.mxu0 0
        %1961 = vmatpush1.bf16.msra.mxu0 0
        %1962 = vmatprep.subr.bf16.mxu0 0
        %1963 = vmatpush1.bf16.msra.mxu0 0
        %1964 = vmatprep.subr.bf16.mxu0 0
        %1965 = vmatpush1.bf16.msra.mxu0 0
        %1966 = vmatprep.subr.bf16.mxu0 0
        %1967 = vmatpush1.bf16.msra.mxu0 0
        %1968 = vmatprep.subr.bf16.mxu0 0
        %1969 = vmatpush1.bf16.msra.mxu0 0
        %1970 = vmatprep.subr.bf16.mxu0 0
        %1971 = vmatpush1.bf16.msra.mxu0 0
        %1972 = vmatprep.subr.bf16.mxu0 0
        %1973 = vmatpush1.bf16.msra.mxu0 0
        %1974 = vmatprep.subr.bf16.mxu0 0
        %1975 = vmatpush1.bf16.msra.mxu0 0
        %1976 = vmatprep.subr.bf16.mxu0 0
        %1977 = vmatpush1.bf16.msra.mxu0 0
        %1978 = vmatprep.subr.bf16.mxu0 0
        %1979 = vmatpush1.bf16.msra.mxu0 0
        %1980 = vmatprep.subr.bf16.mxu0 0
        %1981 = vmatpush1.bf16.msra.mxu0 0
        %1982 = vmatprep.subr.bf16.mxu0 0
        %1983 = vmatpush1.bf16.msra.mxu0 0
        %1984 = vmatprep.subr.bf16.mxu0 0
        %1985 = vmatpush1.bf16.msra.mxu0 0
        %1986 = vmatprep.mubr.bf16.mxu0 0
        %1987 = vmatmul.mubr.bf16.gmra.mrb[0].mxu0 %v1949
        %v1988 = vpop.f32.mrb[0].mxu0
        %v1989 = vadd.f32 0.0, %v1988
        %v1990 = vpop.f32.mrb[0].mxu0
        %v1991 = vpop.f32.mrb[0].mxu0
        %v1992 = vadd.f32 0.0, %v1991
        %v1993 = vpop.f32.mrb[0].mxu0
        %1994 = vdwg.mxu0
        %v1995 = vadd.f32 %v1714, %v1989
        %v1996 = vadd.f32 %v1717, %v1992
        %1997 = vrot.lane.b32.xlu0 %v1166, 104
        %v1998 = vpop.permute.xlu0 %1997
        %1999 = vrot.lane.b32.xlu0 %v1172, 104
        %v2000 = vpop.permute.xlu0 %1999
        %v2002 = vsel %vm1180, %v1998, 0
        %v2005 = vsel %vm1180, %v2000, 0
        %2007 = vmatprep.subr.bf16.mxu0 0
        %2008 = vmatpush1.bf16.xpose.msra.mxu0 %v2005
        %2009 = vmatprep.subr.bf16.mxu0 0
        %2010 = vmatpush1.bf16.xpose.msra.mxu0 0
        %2011 = vmatprep.subr.bf16.mxu0 0
        %2012 = vmatpush1.bf16.xpose.msra.mxu0 0
        %2013 = vmatprep.subr.bf16.mxu0 0
        %2014 = vmatpush1.bf16.xpose.msra.mxu0 0
        %2015 = vmatprep.subr.bf16.mxu0 0
        %2016 = vmatpush1.bf16.xpose.msra.mxu0 0
        %2017 = vmatprep.subr.bf16.mxu0 0
        %2018 = vmatpush1.bf16.xpose.msra.mxu0 0
        %2019 = vmatprep.subr.bf16.mxu0 0
        %2020 = vmatpush1.bf16.xpose.msra.mxu0 0
        %2021 = vmatprep.subr.bf16.mxu0 0
        %2022 = vmatpush1.bf16.xpose.msra.mxu0 0
        %2023 = vmatprep.subr.bf16.mxu0 0
        %2024 = vmatpush1.bf16.xpose.msra.mxu0 0
        %2025 = vmatprep.subr.bf16.mxu0 0
        %2026 = vmatpush1.bf16.xpose.msra.mxu0 0
        %2027 = vmatprep.subr.bf16.mxu0 0
        %2028 = vmatpush1.bf16.xpose.msra.mxu0 0
        %2029 = vmatprep.subr.bf16.mxu0 0
        %2030 = vmatpush1.bf16.xpose.msra.mxu0 0
        %2031 = vmatprep.subr.bf16.mxu0 0
        %2032 = vmatpush1.bf16.xpose.msra.mxu0 0
        %2033 = vmatprep.subr.bf16.mxu0 0
        %2034 = vmatpush1.bf16.xpose.msra.mxu0 0
        %2035 = vmatprep.subr.bf16.mxu0 0
        %2036 = vmatpush1.bf16.xpose.msra.mxu0 0
        %2037 = vmatprep.subr.bf16.mxu0 0
        %2038 = vmatpush1.bf16.xpose.msra.mxu0 0
        %2039 = vmatprep.mubr.bf16.mxu0 0
        %2040 = vmatmul.mubr.bf16.gmra.mrb[0].mxu0 %v2002
        %v2041 = vpop.f32.mrb[0].mxu0
        %v2042 = vadd.f32 0.0, %v2041
        %v2043 = vpop.f32.mrb[0].mxu0
        %v2044 = vpop.f32.mrb[0].mxu0
        %v2045 = vpop.f32.mrb[0].mxu0
        %2046 = vdwg.mxu0
        %2047 = vrot.lane.b32.xlu0 %v1167, 104
        %v2048 = vpop.permute.xlu0 %2047
        %2049 = vrot.lane.b32.xlu0 %v1173, 104
        %v2050 = vpop.permute.xlu0 %2049
        %v2052 = vsel %vm1180, %v2048, 0
        %v2055 = vsel %vm1180, %v2050, 0
        %2057 = vmatprep.subr.bf16.mxu0 0
        %2058 = vmatpush1.bf16.xpose.msra.mxu0 %v2055
        %2059 = vmatprep.subr.bf16.mxu0 0
        %2060 = vmatpush1.bf16.xpose.msra.mxu0 0
        %2061 = vmatprep.subr.bf16.mxu0 0
        %2062 = vmatpush1.bf16.xpose.msra.mxu0 0
        %2063 = vmatprep.subr.bf16.mxu0 0
        %2064 = vmatpush1.bf16.xpose.msra.mxu0 0
        %2065 = vmatprep.subr.bf16.mxu0 0
        %2066 = vmatpush1.bf16.xpose.msra.mxu0 0
        %2067 = vmatprep.subr.bf16.mxu0 0
        %2068 = vmatpush1.bf16.xpose.msra.mxu0 0
        %2069 = vmatprep.subr.bf16.mxu0 0
        %2070 = vmatpush1.bf16.xpose.msra.mxu0 0
        %2071 = vmatprep.subr.bf16.mxu0 0
        %2072 = vmatpush1.bf16.xpose.msra.mxu0 0
        %2073 = vmatprep.subr.bf16.mxu0 0
        %2074 = vmatpush1.bf16.xpose.msra.mxu0 0
        %2075 = vmatprep.subr.bf16.mxu0 0
        %2076 = vmatpush1.bf16.xpose.msra.mxu0 0
        %2077 = vmatprep.subr.bf16.mxu0 0
        %2078 = vmatpush1.bf16.xpose.msra.mxu0 0
        %2079 = vmatprep.subr.bf16.mxu0 0
        %2080 = vmatpush1.bf16.xpose.msra.mxu0 0
        %2081 = vmatprep.subr.bf16.mxu0 0
        %2082 = vmatpush1.bf16.xpose.msra.mxu0 0
        %2083 = vmatprep.subr.bf16.mxu0 0
        %2084 = vmatpush1.bf16.xpose.msra.mxu0 0
        %2085 = vmatprep.subr.bf16.mxu0 0
        %2086 = vmatpush1.bf16.xpose.msra.mxu0 0
        %2087 = vmatprep.subr.bf16.mxu0 0
        %2088 = vmatpush1.bf16.xpose.msra.mxu0 0
        %2089 = vmatprep.mubr.bf16.mxu0 0
        %2090 = vmatmul.mubr.bf16.gmra.mrb[0].mxu0 %v2052
        %v2091 = vpop.f32.mrb[0].mxu0
        %v2092 = vadd.f32 0.0, %v2091
        %v2093 = vpop.f32.mrb[0].mxu0
        %v2094 = vpop.f32.mrb[0].mxu0
        %v2095 = vpop.f32.mrb[0].mxu0
        %2096 = vdwg.mxu0
        %v2097 = vsel %vm1180, %v2042, -inf
        %2098 = vmax.xlane.f32.xlu0 %v2097
        %v2099 = vpop.xlane.xlu0 %2098
        %v2100 = vsel %vm1180, %v2092, -inf
        %2101 = vmax.xlane.f32.xlu0 %v2100
        %v2102 = vpop.xlane.xlu0 %2101
        %v2103 = vsub.f32 %v2042, %v2099
        %v2104 = vsub.f32 %v2092, %v2102
        %v2105 = vmul.f32 %v2103, 1.442695
        %v2106 = vpow.pop %v2105
        %v2107 = vmul.f32 %v2104, 1.442695
        %v2108 = vpow.pop %v2107
        %v2109 = vsel %vm1180, %v2106, 0.0
        %2110 = vadd.xlane.f32.xlu0 %v2109
        %v2111 = vpop.xlane.xlu0 %2110
        %v2112 = vsel %vm1180, %v2108, 0.0
        %2113 = vadd.xlane.f32.xlu0 %v2112
        %v2114 = vpop.xlane.xlu0 %2113
        %v2115 = vrcp.pop %v2111
        %v2116 = vrcp.pop %v2114
        %v2117 = vpack.c.bf16 %v2106, %v2106
        %v2118 = vpack.c.bf16 %v2108, %v2108
        %2119 = vrot.lane.b32.xlu0 %v1178, 104
        %v2120 = vpop.permute.xlu0 %2119
        %v2122 = vsel %vm1180, %v2117, 0
        %v2125 = vsel %vm1298, %v2120, 0
        %2127 = vmatprep.subr.bf16.mxu0 0
        %2128 = vmatpush1.bf16.msra.mxu0 %v2125
        %2129 = vmatprep.subr.bf16.mxu0 0
        %2130 = vmatpush1.bf16.msra.mxu0 0
        %2131 = vmatprep.subr.bf16.mxu0 0
        %2132 = vmatpush1.bf16.msra.mxu0 0
        %2133 = vmatprep.subr.bf16.mxu0 0
        %2134 = vmatpush1.bf16.msra.mxu0 0
        %2135 = vmatprep.subr.bf16.mxu0 0
        %2136 = vmatpush1.bf16.msra.mxu0 0
        %2137 = vmatprep.subr.bf16.mxu0 0
        %2138 = vmatpush1.bf16.msra.mxu0 0
        %2139 = vmatprep.subr.bf16.mxu0 0
        %2140 = vmatpush1.bf16.msra.mxu0 0
        %2141 = vmatprep.subr.bf16.mxu0 0
        %2142 = vmatpush1.bf16.msra.mxu0 0
        %2143 = vmatprep.subr.bf16.mxu0 0
        %2144 = vmatpush1.bf16.msra.mxu0 0
        %2145 = vmatprep.subr.bf16.mxu0 0
        %2146 = vmatpush1.bf16.msra.mxu0 0
        %2147 = vmatprep.subr.bf16.mxu0 0
        %2148 = vmatpush1.bf16.msra.mxu0 0
        %2149 = vmatprep.subr.bf16.mxu0 0
        %2150 = vmatpush1.bf16.msra.mxu0 0
        %2151 = vmatprep.subr.bf16.mxu0 0
        %2152 = vmatpush1.bf16.msra.mxu0 0
        %2153 = vmatprep.subr.bf16.mxu0 0
        %2154 = vmatpush1.bf16.msra.mxu0 0
        %2155 = vmatprep.subr.bf16.mxu0 0
        %2156 = vmatpush1.bf16.msra.mxu0 0
        %2157 = vmatprep.subr.bf16.mxu0 0
        %2158 = vmatpush1.bf16.msra.mxu0 0
        %2159 = vmatprep.mubr.bf16.mxu0 0
        %2160 = vmatmul.mubr.bf16.gmra.mrb[0].mxu0 %v2122
        %v2161 = vpop.f32.mrb[0].mxu0
        %v2162 = vadd.f32 0.0, %v2161
        %v2163 = vpop.f32.mrb[0].mxu0
        %v2164 = vpop.f32.mrb[0].mxu0
        %v2165 = vpop.f32.mrb[0].mxu0
        %2166 = vdwg.mxu0
        %2167 = vrot.lane.b32.xlu0 %v1179, 104
        %v2168 = vpop.permute.xlu0 %2167
        %v2170 = vsel %vm1180, %v2118, 0
        %v2173 = vsel %vm1298, %v2168, 0
        %2175 = vmatprep.subr.bf16.mxu0 0
        %2176 = vmatpush1.bf16.msra.mxu0 %v2173
        %2177 = vmatprep.subr.bf16.mxu0 0
        %2178 = vmatpush1.bf16.msra.mxu0 0
        %2179 = vmatprep.subr.bf16.mxu0 0
        %2180 = vmatpush1.bf16.msra.mxu0 0
        %2181 = vmatprep.subr.bf16.mxu0 0
        %2182 = vmatpush1.bf16.msra.mxu0 0
        %2183 = vmatprep.subr.bf16.mxu0 0
        %2184 = vmatpush1.bf16.msra.mxu0 0
        %2185 = vmatprep.subr.bf16.mxu0 0
        %2186 = vmatpush1.bf16.msra.mxu0 0
        %2187 = vmatprep.subr.bf16.mxu0 0
        %2188 = vmatpush1.bf16.msra.mxu0 0
        %2189 = vmatprep.subr.bf16.mxu0 0
        %2190 = vmatpush1.bf16.msra.mxu0 0
        %2191 = vmatprep.subr.bf16.mxu0 0
        %2192 = vmatpush1.bf16.msra.mxu0 0
        %2193 = vmatprep.subr.bf16.mxu0 0
        %2194 = vmatpush1.bf16.msra.mxu0 0
        %2195 = vmatprep.subr.bf16.mxu0 0
        %2196 = vmatpush1.bf16.msra.mxu0 0
        %2197 = vmatprep.subr.bf16.mxu0 0
        %2198 = vmatpush1.bf16.msra.mxu0 0
        %2199 = vmatprep.subr.bf16.mxu0 0
        %2200 = vmatpush1.bf16.msra.mxu0 0
        %2201 = vmatprep.subr.bf16.mxu0 0
        %2202 = vmatpush1.bf16.msra.mxu0 0
        %2203 = vmatprep.subr.bf16.mxu0 0
        %2204 = vmatpush1.bf16.msra.mxu0 0
        %2205 = vmatprep.subr.bf16.mxu0 0
        %2206 = vmatpush1.bf16.msra.mxu0 0
        %2207 = vmatprep.mubr.bf16.mxu0 0
        %2208 = vmatmul.mubr.bf16.gmra.mrb[0].mxu0 %v2170
        %v2209 = vpop.f32.mrb[0].mxu0
        %v2210 = vadd.f32 0.0, %v2209
        %v2211 = vpop.f32.mrb[0].mxu0
        %v2212 = vpop.f32.mrb[0].mxu0
        %v2213 = vpop.f32.mrb[0].mxu0
        %2214 = vdwg.mxu0
        %v2215 = vmul.f32 %v2162, %v2115
        %v2216 = vmul.f32 %v2210, %v2116
        %v2217 = vpack.c.bf16 %v2215, %v2215
        %v2218 = vpack.c.bf16 %v2216, %v2216
        %v2219 = vld [vmem:[%s742 + $0xc] sm:$0xf]
        %v2222 = vunpack.c.l.b16 %v2217
        %v2223 = vunpack.c.l.b16 %v2218
        %v2224 = vpack.c.b16 %v2223, %v2222
        %v2226 = vsel %vm1180, %v2224, 0
        %v2229 = vsel %vm1298, %v2219, 0
        %2231 = vmatprep.subr.bf16.mxu0 0
        %2232 = vmatpush1.bf16.msra.mxu0 %v2229
        %2233 = vmatprep.subr.bf16.mxu0 0
        %2234 = vmatpush1.bf16.msra.mxu0 0
        %2235 = vmatprep.subr.bf16.mxu0 0
        %2236 = vmatpush1.bf16.msra.mxu0 0
        %2237 = vmatprep.subr.bf16.mxu0 0
        %2238 = vmatpush1.bf16.msra.mxu0 0
        %2239 = vmatprep.subr.bf16.mxu0 0
        %2240 = vmatpush1.bf16.msra.mxu0 0
        %2241 = vmatprep.subr.bf16.mxu0 0
        %2242 = vmatpush1.bf16.msra.mxu0 0
        %2243 = vmatprep.subr.bf16.mxu0 0
        %2244 = vmatpush1.bf16.msra.mxu0 0
        %2245 = vmatprep.subr.bf16.mxu0 0
        %2246 = vmatpush1.bf16.msra.mxu0 0
        %2247 = vmatprep.subr.bf16.mxu0 0
        %2248 = vmatpush1.bf16.msra.mxu0 0
        %2249 = vmatprep.subr.bf16.mxu0 0
        %2250 = vmatpush1.bf16.msra.mxu0 0
        %2251 = vmatprep.subr.bf16.mxu0 0
        %2252 = vmatpush1.bf16.msra.mxu0 0
        %2253 = vmatprep.subr.bf16.mxu0 0
        %2254 = vmatpush1.bf16.msra.mxu0 0
        %2255 = vmatprep.subr.bf16.mxu0 0
        %2256 = vmatpush1.bf16.msra.mxu0 0
        %2257 = vmatprep.subr.bf16.mxu0 0
        %2258 = vmatpush1.bf16.msra.mxu0 0
        %2259 = vmatprep.subr.bf16.mxu0 0
        %2260 = vmatpush1.bf16.msra.mxu0 0
        %2261 = vmatprep.subr.bf16.mxu0 0
        %2262 = vmatpush1.bf16.msra.mxu0 0
        %2263 = vmatprep.mubr.bf16.mxu0 0
        %2264 = vmatmul.mubr.bf16.gmra.mrb[0].mxu0 %v2226
        %v2265 = vpop.f32.mrb[0].mxu0
        %v2266 = vadd.f32 0.0, %v2265
        %v2267 = vpop.f32.mrb[0].mxu0
        %v2268 = vpop.f32.mrb[0].mxu0
        %v2269 = vadd.f32 0.0, %v2268
        %v2270 = vpop.f32.mrb[0].mxu0
        %2271 = vdwg.mxu0
        %v2272 = vadd.f32 %v1995, %v2266
        %v2273 = vadd.f32 %v1996, %v2269
        %v2274 = vadd.f32 %v918, %v2272
        %v2275 = vadd.f32 %v919, %v2273
        %v2276 = vld [vmem:[%s889] sm:$0x1]
        %v2278 = vlaneseq
        %v2279 = vshrl.u32 %v2278, 7
        %v2280 = vsub.s32 0, %v2279
        %v2281 = vrot.slane %v2276, %v2280
        %v2283 = vadd.f32 %v2274, %v2281
        %v2284 = vadd.f32 %v2275, %v2281
        %v2285 = vld [vmem:[%s892] sm:$0x1]
        %v2286 = vld [vmem:[%s895] sm:$0x1]
        %v2287 = vsel %vm922, %v2283, 0.0
        %2288 = vadd.xlane.f32.xlu0 %v2287
        %v2289 = vpop.xlane.xlu0 %2288
        %v2290 = vsel %vm922, %v2284, 0.0
        %2291 = vadd.xlane.f32.xlu0 %v2290
        %v2292 = vpop.xlane.xlu0 %2291
        %v2293 = vmul.f32 %v2289, %v929
        %v2294 = vmul.f32 %v2292, %v929
        %v2295 = vsub.f32 %v2283, %v2293
        %v2296 = vsub.f32 %v2284, %v2294
        %v2297 = vmul.f32 %v2295, %v2295
        %v2298 = vmul.f32 %v2296, %v2296
        %v2299 = vsel %vm922, %v2297, 0.0
        %2300 = vadd.xlane.f32.xlu0 %v2299
        %v2301 = vpop.xlane.xlu0 %2300
        %v2302 = vsel %vm922, %v2298, 0.0
        %2303 = vadd.xlane.f32.xlu0 %v2302
        %v2304 = vpop.xlane.xlu0 %2303
        %v2305 = vmul.f32 %v2301, %v929
        %v2306 = vmul.f32 %v2304, %v929
        %v2307 = vadd.f32 %v2305, 1e-05
        %v2308 = vadd.f32 %v2306, 1e-05
        %v2309 = vrsqrt.pop %v2307
        %v2310 = vrsqrt.pop %v2308
        %v2311 = vmul.f32 %v2295, %v2309
        %v2312 = vmul.f32 %v2296, %v2310
        %v2314 = vlaneseq
        %v2315 = vshrl.u32 %v2314, 7
        %v2316 = vsub.s32 0, %v2315
        %v2317 = vrot.slane %v2285, %v2316
        %v2319 = vmul.f32 %v2311, %v2317
        %v2320 = vmul.f32 %v2312, %v2317
        %v2322 = vlaneseq
        %v2323 = vshrl.u32 %v2322, 7
        %v2324 = vsub.s32 0, %v2323
        %v2325 = vrot.slane %v2286, %v2324
        %v2327 = vadd.f32 %v2319, %v2325
        %v2328 = vadd.f32 %v2320, %v2325
        %v2329 = vpack.c.bf16 %v2328, %v2327
        %v2330 = vld [vmem:[%s751] sm:$0xf]
        %v2331 = vld [vmem:[%s751 + $0x4] sm:$0xf]
        %v2332 = vld [vmem:[%s751 + $0x8] sm:$0xf]
        %v2333 = vld [vmem:[%s751 + $0xc] sm:$0xf]
        %v2334 = vld [vmem:[%s898] sm:$0x1]
        %v2336 = vlaneseq
        %v2337 = vshrl.u32 %v2336, 7
        %v2338 = vsub.s32 0, %v2337
        %v2339 = vrot.slane %v2334, %v2338
        %v2345 = vunpack.c.l.b16 %v2330
        %v2346 = vunpack.c.l.b16 %v2331
        %v2347 = vunpack.c.l.b16 %v2332
        %v2348 = vunpack.c.l.b16 %v2333
        %v2349 = vpack.c.b16 %v2346, %v2345
        %v2350 = vpack.c.b16 %v2348, %v2347
        %v2354 = vsel %vm922, %v2329, 0
        %2356 = vmatprep.subr.bf16.mxu0 0
        %2357 = vmatpush1.bf16.msra.mxu0 %v2349
        %2358 = vmatprep.subr.bf16.mxu0 0
        %2359 = vmatpush1.bf16.msra.mxu0 %v2350
        %2360 = vmatprep.subr.bf16.mxu0 0
        %2361 = vmatpush1.bf16.msra.mxu0 0
        %2362 = vmatprep.subr.bf16.mxu0 0
        %2363 = vmatpush1.bf16.msra.mxu0 0
        %2364 = vmatprep.subr.bf16.mxu0 0
        %2365 = vmatpush1.bf16.msra.mxu0 0
        %2366 = vmatprep.subr.bf16.mxu0 0
        %2367 = vmatpush1.bf16.msra.mxu0 0
        %2368 = vmatprep.subr.bf16.mxu0 0
        %2369 = vmatpush1.bf16.msra.mxu0 0
        %2370 = vmatprep.subr.bf16.mxu0 0
        %2371 = vmatpush1.bf16.msra.mxu0 0
        %2372 = vmatprep.subr.bf16.mxu0 0
        %2373 = vmatpush1.bf16.msra.mxu0 0
        %2374 = vmatprep.subr.bf16.mxu0 0
        %2375 = vmatpush1.bf16.msra.mxu0 0
        %2376 = vmatprep.subr.bf16.mxu0 0
        %2377 = vmatpush1.bf16.msra.mxu0 0
        %2378 = vmatprep.subr.bf16.mxu0 0
        %2379 = vmatpush1.bf16.msra.mxu0 0
        %2380 = vmatprep.subr.bf16.mxu0 0
        %2381 = vmatpush1.bf16.msra.mxu0 0
        %2382 = vmatprep.subr.bf16.mxu0 0
        %2383 = vmatpush1.bf16.msra.mxu0 0
        %2384 = vmatprep.subr.bf16.mxu0 0
        %2385 = vmatpush1.bf16.msra.mxu0 0
        %2386 = vmatprep.subr.bf16.mxu0 0
        %2387 = vmatpush1.bf16.msra.mxu0 0
        %2388 = vmatprep.mubr.bf16.mxu0 0
        %2389 = vmatmul.mubr.bf16.gmra.mrb[0].mxu0 %v2354
        %v2390 = vpop.f32.mrb[0].mxu0
        %v2391 = vadd.f32 %v2339, %v2390
        %v2392 = vpop.f32.mrb[0].mxu0
        %v2393 = vpop.f32.mrb[0].mxu0
        %v2394 = vadd.f32 %v2339, %v2393
        %v2395 = vpop.f32.mrb[0].mxu0
        %2396 = vdwg.mxu0
        %v2397 = vmax.f32 %v2391, 0.0
        %v2398 = vmax.f32 %v2394, 0.0
        %v2399 = vpack.c.bf16 %v2398, %v2397
        %v2400 = vld [vmem:[%s903] sm:$0xf]
        %v2401 = vld [vmem:[%s903 + $0x4] sm:$0xf]
        %v2402 = vld [vmem:[%s903 + $0x8] sm:$0xf]
        %v2403 = vld [vmem:[%s903 + $0xc] sm:$0xf]
        %v2404 = vld [vmem:[%s903 + $0x10] sm:$0xf]
        %v2405 = vld [vmem:[%s903 + $0x14] sm:$0xf]
        %v2406 = vld [vmem:[%s903 + $0x18] sm:$0xf]
        %v2407 = vld [vmem:[%s903 + $0x1c] sm:$0xf]
        %v2416 = vunpack.c.l.b16 %v2400
        %v2417 = vunpack.c.l.b16 %v2401
        %v2418 = vunpack.c.l.b16 %v2402
        %v2419 = vunpack.c.l.b16 %v2403
        %v2420 = vunpack.c.l.b16 %v2404
        %v2421 = vunpack.c.l.b16 %v2405
        %v2422 = vunpack.c.l.b16 %v2406
        %v2423 = vunpack.c.l.b16 %v2407
        %v2424 = vpack.c.b16 %v2417, %v2416
        %v2425 = vpack.c.b16 %v2419, %v2418
        %v2426 = vpack.c.b16 %v2421, %v2420
        %v2427 = vpack.c.b16 %v2423, %v2422
        %vm2432 = vcmask 523264
        %v2434 = vsel %vm2432, %v2399, 0
        %2436 = vmatprep.subr.bf16.mxu0 0
        %2437 = vmatpush1.bf16.msra.mxu0 %v2424
        %2438 = vmatprep.subr.bf16.mxu0 0
        %2439 = vmatpush1.bf16.msra.mxu0 %v2425
        %2440 = vmatprep.subr.bf16.mxu0 0
        %2441 = vmatpush1.bf16.msra.mxu0 %v2426
        %2442 = vmatprep.subr.bf16.mxu0 0
        %2443 = vmatpush1.bf16.msra.mxu0 %v2427
        %2444 = vmatprep.subr.bf16.mxu0 0
        %2445 = vmatpush1.bf16.msra.mxu0 0
        %2446 = vmatprep.subr.bf16.mxu0 0
        %2447 = vmatpush1.bf16.msra.mxu0 0
        %2448 = vmatprep.subr.bf16.mxu0 0
        %2449 = vmatpush1.bf16.msra.mxu0 0
        %2450 = vmatprep.subr.bf16.mxu0 0
        %2451 = vmatpush1.bf16.msra.mxu0 0
        %2452 = vmatprep.subr.bf16.mxu0 0
        %2453 = vmatpush1.bf16.msra.mxu0 0
        %2454 = vmatprep.subr.bf16.mxu0 0
        %2455 = vmatpush1.bf16.msra.mxu0 0
        %2456 = vmatprep.subr.bf16.mxu0 0
        %2457 = vmatpush1.bf16.msra.mxu0 0
        %2458 = vmatprep.subr.bf16.mxu0 0
        %2459 = vmatpush1.bf16.msra.mxu0 0
        %2460 = vmatprep.subr.bf16.mxu0 0
        %2461 = vmatpush1.bf16.msra.mxu0 0
        %2462 = vmatprep.subr.bf16.mxu0 0
        %2463 = vmatpush1.bf16.msra.mxu0 0
        %2464 = vmatprep.subr.bf16.mxu0 0
        %2465 = vmatpush1.bf16.msra.mxu0 0
        %2466 = vmatprep.subr.bf16.mxu0 0
        %2467 = vmatpush1.bf16.msra.mxu0 0
        %2468 = vmatprep.mubr.bf16.mxu0 0
        %2469 = vmatmul.mubr.bf16.gmra.mrb[0].mxu0 %v2434
        %v2470 = vpop.f32.mrb[0].mxu0
        %v2471 = vadd.f32 0.0, %v2470
        %v2472 = vpop.f32.mrb[0].mxu0
        %v2473 = vpop.f32.mrb[0].mxu0
        %v2474 = vadd.f32 0.0, %v2473
        %v2475 = vpop.f32.mrb[0].mxu0
        %2476 = vdwg.mxu0
        %v2477 = vadd.f32 %v2283, %v2471
        %v2478 = vadd.f32 %v2284, %v2474
        %v2479 = vld [vmem:[%s906] sm:$0x1]
        %v2481 = vlaneseq
        %v2482 = vshrl.u32 %v2481, 7
        %v2483 = vsub.s32 0, %v2482
        %v2484 = vrot.slane %v2479, %v2483
        %v2486 = vadd.f32 %v2477, %v2484
        %v2487 = vadd.f32 %v2478, %v2484
        %p2488 = scmp.lt.s32.totalorder %s40, 1
        // Predicated region
        $region113: #{tpu_custom_call.1} parent=95 // pred_check
          %p2489 = pneg %p2488
        $region114: #{tpu_custom_call.1} parent=95 // pred_check_branch
          %2491 = sbr.rel (%p2489) target = $region116
        $region115: #{tpu_custom_call.1} parent=95 // pred_region
          %2492 = vst.msk [vmem:[#allocation8] sm:$0xff] %vm922, %v2486
          %2493 = vst.msk [vmem:[#allocation8 + $0x8] sm:$0xff] %vm922, %v2487
        $region116: #{tpu_custom_call.1} parent=95 // pred_fallthru
          _
        %p2494 = scmp.eq.s32.totalorder %s40, 1
        // Predicated region
        $region117: #{tpu_custom_call.1} parent=95 // pred_check
          %p2495 = pneg %p2494
        $region118: #{tpu_custom_call.1} parent=95 // pred_check_branch
          %2497 = sbr.rel (%p2495) target = $region120
        $region119: #{tpu_custom_call.1} parent=95 // pred_region
          %v2498 = vld [vmem:[%s17] sm:$0x1]
          %v2499 = vld [vmem:[%s18] sm:$0x1]
          %v2500 = vsel %vm922, %v2486, 0.0
          %2501 = vadd.xlane.f32.xlu0 %v2500
          %v2502 = vpop.xlane.xlu0 %2501
          %v2503 = vsel %vm922, %v2487, 0.0
          %2504 = vadd.xlane.f32.xlu0 %v2503
          %v2505 = vpop.xlane.xlu0 %2504
          %v2506 = vmul.f32 %v2502, %v929
          %v2507 = vmul.f32 %v2505, %v929
          %v2508 = vsub.f32 %v2486, %v2506
          %v2509 = vsub.f32 %v2487, %v2507
          %v2510 = vmul.f32 %v2508, %v2508
          %v2511 = vmul.f32 %v2509, %v2509
          %v2512 = vsel %vm922, %v2510, 0.0
          %2513 = vadd.xlane.f32.xlu0 %v2512
          %v2514 = vpop.xlane.xlu0 %2513
          %v2515 = vsel %vm922, %v2511, 0.0
          %2516 = vadd.xlane.f32.xlu0 %v2515
          %v2517 = vpop.xlane.xlu0 %2516
          %v2518 = vmul.f32 %v2514, %v929
          %v2519 = vmul.f32 %v2517, %v929
          %v2520 = vadd.f32 %v2518, 1e-05
          %v2521 = vadd.f32 %v2519, 1e-05
          %v2522 = vrsqrt.pop %v2520
          %v2523 = vrsqrt.pop %v2521
          %v2524 = vmul.f32 %v2508, %v2522
          %v2525 = vmul.f32 %v2509, %v2523
          %v2527 = vlaneseq
          %v2528 = vshrl.u32 %v2527, 7
          %v2529 = vsub.s32 0, %v2528
          %v2530 = vrot.slane %v2498, %v2529
          %v2532 = vmul.f32 %v2524, %v2530
          %v2533 = vmul.f32 %v2525, %v2530
          %v2535 = vlaneseq
          %v2536 = vshrl.u32 %v2535, 7
          %v2537 = vsub.s32 0, %v2536
          %v2538 = vrot.slane %v2499, %v2537
          %v2540 = vadd.f32 %v2532, %v2538
          %v2541 = vadd.f32 %v2533, %v2538
          %2542 = vst.msk [vmem:[#allocation8] sm:$0xff] %vm922, %v2540
          %2543 = vst.msk [vmem:[#allocation8 + $0x8] sm:$0xff] %vm922, %v2541
        $region120: #{tpu_custom_call.1} parent=95 // pred_fallthru
          _
        // Predicated region
        $region121: #{tpu_custom_call.1} parent=95 // pred_check
          %p2544 = pneg %p549
        $region122: #{tpu_custom_call.1} parent=95 // pred_check_branch
          %2546 = sbr.rel (%p2544) target = $region124
        $region123: #{tpu_custom_call.1} parent=95 // pred_region
          %s2547 = smul.u32 2, %s39
          %s2549 = ssub.s32 256, 256
          %2550 = vsyncadd [#allocation4], %s2549
          %s2551 = smul.addr %s2547, 128
          %s2552 = scalar_lea.hbm %s19, %s2551
          %s2553 = sshll.u32 [#allocation8], 4
          %s2554 = int_to_ptr.vmem [resolvable:$true] %s2553
          %2559 = dma.vmem_to_hbm [thread:$0]  %s2554, 256, %s2552, [#allocation4], 128, 128, 8
        $region124: #{tpu_custom_call.1} parent=95 // pred_fallthru
          _
        // Predicated region
        $region125: #{tpu_custom_call.1} parent=95 // pred_check
          %p2560 = pneg %p549
        $region126: #{tpu_custom_call.1} parent=95 // pred_check_branch
          %2562 = sbr.rel (%p2560) target = $region128
        $region127: #{tpu_custom_call.1} parent=95 // pred_region
          %2563 = dma.done [#allocation4], 256
        $region128: #{tpu_custom_call.1} parent=95 // pred_fallthru
          _
      $region96: #{tpu_custom_call.1} parent=5 // pred_fallthru
        _
      %p2564 = scmp.le.s32.totalorder 2, %s30
      // Predicated region
      $region129: #{tpu_custom_call.1} parent=5 // pred_check
        %p2565 = pneg %p2564
      $region130: #{tpu_custom_call.1} parent=5 // pred_check_branch
        %2567 = sbr.rel (%p2565) target = $region132
      $region131: #{tpu_custom_call.1} parent=5 // pred_region
        %s2568 = ssub.s32 %s30, 2
      $region132: #{tpu_custom_call.1} parent=5 // pred_fallthru
        _
    $region6: #{tpu_custom_call.1} parent=1 // loop_footer
      %s34 = sadd.s32 1, %s30
    $region7: #{tpu_custom_call.1} parent=1 // loop_footer_branch
      %29 = sbr.rel target = $region3
    $region8: #{tpu_custom_call.1} parent=1 // loop_exit
      _
    %2569 = vsyncpa [#allocation3], 1
    %s2570 = scalar_lea.sflag [#allocation3], 1
    %2571 = vsyncpa %s2570, 1
    %2572 = vsyncpa [#allocation6], 1
    %s2573 = scalar_lea.sflag [#allocation6], 1
    %2574 = vsyncpa %s2573, 1
    %2575 = vsyncpa [#allocation4], 1
    %s2576 = scalar_lea.sflag [#allocation4], 1
    %2577 = vsyncpa %s2576, 1

</llo_original>
